<compile_context>
chip_gen: v7x
topology: tpu7x:2x2x1
jax: 0.10.0
libtpu: 0.0.40
codegen_flags: <defaults>
</compile_context>

<pallas_src>
import functools

import jax
import jax.numpy as jnp
from jax import lax
from jax.experimental import pallas as pl
from jax.experimental.pallas import tpu as pltpu


def _round_up(x: int, m: int) -> int:
    return ((x + m - 1) // m) * m


def _cross_attn_kernel(q_ref, c_ref, wq_ref, wk_ref, wv_ref, wo_ref, bo_ref,
                       o_ref, k_cache, v_cache, *, n_heads: int):
    """One (batch, query-row-tile) grid step; all heads handled inside the step.

    q_ref  : (1, TQ, Dq)      query rows (compute dtype, bf16)
    c_ref  : (1, M,  Dc)      full context for this batch element
    wq_ref : (H, Dq, dh)      per-head Q projection, pre-scaled by 1/sqrt(dh)  (VMEM-resident)
    wk_ref : (H, Dc, dh)      per-head K projection                            (VMEM-resident)
    wv_ref : (H, Dc, dh)      per-head V projection                            (VMEM-resident)
    wo_ref : (H, dh, Dq)      per-head slice of the output projection          (VMEM-resident)
    bo_ref : (1, Dq) f32      output projection bias
    o_ref  : (1, TQ, Dq)      output rows
    k_cache, v_cache : (H, M, dh) compute-dtype scratch; filled once per batch element
                       (query-tile i == 0) and reused for every later query-row tile.
    """
    i = pl.program_id(1)

    # --- K/V projections: computed once per batch element, cached across query tiles.
    @pl.when(i == 0)
    def _():
        ctx = c_ref[0]                                                     # (M, Dc) bf16
        for h in range(n_heads):
            k_cache[h] = jnp.dot(ctx, wk_ref[h],
                                 preferred_element_type=jnp.float32).astype(k_cache.dtype)
            v_cache[h] = jnp.dot(ctx, wv_ref[h],
                                 preferred_element_type=jnp.float32).astype(v_cache.dtype)

    x = q_ref[0]                                                           # (TQ, Dq) bf16
    cdt = x.dtype

    # --- per-head attention; concat_h(o_h) @ Wo == sum_h o_h @ Wo[h], accumulated in f32.
    # TODO(synk): group heads so the projection lane width reaches >=128/256 (needs in-kernel
    #             head split of a wide intermediate); kept per-head 2-D dots for robust lowering.
    out_acc = None
    for h in range(n_heads):                                               # static unroll, H small
        # Q projection (scale already folded into Wq in the wrapper); bf16 operands, f32 acc.
        q_h = jnp.dot(x, wq_ref[h], preferred_element_type=jnp.float32).astype(cdt)   # (TQ, dh)
        k_h = k_cache[h]                                                   # (M, dh) bf16
        v_h = v_cache[h]                                                   # (M, dh) bf16

        # sim = Q K^T (rhs-contracting dot_general avoids an explicit transpose)
        sim = lax.dot_general(q_h, k_h, (((1,), (1,)), ((), ())),
                              preferred_element_type=jnp.float32)          # (TQ, M) f32
        # TODO(synk): optional `mask` argument of the module is never used (default None).

        # exact softmax, normalization deferred past the PV matmul (EUP reciprocal, free slot)
        m_max = jnp.max(sim, axis=-1, keepdims=True)
        p = jnp.exp(sim - m_max)                                           # unnormalized probs
        inv_sum = pl.reciprocal(jnp.sum(p, axis=-1, keepdims=True), approx=True)  # (TQ, 1)

        o_h = jnp.dot(p.astype(cdt), v_h, preferred_element_type=jnp.float32) * inv_sum  # (TQ, dh)
        contrib = jnp.dot(o_h.astype(cdt), wo_ref[h],
                          preferred_element_type=jnp.float32)              # (TQ, Dq)
        out_acc = contrib if out_acc is None else out_acc + contrib

    out = out_acc + bo_ref[...].astype(jnp.float32)
    # TODO(synk): nn.Dropout(p=0.0) in self.out is the identity; omitted.
    o_ref[0] = out.astype(o_ref.dtype)


def cross_attention(query, context, wq, wk, wv, wo, bo, *, n_heads: int,
                    tile_q: int = 512,
                    compute_dtype=jnp.bfloat16,
                    vmem_limit_bytes: int = 48 * 1024 * 1024):
    """CrossAttention forward.

    query  : [B, N, query_dim] or [B, C, H, W] (rearranged like the torch module)
    context: [B, M, context_dim] or None (None -> self-attention on the query tokens)
    wq: [query_dim, d_model]; wk, wv: [context_dim, d_model]; wo: [d_model, query_dim]; bo: [query_dim]
    """
    convert = query.ndim == 4
    if convert:
        B, C, Hs, Ws = query.shape
        x = query.transpose(0, 2, 3, 1).reshape(B, Hs * Ws, C)   # 'b c h w -> b (h w) c'
    else:
        x = query

    if context is None:
        context = x

    out_dtype = query.dtype
    B, N, Dq = x.shape
    _, M, Dc = context.shape
    d_model = wq.shape[1]
    assert d_model % n_heads == 0, "d_model must be divisible by n_heads"
    dh = d_model // n_heads
    scale = 1.0 / float(dh) ** 0.5

    # bf16 MXU operands (f32 accumulation inside the kernel); 1/sqrt(dh) folded into Wq.
    x = x.astype(compute_dtype)
    context = context.astype(compute_dtype)
    wq_h = (wq * scale).reshape(Dq, n_heads, dh).transpose(1, 0, 2).astype(compute_dtype)  # (H, Dq, dh)
    wk_h = wk.reshape(Dc, n_heads, dh).transpose(1, 0, 2).astype(compute_dtype)            # (H, Dc, dh)
    wv_h = wv.reshape(Dc, n_heads, dh).transpose(1, 0, 2).astype(compute_dtype)            # (H, Dc, dh)
    wo_h = wo.reshape(n_heads, dh, Dq).astype(compute_dtype)                               # (H, dh, Dq)
    bo_2d = bo.reshape(1, Dq).astype(jnp.float32)

    # Query-row tile: large for MXU utilization, 8-aligned; shrink it if the per-head (TQ, M)
    # f32 score/prob temporaries would blow the VMEM budget. Ragged tail handled via padding.
    tq = min(tile_q, _round_up(N, 8))
    score_budget = vmem_limit_bytes // 3
    while tq > 128 and 4 * tq * M * 4 > score_budget:
        tq = max(128, _round_up(tq // 2, 8))
    # TODO(synk): for very long self-attention contexts (M >~ 4k on v7x) a flash-style
    #             online-softmax over a tiled context axis would bound VMEM further.

    n_pad = _round_up(N, tq)
    if n_pad != N:
        x = jnp.pad(x, ((0, 0), (0, n_pad - N), (0, 0)))

    kernel = functools.partial(_cross_attn_kernel, n_heads=n_heads)

    out = pl.pallas_call(
        kernel,
        out_shape=jax.ShapeDtypeStruct((B, n_pad, Dq), out_dtype),
        grid_spec=pltpu.PrefetchScalarGridSpec(
            num_scalar_prefetch=0,
            grid=(B, n_pad // tq),
            in_specs=[
                pl.BlockSpec((1, tq, Dq), lambda b, i: (b, i, 0)),           # query rows
                pl.BlockSpec((1, M, Dc), lambda b, i: (b, 0, 0)),            # context (per batch)
                pl.BlockSpec((n_heads, Dq, dh), lambda b, i: (0, 0, 0)),     # Wq (resident)
                pl.BlockSpec((n_heads, Dc, dh), lambda b, i: (0, 0, 0)),     # Wk (resident)
                pl.BlockSpec((n_heads, Dc, dh), lambda b, i: (0, 0, 0)),     # Wv (resident)
                pl.BlockSpec((n_heads, dh, Dq), lambda b, i: (0, 0, 0)),     # Wo (resident)
                pl.BlockSpec((1, Dq), lambda b, i: (0, 0)),                  # bias
            ],
            out_specs=pl.BlockSpec((1, tq, Dq), lambda b, i: (b, i, 0)),
            scratch_shapes=[
                pltpu.VMEM((n_heads, M, dh), compute_dtype),                 # K cache
                pltpu.VMEM((n_heads, M, dh), compute_dtype),                 # V cache
            ],
        ),
        compiler_params=pltpu.CompilerParams(
            # Query-row axis is "arbitrary": the K/V cache is filled at i == 0 and reused for
            # i > 0 within each batch element. Batch axis stays "parallel" (megacore sharding).
            # TODO(synk): for B == 1 on v7x one TensorCore idles; a no-cache variant with both
            #             axes "parallel" would trade K/V recompute for occupancy.
            dimension_semantics=("parallel", "arbitrary"),
            vmem_limit_bytes=vmem_limit_bytes,
        ),
    )(x, context, wq_h, wk_h, wv_h, wo_h, bo_2d)

    out = out[:, :N, :]
    if convert:
        out = out.reshape(B, Hs, Ws, Dq).transpose(0, 3, 1, 2)   # 'b (h w) c -> b c h w'
    return out


def _reference(query, context, wq, wk, wv, wo, bo, *, n_heads):
    """Pure-JAX f32 reference matching the torch module's math."""
    convert = query.ndim == 4
    if convert:
        B, C, Hs, Ws = query.shape
        x = query.transpose(0, 2, 3, 1).reshape(B, Hs * Ws, C)
    else:
        x = query
    if context is None:
        context = x
    d_model = wq.shape[1]
    dh = d_model // n_heads
    scale = 1.0 / float(dh) ** 0.5

    Q = x @ wq
    K = context @ wk
    V = context @ wv
    B_, N, _ = Q.shape
    M = K.shape[1]
    Qh = Q.reshape(B_, N, n_heads, dh).transpose(0, 2, 1, 3)
    Kh = K.reshape(B_, M, n_heads, dh).transpose(0, 2, 1, 3)
    Vh = V.reshape(B_, M, n_heads, dh).transpose(0, 2, 1, 3)
    sim = jnp.einsum('bhnd,bhmd->bhnm', Qh, Kh) * scale
    attn = jax.nn.softmax(sim, axis=-1)
    o = jnp.einsum('bhnm,bhmd->bhnd', attn, Vh)
    o = o.transpose(0, 2, 1, 3).reshape(B_, N, d_model)
    out = o @ wo + bo
    if convert:
        out = out.reshape(B, Hs, Ws, C).transpose(0, 3, 1, 2)
    return out


if __name__ == "__main__":
    # Small shapes consistent with the module: query is a [B, C, H, W] feature map
    # (query_dim = C), context is [B, seq, context_dim]; n_heads * d_head = d_model.
    B, C, Hs, Ws = 2, 32, 8, 8          # query_dim = 32, N = 64 query tokens
    seq, context_dim = 8, 64
    n_heads, d_head = 4, 16
    d_model = n_heads * d_head          # 64

    key = jax.random.PRNGKey(0)
    kq, kc, k1, k2, k3, k4, k5, k6, k7 = jax.random.split(key, 9)

    query = jax.random.normal(kq, (B, C, Hs, Ws), dtype=jnp.float32)
    context = jax.random.normal(kc, (B, seq, context_dim), dtype=jnp.float32)

    # Deterministic synthetic parameters (x @ W convention, transpose of nn.Linear.weight).
    wq = jax.random.normal(k1, (C, d_model), dtype=jnp.float32) * 0.05
    wk = jax.random.normal(k2, (context_dim, d_model), dtype=jnp.float32) * 0.05
    wv = jax.random.normal(k3, (context_dim, d_model), dtype=jnp.float32) * 0.05
    wo = jax.random.normal(k4, (d_model, C), dtype=jnp.float32) * 0.05
    bo = jax.random.normal(k5, (C,), dtype=jnp.float32) * 0.05

    # 1) Cross-attention on a [B, C, H, W] feature map with a separate context.
    out = cross_attention(query, context, wq, wk, wv, wo, bo, n_heads=n_heads)
    out = jax.block_until_ready(out)
    ref = _reference(query, context, wq, wk, wv, wo, bo, n_heads=n_heads)
    assert out.shape == query.shape
    # bf16 MXU operands -> looser tolerance than the pure-f32 reference.
    assert jnp.allclose(out, ref, atol=2e-2, rtol=2e-2), "cross-attention mismatch vs reference"

    # 2) Self-attention path (context=None), ragged N and a small query tile so several
    #    query-row tiles reuse the cached K/V (exercises i > 0 and the padded tail).
    N2 = 60
    query2 = jax.random.normal(k6, (B, N2, C), dtype=jnp.float32)
    wk2 = jax.random.normal(k7, (C, d_model), dtype=jnp.float32) * 0.05
    wv2 = wk2 * 0.5
    out2 = cross_attention(query2, None, wq, wk2, wv2, wo, bo, n_heads=n_heads, tile_q=16)
    out2 = jax.block_until_ready(out2)
    ref2 = _reference(query2, None, wq, wk2, wv2, wo, bo, n_heads=n_heads)
    assert out2.shape == query2.shape
    assert jnp.allclose(out2, ref2, atol=2e-2, rtol=2e-2), "self-attention mismatch vs reference"

    print("KERNEL_OK")
</pallas_src>

<mosaic_0001>
module attributes {stable_mosaic.version = 11 : i64} {
  func.func @_cross_attn_kernel(%arg0: i32, %arg1: i32, %arg2: memref<1x64x32xbf16, #tpu.memory_space<vmem>>, %arg3: memref<1x8x64xbf16, #tpu.memory_space<vmem>>, %arg4: memref<4x32x16xbf16, #tpu.memory_space<vmem>>, %arg5: memref<4x64x16xbf16, #tpu.memory_space<vmem>>, %arg6: memref<4x64x16xbf16, #tpu.memory_space<vmem>>, %arg7: memref<4x16x32xbf16, #tpu.memory_space<vmem>>, %arg8: memref<1x32xf32, #tpu.memory_space<vmem>>, %arg9: memref<1x64x32xf32, #tpu.memory_space<vmem>>, %arg10: memref<4x8x16xbf16, #tpu.memory_space<vmem>>, %arg11: memref<4x8x16xbf16, #tpu.memory_space<vmem>>) attributes {dimension_semantics = [#tpu.dimension_semantics<parallel>, #tpu.dimension_semantics<arbitrary>], iteration_bounds = array<i64: 2, 1>, scalar_prefetch = 0 : i64, scratch_operands = 2 : i64, tpu.core_type = #tpu.core_type<tc>, window_params = [{transform_indices = @transform_0, window_bounds = array<i64: 1, 64, 32>}, {transform_indices = @transform_1, window_bounds = array<i64: 1, 8, 64>}, {pipeline_mode = #tpu.pipeline_mode<synchronous>, transform_indices = @transform_2, window_bounds = array<i64: 4, 32, 16>}, {pipeline_mode = #tpu.pipeline_mode<synchronous>, transform_indices = @transform_3, window_bounds = array<i64: 4, 64, 16>}, {pipeline_mode = #tpu.pipeline_mode<synchronous>, transform_indices = @transform_4, window_bounds = array<i64: 4, 64, 16>}, {pipeline_mode = #tpu.pipeline_mode<synchronous>, transform_indices = @transform_5, window_bounds = array<i64: 4, 16, 32>}, {pipeline_mode = #tpu.pipeline_mode<synchronous>, transform_indices = @transform_6, window_bounds = array<i64: 1, 32>}, {transform_indices = @transform_7, window_bounds = array<i64: 1, 64, 32>}]} {
    %c0_i32 = arith.constant 0 : i32
    %0 = arith.cmpi eq, %arg1, %c0_i32 : i32
    %1 = arith.extui %0 : i1 to i32
    %c0_i32_0 = arith.constant 0 : i32
    %2 = arith.cmpi ne, %1, %c0_i32_0 : i32
    scf.if %2 {
      %c0_76 = arith.constant 0 : index
      %c0_77 = arith.constant 0 : index
      %c0_78 = arith.constant 0 : index
      %114 = vector.load %arg3[%c0_76, %c0_77, %c0_78] : memref<1x8x64xbf16, #tpu.memory_space<vmem>>, vector<1x8x64xbf16>
      %115 = vector.shape_cast %114 : vector<1x8x64xbf16> to vector<8x64xbf16>
      %c0_79 = arith.constant 0 : index
      %c0_80 = arith.constant 0 : index
      %c0_81 = arith.constant 0 : index
      %116 = vector.load %arg5[%c0_79, %c0_80, %c0_81] : memref<4x64x16xbf16, #tpu.memory_space<vmem>>, vector<1x64x16xbf16>
      %117 = vector.shape_cast %116 : vector<1x64x16xbf16> to vector<64x16xbf16>
      %cst_82 = arith.constant dense<0.000000e+00> : vector<8x16xf32>
      %118 = tpu.matmul %115, %117, %cst_82 {dimension_numbers = #tpu.dot_dimension_numbers<[1], [0], [0], [1], [0, 0, 1, 1], [], []>} : vector<8x64xbf16>, vector<64x16xbf16>, vector<8x16xf32> -> vector<8x16xf32>
      %119 = arith.truncf %118 : vector<8x16xf32> to vector<8x16xbf16>
      %c0_83 = arith.constant 0 : index
      %c0_84 = arith.constant 0 : index
      %c0_85 = arith.constant 0 : index
      %120 = vector.load %arg10[%c0_83, %c0_84, %c0_85] : memref<4x8x16xbf16, #tpu.memory_space<vmem>>, vector<1x8x16xbf16>
      %121 = vector.shape_cast %120 : vector<1x8x16xbf16> to vector<8x16xbf16>
      %122 = vector.shape_cast %119 : vector<8x16xbf16> to vector<1x8x16xbf16>
      tpu.vector_store %arg10[%c0_83, %c0_84, %c0_85], %122 {strides = array<i32>} : memref<4x8x16xbf16, #tpu.memory_space<vmem>>, vector<1x8x16xbf16>,
      %c0_86 = arith.constant 0 : index
      %c0_87 = arith.constant 0 : index
      %c0_88 = arith.constant 0 : index
      %123 = vector.load %arg6[%c0_86, %c0_87, %c0_88] : memref<4x64x16xbf16, #tpu.memory_space<vmem>>, vector<1x64x16xbf16>
      %124 = vector.shape_cast %123 : vector<1x64x16xbf16> to vector<64x16xbf16>
      %cst_89 = arith.constant dense<0.000000e+00> : vector<8x16xf32>
      %125 = tpu.matmul %115, %124, %cst_89 {dimension_numbers = #tpu.dot_dimension_numbers<[1], [0], [0], [1], [0, 0, 1, 1], [], []>} : vector<8x64xbf16>, vector<64x16xbf16>, vector<8x16xf32> -> vector<8x16xf32>
      %126 = arith.truncf %125 : vector<8x16xf32> to vector<8x16xbf16>
      %c0_90 = arith.constant 0 : index
      %c0_91 = arith.constant 0 : index
      %c0_92 = arith.constant 0 : index
      %127 = vector.load %arg11[%c0_90, %c0_91, %c0_92] : memref<4x8x16xbf16, #tpu.memory_space<vmem>>, vector<1x8x16xbf16>
      %128 = vector.shape_cast %127 : vector<1x8x16xbf16> to vector<8x16xbf16>
      %129 = vector.shape_cast %126 : vector<8x16xbf16> to vector<1x8x16xbf16>
      tpu.vector_store %arg11[%c0_90, %c0_91, %c0_92], %129 {strides = array<i32>} : memref<4x8x16xbf16, #tpu.memory_space<vmem>>, vector<1x8x16xbf16>,
      %c1_93 = arith.constant 1 : index
      %c0_94 = arith.constant 0 : index
      %c0_95 = arith.constant 0 : index
      %130 = vector.load %arg5[%c1_93, %c0_94, %c0_95] : memref<4x64x16xbf16, #tpu.memory_space<vmem>>, vector<1x64x16xbf16>
      %131 = vector.shape_cast %130 : vector<1x64x16xbf16> to vector<64x16xbf16>
      %cst_96 = arith.constant dense<0.000000e+00> : vector<8x16xf32>
      %132 = tpu.matmul %115, %131, %cst_96 {dimension_numbers = #tpu.dot_dimension_numbers<[1], [0], [0], [1], [0, 0, 1, 1], [], []>} : vector<8x64xbf16>, vector<64x16xbf16>, vector<8x16xf32> -> vector<8x16xf32>
      %133 = arith.truncf %132 : vector<8x16xf32> to vector<8x16xbf16>
      %c1_97 = arith.constant 1 : index
      %c0_98 = arith.constant 0 : index
      %c0_99 = arith.constant 0 : index
      %134 = vector.load %arg10[%c1_97, %c0_98, %c0_99] : memref<4x8x16xbf16, #tpu.memory_space<vmem>>, vector<1x8x16xbf16>
      %135 = vector.shape_cast %134 : vector<1x8x16xbf16> to vector<8x16xbf16>
      %136 = vector.shape_cast %133 : vector<8x16xbf16> to vector<1x8x16xbf16>
      tpu.vector_store %arg10[%c1_97, %c0_98, %c0_99], %136 {strides = array<i32>} : memref<4x8x16xbf16, #tpu.memory_space<vmem>>, vector<1x8x16xbf16>,
      %c1_100 = arith.constant 1 : index
      %c0_101 = arith.constant 0 : index
      %c0_102 = arith.constant 0 : index
      %137 = vector.load %arg6[%c1_100, %c0_101, %c0_102] : memref<4x64x16xbf16, #tpu.memory_space<vmem>>, vector<1x64x16xbf16>
      %138 = vector.shape_cast %137 : vector<1x64x16xbf16> to vector<64x16xbf16>
      %cst_103 = arith.constant dense<0.000000e+00> : vector<8x16xf32>
      %139 = tpu.matmul %115, %138, %cst_103 {dimension_numbers = #tpu.dot_dimension_numbers<[1], [0], [0], [1], [0, 0, 1, 1], [], []>} : vector<8x64xbf16>, vector<64x16xbf16>, vector<8x16xf32> -> vector<8x16xf32>
      %140 = arith.truncf %139 : vector<8x16xf32> to vector<8x16xbf16>
      %c1_104 = arith.constant 1 : index
      %c0_105 = arith.constant 0 : index
      %c0_106 = arith.constant 0 : index
      %141 = vector.load %arg11[%c1_104, %c0_105, %c0_106] : memref<4x8x16xbf16, #tpu.memory_space<vmem>>, vector<1x8x16xbf16>
      %142 = vector.shape_cast %141 : vector<1x8x16xbf16> to vector<8x16xbf16>
      %143 = vector.shape_cast %140 : vector<8x16xbf16> to vector<1x8x16xbf16>
      tpu.vector_store %arg11[%c1_104, %c0_105, %c0_106], %143 {strides = array<i32>} : memref<4x8x16xbf16, #tpu.memory_space<vmem>>, vector<1x8x16xbf16>,
      %c2_107 = arith.constant 2 : index
      %c0_108 = arith.constant 0 : index
      %c0_109 = arith.constant 0 : index
      %144 = vector.load %arg5[%c2_107, %c0_108, %c0_109] : memref<4x64x16xbf16, #tpu.memory_space<vmem>>, vector<1x64x16xbf16>
      %145 = vector.shape_cast %144 : vector<1x64x16xbf16> to vector<64x16xbf16>
      %cst_110 = arith.constant dense<0.000000e+00> : vector<8x16xf32>
      %146 = tpu.matmul %115, %145, %cst_110 {dimension_numbers = #tpu.dot_dimension_numbers<[1], [0], [0], [1], [0, 0, 1, 1], [], []>} : vector<8x64xbf16>, vector<64x16xbf16>, vector<8x16xf32> -> vector<8x16xf32>
      %147 = arith.truncf %146 : vector<8x16xf32> to vector<8x16xbf16>
      %c2_111 = arith.constant 2 : index
      %c0_112 = arith.constant 0 : index
      %c0_113 = arith.constant 0 : index
      %148 = vector.load %arg10[%c2_111, %c0_112, %c0_113] : memref<4x8x16xbf16, #tpu.memory_space<vmem>>, vector<1x8x16xbf16>
      %149 = vector.shape_cast %148 : vector<1x8x16xbf16> to vector<8x16xbf16>
      %150 = vector.shape_cast %147 : vector<8x16xbf16> to vector<1x8x16xbf16>
      tpu.vector_store %arg10[%c2_111, %c0_112, %c0_113], %150 {strides = array<i32>} : memref<4x8x16xbf16, #tpu.memory_space<vmem>>, vector<1x8x16xbf16>,
      %c2_114 = arith.constant 2 : index
      %c0_115 = arith.constant 0 : index
      %c0_116 = arith.constant 0 : index
      %151 = vector.load %arg6[%c2_114, %c0_115, %c0_116] : memref<4x64x16xbf16, #tpu.memory_space<vmem>>, vector<1x64x16xbf16>
      %152 = vector.shape_cast %151 : vector<1x64x16xbf16> to vector<64x16xbf16>
      %cst_117 = arith.constant dense<0.000000e+00> : vector<8x16xf32>
      %153 = tpu.matmul %115, %152, %cst_117 {dimension_numbers = #tpu.dot_dimension_numbers<[1], [0], [0], [1], [0, 0, 1, 1], [], []>} : vector<8x64xbf16>, vector<64x16xbf16>, vector<8x16xf32> -> vector<8x16xf32>
      %154 = arith.truncf %153 : vector<8x16xf32> to vector<8x16xbf16>
      %c2_118 = arith.constant 2 : index
      %c0_119 = arith.constant 0 : index
      %c0_120 = arith.constant 0 : index
      %155 = vector.load %arg11[%c2_118, %c0_119, %c0_120] : memref<4x8x16xbf16, #tpu.memory_space<vmem>>, vector<1x8x16xbf16>
      %156 = vector.shape_cast %155 : vector<1x8x16xbf16> to vector<8x16xbf16>
      %157 = vector.shape_cast %154 : vector<8x16xbf16> to vector<1x8x16xbf16>
      tpu.vector_store %arg11[%c2_118, %c0_119, %c0_120], %157 {strides = array<i32>} : memref<4x8x16xbf16, #tpu.memory_space<vmem>>, vector<1x8x16xbf16>,
      %c3_121 = arith.constant 3 : index
      %c0_122 = arith.constant 0 : index
      %c0_123 = arith.constant 0 : index
      %158 = vector.load %arg5[%c3_121, %c0_122, %c0_123] : memref<4x64x16xbf16, #tpu.memory_space<vmem>>, vector<1x64x16xbf16>
      %159 = vector.shape_cast %158 : vector<1x64x16xbf16> to vector<64x16xbf16>
      %cst_124 = arith.constant dense<0.000000e+00> : vector<8x16xf32>
      %160 = tpu.matmul %115, %159, %cst_124 {dimension_numbers = #tpu.dot_dimension_numbers<[1], [0], [0], [1], [0, 0, 1, 1], [], []>} : vector<8x64xbf16>, vector<64x16xbf16>, vector<8x16xf32> -> vector<8x16xf32>
      %161 = arith.truncf %160 : vector<8x16xf32> to vector<8x16xbf16>
      %c3_125 = arith.constant 3 : index
      %c0_126 = arith.constant 0 : index
      %c0_127 = arith.constant 0 : index
      %162 = vector.load %arg10[%c3_125, %c0_126, %c0_127] : memref<4x8x16xbf16, #tpu.memory_space<vmem>>, vector<1x8x16xbf16>
      %163 = vector.shape_cast %162 : vector<1x8x16xbf16> to vector<8x16xbf16>
      %164 = vector.shape_cast %161 : vector<8x16xbf16> to vector<1x8x16xbf16>
      tpu.vector_store %arg10[%c3_125, %c0_126, %c0_127], %164 {strides = array<i32>} : memref<4x8x16xbf16, #tpu.memory_space<vmem>>, vector<1x8x16xbf16>,
      %c3_128 = arith.constant 3 : index
      %c0_129 = arith.constant 0 : index
      %c0_130 = arith.constant 0 : index
      %165 = vector.load %arg6[%c3_128, %c0_129, %c0_130] : memref<4x64x16xbf16, #tpu.memory_space<vmem>>, vector<1x64x16xbf16>
      %166 = vector.shape_cast %165 : vector<1x64x16xbf16> to vector<64x16xbf16>
      %cst_131 = arith.constant dense<0.000000e+00> : vector<8x16xf32>
      %167 = tpu.matmul %115, %166, %cst_131 {dimension_numbers = #tpu.dot_dimension_numbers<[1], [0], [0], [1], [0, 0, 1, 1], [], []>} : vector<8x64xbf16>, vector<64x16xbf16>, vector<8x16xf32> -> vector<8x16xf32>
      %168 = arith.truncf %167 : vector<8x16xf32> to vector<8x16xbf16>
      %c3_132 = arith.constant 3 : index
      %c0_133 = arith.constant 0 : index
      %c0_134 = arith.constant 0 : index
      %169 = vector.load %arg11[%c3_132, %c0_133, %c0_134] : memref<4x8x16xbf16, #tpu.memory_space<vmem>>, vector<1x8x16xbf16>
      %170 = vector.shape_cast %169 : vector<1x8x16xbf16> to vector<8x16xbf16>
      %171 = vector.shape_cast %168 : vector<8x16xbf16> to vector<1x8x16xbf16>
      tpu.vector_store %arg11[%c3_132, %c0_133, %c0_134], %171 {strides = array<i32>} : memref<4x8x16xbf16, #tpu.memory_space<vmem>>, vector<1x8x16xbf16>,
    } else {
    }
    %c0 = arith.constant 0 : index
    %c0_1 = arith.constant 0 : index
    %c0_2 = arith.constant 0 : index
    %3 = vector.load %arg2[%c0, %c0_1, %c0_2] : memref<1x64x32xbf16, #tpu.memory_space<vmem>>, vector<1x64x32xbf16>
    %4 = vector.shape_cast %3 : vector<1x64x32xbf16> to vector<64x32xbf16>
    %c0_3 = arith.constant 0 : index
    %c0_4 = arith.constant 0 : index
    %c0_5 = arith.constant 0 : index
    %5 = vector.load %arg4[%c0_3, %c0_4, %c0_5] : memref<4x32x16xbf16, #tpu.memory_space<vmem>>, vector<1x32x16xbf16>
    %6 = vector.shape_cast %5 : vector<1x32x16xbf16> to vector<32x16xbf16>
    %cst = arith.constant dense<0.000000e+00> : vector<64x16xf32>
    %7 = tpu.matmul %4, %6, %cst {dimension_numbers = #tpu.dot_dimension_numbers<[1], [0], [0], [1], [0, 0, 1, 1], [], []>} : vector<64x32xbf16>, vector<32x16xbf16>, vector<64x16xf32> -> vector<64x16xf32>
    %8 = arith.truncf %7 : vector<64x16xf32> to vector<64x16xbf16>
    %c0_6 = arith.constant 0 : index
    %c0_7 = arith.constant 0 : index
    %c0_8 = arith.constant 0 : index
    %9 = vector.load %arg10[%c0_6, %c0_7, %c0_8] : memref<4x8x16xbf16, #tpu.memory_space<vmem>>, vector<1x8x16xbf16>
    %10 = vector.shape_cast %9 : vector<1x8x16xbf16> to vector<8x16xbf16>
    %c0_9 = arith.constant 0 : index
    %c0_10 = arith.constant 0 : index
    %c0_11 = arith.constant 0 : index
    %11 = vector.load %arg11[%c0_9, %c0_10, %c0_11] : memref<4x8x16xbf16, #tpu.memory_space<vmem>>, vector<1x8x16xbf16>
    %12 = vector.shape_cast %11 : vector<1x8x16xbf16> to vector<8x16xbf16>
    %cst_12 = arith.constant dense<0.000000e+00> : vector<64x8xf32>
    %13 = tpu.matmul %8, %10, %cst_12 {dimension_numbers = #tpu.dot_dimension_numbers<[1], [1], [0], [0], [0, 0, 1, 0], [], []>} : vector<64x16xbf16>, vector<8x16xbf16>, vector<64x8xf32> -> vector<64x8xf32>
    %cst_13 = arith.constant dense<0xFF800000> : vector<64xf32>
    %14 = vector.multi_reduction <maximumf>, %13, %cst_13 [1] : vector<64x8xf32> to vector<64xf32>
    %15 = vector.shape_cast %14 : vector<64xf32> to vector<64x1xf32>
    %16 = vector.broadcast %15 : vector<64x1xf32> to vector<64x8xf32>
    %17 = arith.subf %13, %16 : vector<64x8xf32>
    %18 = math.exp %17 : vector<64x8xf32>
    %cst_14 = arith.constant dense<0.000000e+00> : vector<64xf32>
    %19 = vector.multi_reduction <add>, %18, %cst_14 [1] : vector<64x8xf32> to vector<64xf32>
    %20 = vector.shape_cast %19 : vector<64xf32> to vector<64x1xf32>
    %21 = tpu.reciprocal %20 {approx = true} : vector<64x1xf32> -> vector<64x1xf32>
    %22 = arith.truncf %18 : vector<64x8xf32> to vector<64x8xbf16>
    %cst_15 = arith.constant dense<0.000000e+00> : vector<64x16xf32>
    %23 = tpu.matmul %22, %12, %cst_15 {dimension_numbers = #tpu.dot_dimension_numbers<[1], [0], [0], [1], [0, 0, 1, 1], [], []>} : vector<64x8xbf16>, vector<8x16xbf16>, vector<64x16xf32> -> vector<64x16xf32>
    %24 = vector.broadcast %21 : vector<64x1xf32> to vector<64x16xf32>
    %25 = arith.mulf %23, %24 : vector<64x16xf32>
    %26 = arith.truncf %25 : vector<64x16xf32> to vector<64x16xbf16>
    %c0_16 = arith.constant 0 : index
    %c0_17 = arith.constant 0 : index
    %c0_18 = arith.constant 0 : index
    %27 = vector.load %arg7[%c0_16, %c0_17, %c0_18] : memref<4x16x32xbf16, #tpu.memory_space<vmem>>, vector<1x16x32xbf16>
    %28 = vector.shape_cast %27 : vector<1x16x32xbf16> to vector<16x32xbf16>
    %cst_19 = arith.constant dense<0.000000e+00> : vector<64x32xf32>
    %29 = tpu.matmul %26, %28, %cst_19 {dimension_numbers = #tpu.dot_dimension_numbers<[1], [0], [0], [1], [0, 0, 1, 1], [], []>} : vector<64x16xbf16>, vector<16x32xbf16>, vector<64x32xf32> -> vector<64x32xf32>
    %c1 = arith.constant 1 : index
    %c0_20 = arith.constant 0 : index
    %c0_21 = arith.constant 0 : index
    %30 = vector.load %arg4[%c1, %c0_20, %c0_21] : memref<4x32x16xbf16, #tpu.memory_space<vmem>>, vector<1x32x16xbf16>
    %31 = vector.shape_cast %30 : vector<1x32x16xbf16> to vector<32x16xbf16>
    %cst_22 = arith.constant dense<0.000000e+00> : vector<64x16xf32>
    %32 = tpu.matmul %4, %31, %cst_22 {dimension_numbers = #tpu.dot_dimension_numbers<[1], [0], [0], [1], [0, 0, 1, 1], [], []>} : vector<64x32xbf16>, vector<32x16xbf16>, vector<64x16xf32> -> vector<64x16xf32>
    %33 = arith.truncf %32 : vector<64x16xf32> to vector<64x16xbf16>
    %c1_23 = arith.constant 1 : index
    %c0_24 = arith.constant 0 : index
    %c0_25 = arith.constant 0 : index
    %34 = vector.load %arg10[%c1_23, %c0_24, %c0_25] : memref<4x8x16xbf16, #tpu.memory_space<vmem>>, vector<1x8x16xbf16>
    %35 = vector.shape_cast %34 : vector<1x8x16xbf16> to vector<8x16xbf16>
    %c1_26 = arith.constant 1 : index
    %c0_27 = arith.constant 0 : index
    %c0_28 = arith.constant 0 : index
    %36 = vector.load %arg11[%c1_26, %c0_27, %c0_28] : memref<4x8x16xbf16, #tpu.memory_space<vmem>>, vector<1x8x16xbf16>
    %37 = vector.shape_cast %36 : vector<1x8x16xbf16> to vector<8x16xbf16>
    %cst_29 = arith.constant dense<0.000000e+00> : vector<64x8xf32>
    %38 = tpu.matmul %33, %35, %cst_29 {dimension_numbers = #tpu.dot_dimension_numbers<[1], [1], [0], [0], [0, 0, 1, 0], [], []>} : vector<64x16xbf16>, vector<8x16xbf16>, vector<64x8xf32> -> vector<64x8xf32>
    %cst_30 = arith.constant dense<0xFF800000> : vector<64xf32>
    %39 = vector.multi_reduction <maximumf>, %38, %cst_30 [1] : vector<64x8xf32> to vector<64xf32>
    %40 = vector.shape_cast %39 : vector<64xf32> to vector<64x1xf32>
    %41 = vector.broadcast %40 : vector<64x1xf32> to vector<64x8xf32>
    %42 = arith.subf %38, %41 : vector<64x8xf32>
    %43 = math.exp %42 : vector<64x8xf32>
    %cst_31 = arith.constant dense<0.000000e+00> : vector<64xf32>
    %44 = vector.multi_reduction <add>, %43, %cst_31 [1] : vector<64x8xf32> to vector<64xf32>
    %45 = vector.shape_cast %44 : vector<64xf32> to vector<64x1xf32>
    %46 = tpu.reciprocal %45 {approx = true} : vector<64x1xf32> -> vector<64x1xf32>
    %47 = arith.truncf %43 : vector<64x8xf32> to vector<64x8xbf16>
    %cst_32 = arith.constant dense<0.000000e+00> : vector<64x16xf32>
    %48 = tpu.matmul %47, %37, %cst_32 {dimension_numbers = #tpu.dot_dimension_numbers<[1], [0], [0], [1], [0, 0, 1, 1], [], []>} : vector<64x8xbf16>, vector<8x16xbf16>, vector<64x16xf32> -> vector<64x16xf32>
    %49 = vector.broadcast %46 : vector<64x1xf32> to vector<64x16xf32>
    %50 = arith.mulf %48, %49 : vector<64x16xf32>
    %51 = arith.truncf %50 : vector<64x16xf32> to vector<64x16xbf16>
    %c1_33 = arith.constant 1 : index
    %c0_34 = arith.constant 0 : index
    %c0_35 = arith.constant 0 : index
    %52 = vector.load %arg7[%c1_33, %c0_34, %c0_35] : memref<4x16x32xbf16, #tpu.memory_space<vmem>>, vector<1x16x32xbf16>
    %53 = vector.shape_cast %52 : vector<1x16x32xbf16> to vector<16x32xbf16>
    %cst_36 = arith.constant dense<0.000000e+00> : vector<64x32xf32>
    %54 = tpu.matmul %51, %53, %cst_36 {dimension_numbers = #tpu.dot_dimension_numbers<[1], [0], [0], [1], [0, 0, 1, 1], [], []>} : vector<64x16xbf16>, vector<16x32xbf16>, vector<64x32xf32> -> vector<64x32xf32>
    %55 = arith.addf %29, %54 : vector<64x32xf32>
    %c2 = arith.constant 2 : index
    %c0_37 = arith.constant 0 : index
    %c0_38 = arith.constant 0 : index
    %56 = vector.load %arg4[%c2, %c0_37, %c0_38] : memref<4x32x16xbf16, #tpu.memory_space<vmem>>, vector<1x32x16xbf16>
    %57 = vector.shape_cast %56 : vector<1x32x16xbf16> to vector<32x16xbf16>
    %cst_39 = arith.constant dense<0.000000e+00> : vector<64x16xf32>
    %58 = tpu.matmul %4, %57, %cst_39 {dimension_numbers = #tpu.dot_dimension_numbers<[1], [0], [0], [1], [0, 0, 1, 1], [], []>} : vector<64x32xbf16>, vector<32x16xbf16>, vector<64x16xf32> -> vector<64x16xf32>
    %59 = arith.truncf %58 : vector<64x16xf32> to vector<64x16xbf16>
    %c2_40 = arith.constant 2 : index
    %c0_41 = arith.constant 0 : index
    %c0_42 = arith.constant 0 : index
    %60 = vector.load %arg10[%c2_40, %c0_41, %c0_42] : memref<4x8x16xbf16, #tpu.memory_space<vmem>>, vector<1x8x16xbf16>
    %61 = vector.shape_cast %60 : vector<1x8x16xbf16> to vector<8x16xbf16>
    %c2_43 = arith.constant 2 : index
    %c0_44 = arith.constant 0 : index
    %c0_45 = arith.constant 0 : index
    %62 = vector.load %arg11[%c2_43, %c0_44, %c0_45] : memref<4x8x16xbf16, #tpu.memory_space<vmem>>, vector<1x8x16xbf16>
    %63 = vector.shape_cast %62 : vector<1x8x16xbf16> to vector<8x16xbf16>
    %cst_46 = arith.constant dense<0.000000e+00> : vector<64x8xf32>
    %64 = tpu.matmul %59, %61, %cst_46 {dimension_numbers = #tpu.dot_dimension_numbers<[1], [1], [0], [0], [0, 0, 1, 0], [], []>} : vector<64x16xbf16>, vector<8x16xbf16>, vector<64x8xf32> -> vector<64x8xf32>
    %cst_47 = arith.constant dense<0xFF800000> : vector<64xf32>
    %65 = vector.multi_reduction <maximumf>, %64, %cst_47 [1] : vector<64x8xf32> to vector<64xf32>
    %66 = vector.shape_cast %65 : vector<64xf32> to vector<64x1xf32>
    %67 = vector.broadcast %66 : vector<64x1xf32> to vector<64x8xf32>
    %68 = arith.subf %64, %67 : vector<64x8xf32>
    %69 = math.exp %68 : vector<64x8xf32>
    %cst_48 = arith.constant dense<0.000000e+00> : vector<64xf32>
    %70 = vector.multi_reduction <add>, %69, %cst_48 [1] : vector<64x8xf32> to vector<64xf32>
    %71 = vector.shape_cast %70 : vector<64xf32> to vector<64x1xf32>
    %72 = tpu.reciprocal %71 {approx = true} : vector<64x1xf32> -> vector<64x1xf32>
    %73 = arith.truncf %69 : vector<64x8xf32> to vector<64x8xbf16>
    %cst_49 = arith.constant dense<0.000000e+00> : vector<64x16xf32>
    %74 = tpu.matmul %73, %63, %cst_49 {dimension_numbers = #tpu.dot_dimension_numbers<[1], [0], [0], [1], [0, 0, 1, 1], [], []>} : vector<64x8xbf16>, vector<8x16xbf16>, vector<64x16xf32> -> vector<64x16xf32>
    %75 = vector.broadcast %72 : vector<64x1xf32> to vector<64x16xf32>
    %76 = arith.mulf %74, %75 : vector<64x16xf32>
    %77 = arith.truncf %76 : vector<64x16xf32> to vector<64x16xbf16>
    %c2_50 = arith.constant 2 : index
    %c0_51 = arith.constant 0 : index
    %c0_52 = arith.constant 0 : index
    %78 = vector.load %arg7[%c2_50, %c0_51, %c0_52] : memref<4x16x32xbf16, #tpu.memory_space<vmem>>, vector<1x16x32xbf16>
    %79 = vector.shape_cast %78 : vector<1x16x32xbf16> to vector<16x32xbf16>
    %cst_53 = arith.constant dense<0.000000e+00> : vector<64x32xf32>
    %80 = tpu.matmul %77, %79, %cst_53 {dimension_numbers = #tpu.dot_dimension_numbers<[1], [0], [0], [1], [0, 0, 1, 1], [], []>} : vector<64x16xbf16>, vector<16x32xbf16>, vector<64x32xf32> -> vector<64x32xf32>
    %81 = arith.addf %55, %80 : vector<64x32xf32>
    %c3 = arith.constant 3 : index
    %c0_54 = arith.constant 0 : index
    %c0_55 = arith.constant 0 : index
    %82 = vector.load %arg4[%c3, %c0_54, %c0_55] : memref<4x32x16xbf16, #tpu.memory_space<vmem>>, vector<1x32x16xbf16>
    %83 = vector.shape_cast %82 : vector<1x32x16xbf16> to vector<32x16xbf16>
    %cst_56 = arith.constant dense<0.000000e+00> : vector<64x16xf32>
    %84 = tpu.matmul %4, %83, %cst_56 {dimension_numbers = #tpu.dot_dimension_numbers<[1], [0], [0], [1], [0, 0, 1, 1], [], []>} : vector<64x32xbf16>, vector<32x16xbf16>, vector<64x16xf32> -> vector<64x16xf32>
    %85 = arith.truncf %84 : vector<64x16xf32> to vector<64x16xbf16>
    %c3_57 = arith.constant 3 : index
    %c0_58 = arith.constant 0 : index
    %c0_59 = arith.constant 0 : index
    %86 = vector.load %arg10[%c3_57, %c0_58, %c0_59] : memref<4x8x16xbf16, #tpu.memory_space<vmem>>, vector<1x8x16xbf16>
    %87 = vector.shape_cast %86 : vector<1x8x16xbf16> to vector<8x16xbf16>
    %c3_60 = arith.constant 3 : index
    %c0_61 = arith.constant 0 : index
    %c0_62 = arith.constant 0 : index
    %88 = vector.load %arg11[%c3_60, %c0_61, %c0_62] : memref<4x8x16xbf16, #tpu.memory_space<vmem>>, vector<1x8x16xbf16>
    %89 = vector.shape_cast %88 : vector<1x8x16xbf16> to vector<8x16xbf16>
    %cst_63 = arith.constant dense<0.000000e+00> : vector<64x8xf32>
    %90 = tpu.matmul %85, %87, %cst_63 {dimension_numbers = #tpu.dot_dimension_numbers<[1], [1], [0], [0], [0, 0, 1, 0], [], []>} : vector<64x16xbf16>, vector<8x16xbf16>, vector<64x8xf32> -> vector<64x8xf32>
    %cst_64 = arith.constant dense<0xFF800000> : vector<64xf32>
    %91 = vector.multi_reduction <maximumf>, %90, %cst_64 [1] : vector<64x8xf32> to vector<64xf32>
    %92 = vector.shape_cast %91 : vector<64xf32> to vector<64x1xf32>
    %93 = vector.broadcast %92 : vector<64x1xf32> to vector<64x8xf32>
    %94 = arith.subf %90, %93 : vector<64x8xf32>
    %95 = math.exp %94 : vector<64x8xf32>
    %cst_65 = arith.constant dense<0.000000e+00> : vector<64xf32>
    %96 = vector.multi_reduction <add>, %95, %cst_65 [1] : vector<64x8xf32> to vector<64xf32>
    %97 = vector.shape_cast %96 : vector<64xf32> to vector<64x1xf32>
    %98 = tpu.reciprocal %97 {approx = true} : vector<64x1xf32> -> vector<64x1xf32>
    %99 = arith.truncf %95 : vector<64x8xf32> to vector<64x8xbf16>
    %cst_66 = arith.constant dense<0.000000e+00> : vector<64x16xf32>
    %100 = tpu.matmul %99, %89, %cst_66 {dimension_numbers = #tpu.dot_dimension_numbers<[1], [0], [0], [1], [0, 0, 1, 1], [], []>} : vector<64x8xbf16>, vector<8x16xbf16>, vector<64x16xf32> -> vector<64x16xf32>
    %101 = vector.broadcast %98 : vector<64x1xf32> to vector<64x16xf32>
    %102 = arith.mulf %100, %101 : vector<64x16xf32>
    %103 = arith.truncf %102 : vector<64x16xf32> to vector<64x16xbf16>
    %c3_67 = arith.constant 3 : index
    %c0_68 = arith.constant 0 : index
    %c0_69 = arith.constant 0 : index
    %104 = vector.load %arg7[%c3_67, %c0_68, %c0_69] : memref<4x16x32xbf16, #tpu.memory_space<vmem>>, vector<1x16x32xbf16>
    %105 = vector.shape_cast %104 : vector<1x16x32xbf16> to vector<16x32xbf16>
    %cst_70 = arith.constant dense<0.000000e+00> : vector<64x32xf32>
    %106 = tpu.matmul %103, %105, %cst_70 {dimension_numbers = #tpu.dot_dimension_numbers<[1], [0], [0], [1], [0, 0, 1, 1], [], []>} : vector<64x16xbf16>, vector<16x32xbf16>, vector<64x32xf32> -> vector<64x32xf32>
    %107 = arith.addf %81, %106 : vector<64x32xf32>
    %c0_71 = arith.constant 0 : index
    %c0_72 = arith.constant 0 : index
    %108 = vector.load %arg8[%c0_71, %c0_72] : memref<1x32xf32, #tpu.memory_space<vmem>>, vector<1x32xf32>
    %109 = vector.broadcast %108 : vector<1x32xf32> to vector<64x32xf32>
    %110 = arith.addf %107, %109 : vector<64x32xf32>
    %c0_73 = arith.constant 0 : index
    %c0_74 = arith.constant 0 : index
    %c0_75 = arith.constant 0 : index
    %111 = vector.load %arg9[%c0_73, %c0_74, %c0_75] : memref<1x64x32xf32, #tpu.memory_space<vmem>>, vector<1x64x32xf32>
    %112 = vector.shape_cast %111 : vector<1x64x32xf32> to vector<64x32xf32>
    %113 = vector.shape_cast %110 : vector<64x32xf32> to vector<1x64x32xf32>
    tpu.vector_store %arg9[%c0_73, %c0_74, %c0_75], %113 {strides = array<i32>} : memref<1x64x32xf32, #tpu.memory_space<vmem>>, vector<1x64x32xf32>,
    return
  }
  func.func @transform_0(%arg0: i32, %arg1: i32) -> (i32, i32, i32) {
    %c0_i32 = arith.constant 0 : i32
    %c0_i32_0 = arith.constant 0 : i32
    return %arg0, %arg1, %c0_i32 : i32, i32, i32
  }
  func.func @transform_1(%arg0: i32, %arg1: i32) -> (i32, i32, i32) {
    %c0_i32 = arith.constant 0 : i32
    %c0_i32_0 = arith.constant 0 : i32
    %c0_i32_1 = arith.constant 0 : i32
    return %arg0, %c0_i32, %c0_i32_0 : i32, i32, i32
  }
  func.func @transform_2(%arg0: i32, %arg1: i32) -> (i32, i32, i32) {
    %c0_i32 = arith.constant 0 : i32
    %c0_i32_0 = arith.constant 0 : i32
    %c0_i32_1 = arith.constant 0 : i32
    %c0_i32_2 = arith.constant 0 : i32
    return %c0_i32, %c0_i32_0, %c0_i32_1 : i32, i32, i32
  }
  func.func @transform_3(%arg0: i32, %arg1: i32) -> (i32, i32, i32) {
    %c0_i32 = arith.constant 0 : i32
    %c0_i32_0 = arith.constant 0 : i32
    %c0_i32_1 = arith.constant 0 : i32
    %c0_i32_2 = arith.constant 0 : i32
    return %c0_i32, %c0_i32_0, %c0_i32_1 : i32, i32, i32
  }
  func.func @transform_4(%arg0: i32, %arg1: i32) -> (i32, i32, i32) {
    %c0_i32 = arith.constant 0 : i32
    %c0_i32_0 = arith.constant 0 : i32
    %c0_i32_1 = arith.constant 0 : i32
    %c0_i32_2 = arith.constant 0 : i32
    return %c0_i32, %c0_i32_0, %c0_i32_1 : i32, i32, i32
  }
  func.func @transform_5(%arg0: i32, %arg1: i32) -> (i32, i32, i32) {
    %c0_i32 = arith.constant 0 : i32
    %c0_i32_0 = arith.constant 0 : i32
    %c0_i32_1 = arith.constant 0 : i32
    %c0_i32_2 = arith.constant 0 : i32
    return %c0_i32, %c0_i32_0, %c0_i32_1 : i32, i32, i32
  }
  func.func @transform_6(%arg0: i32, %arg1: i32) -> (i32, i32) {
    %c0_i32 = arith.constant 0 : i32
    %c0_i32_0 = arith.constant 0 : i32
    %c0_i32_1 = arith.constant 0 : i32
    return %c0_i32, %c0_i32_0 : i32, i32
  }
  func.func @transform_7(%arg0: i32, %arg1: i32) -> (i32, i32, i32) {
    %c0_i32 = arith.constant 0 : i32
    %c0_i32_0 = arith.constant 0 : i32
    return %arg0, %arg1, %c0_i32 : i32, i32, i32
  }
}

</mosaic_0001>

<llo_original>
// kernel: tpu_custom_call.1
$region0: #{tpu_custom_call.1}
  #allocation0 [shape = 'u32[]', space=smem, size = 0x4, offset = 0x4, fixed_abs, tag = 'smem constant byte address 0x4 - core index']
  #allocation1 [shape = 'u32[144,128]{1,0:T(1,128)}', space=vmem, size = 0x12000, scoped, tag = 'internal scratch']
  #allocation2 [shape = 'bf16[4,8,16]{2,1,0:T(8,128)(2,1)}', space=vmem, size = 0x2000, scoped, tag = 'scratch operand']
  #allocation3 [shape = 'bf16[4,8,16]{2,1,0:T(8,128)(2,1)}', space=vmem, size = 0x2000, scoped, tag = 'scratch operand']
  %s0 = inlined_call_operand.vmem [shape: bf16[2,64,32], index: 0, kind: input, shape index: {}]
  %s1 = inlined_call_operand.vmem [shape: bf16[2,8,64], index: 1, kind: input, shape index: {}]
  %s2 = inlined_call_operand.vmem [shape: bf16[4,32,16], index: 2, kind: input, shape index: {}]
  %s3 = inlined_call_operand.vmem [shape: bf16[4,64,16], index: 3, kind: input, shape index: {}]
  %s4 = inlined_call_operand.vmem [shape: bf16[4,64,16], index: 4, kind: input, shape index: {}]
  %s5 = inlined_call_operand.vmem [shape: bf16[4,16,32], index: 5, kind: input, shape index: {}]
  %s6 = inlined_call_operand.vmem [shape: f32[1,32], index: 6, kind: input, shape index: {}]
  %s7 = inlined_call_operand.vmem [shape: f32[2,64,32], index: 7, kind: output, shape index: {}]
  %s8 = sld [smem:[#allocation0]]
  $region65: #{tpu_custom_call.1} parent=0
    _
  %s10 = ssub.s32 1, %s8
  %s11 = scalar_select 0, %s10, %s8
  loop: start=0, step=1, limit=4
  $region2: #{tpu_custom_call.1} parent=0 // loop_pre_header
    _
  $region3: #{tpu_custom_call.1} parent=0 // loop_header
    %s13 = sphi 0, %s17
    %p14 = scmp.ge.s32.totalorder %s13, 4
    %s20 = sphi 0, %s32
    %s21 = sphi 0, %s28
    %s22 = sphi 0, %s20
    %s23 = sphi 0, %s21
    %s24 = sphi 0, %s22
    %s25 = sphi 0, %s23
    %s37 = sphi 0, %s39
    %s40 = sphi 0, %s37
    %s41 = sphi 0, %s40
    %s57 = sphi 0, %s41
    %s63 = sphi 0, %s65
    %s66 = sphi 0, %s63
    %s67 = sphi 0, %s66
    %s83 = sphi 0, %s67
    %s87 = sphi 0, %s87
    %s89 = sphi 0, %s87
    %s90 = sphi 0, %s89
    %s104 = sphi 0, %s90
    %s108 = sphi 0, %s108
    %s110 = sphi 0, %s108
    %s111 = sphi 0, %s110
    %s125 = sphi 0, %s111
    %s129 = sphi 0, %s129
    %s131 = sphi 0, %s129
    %s132 = sphi 0, %s131
    %s146 = sphi 0, %s132
    %s150 = sphi 0, %s150
    %s152 = sphi 0, %s150
    %s153 = sphi 0, %s152
    %s167 = sphi 0, %s153
    %s171 = sphi 0, %s171
    %s173 = sphi 0, %s171
    %s174 = sphi 0, %s173
    %s188 = sphi 0, %s174
    %s196 = sphi 0, %s198
    %s199 = sphi 0, %s196
    %s200 = sphi 0, %s199
    %s216 = sphi 0, %s200
  $region4: #{tpu_custom_call.1} parent=0 // loop_header_branch
    %16 = sbr.rel (%p14) target = $region8
  $region5: #{tpu_custom_call.1} parent=0 // loop_body
    %s18 = ssub.s32 %s13, 1
    %s19 = ssub.s32 %s13, 2
    %s26 = sadd.s32 1, %s21
    %p27 = scmp.ge.s32.totalorder %s26, 1
    %s28 = scalar_select %p27, 0, %s26
    %s29 = sadd.s32 1, %s20
    %s30 = scalar_select %p27, %s29, %s20
    %p31 = scmp.ge.s32.totalorder %s30, 2
    %s32 = scalar_select %p31, 0, %s30
    %s33 = ssub.s32 %s20, %s32
    %s34 = ssub.s32 %s21, %s28
    %s35 = sor.u32 %s33, %s34
    %p36 = scmp.eq.s32.totalorder %s35, 0
    %s38 = sadd.s32 %s37, 1
    %s39 = scalar_select %p36, %s37, %s38
    %p42 = pneg %p36
    %p43 = scmp.eq.s32.totalorder %s13, 1
    %p44 = por %p42, %p43
    %p45 = scmp.ne.s32.totalorder %s37, %s40
    %p46 = scmp.eq.s32.totalorder %s13, 0
    %p47 = por %p45, %p46
    %p48 = scmp.ne.s32.totalorder %s37, %s40
    %p49 = scmp.eq.s32.totalorder %s18, 1
    %p50 = por %p48, %p49
    %p51 = scmp.ne.s32.totalorder %s40, %s41
    %p52 = scmp.eq.s32.totalorder %s18, 0
    %p53 = por %p51, %p52
    %p54 = scmp.ne.s32.totalorder %s40, %s41
    %p55 = scmp.eq.s32.totalorder %s19, 1
    %p56 = por %p54, %p55
    %p58 = scmp.ne.s32.totalorder %s41, %s57
    %p59 = scmp.eq.s32.totalorder %s19, 0
    %p60 = por %p58, %p59
    %s61 = ssub.s32 %s20, %s32
    %p62 = scmp.eq.s32.totalorder %s61, 0
    %s64 = sadd.s32 %s63, 1
    %s65 = scalar_select %p62, %s63, %s64
    %p68 = pneg %p62
    %p69 = scmp.eq.s32.totalorder %s13, 1
    %p70 = por %p68, %p69
    %p71 = scmp.ne.s32.totalorder %s63, %s66
    %p72 = scmp.eq.s32.totalorder %s13, 0
    %p73 = por %p71, %p72
    %p74 = scmp.ne.s32.totalorder %s63, %s66
    %p75 = scmp.eq.s32.totalorder %s18, 1
    %p76 = por %p74, %p75
    %p77 = scmp.ne.s32.totalorder %s66, %s67
    %p78 = scmp.eq.s32.totalorder %s18, 0
    %p79 = por %p77, %p78
    %p80 = scmp.ne.s32.totalorder %s66, %s67
    %p81 = scmp.eq.s32.totalorder %s19, 1
    %p82 = por %p80, %p81
    %p84 = scmp.ne.s32.totalorder %s67, %s83
    %p85 = scmp.eq.s32.totalorder %s19, 0
    %p86 = por %p84, %p85
    %s88 = sadd.s32 %s87, 1
    %p91 = scmp.eq.s32.totalorder %s13, 1
    %p92 = scmp.ne.s32.totalorder %s87, %s89
    %p93 = scmp.eq.s32.totalorder %s13, 0
    %p94 = por %p92, %p93
    %p95 = scmp.ne.s32.totalorder %s87, %s89
    %p96 = scmp.eq.s32.totalorder %s18, 1
    %p97 = por %p95, %p96
    %p98 = scmp.ne.s32.totalorder %s89, %s90
    %p99 = scmp.eq.s32.totalorder %s18, 0
    %p100 = por %p98, %p99
    %p101 = scmp.ne.s32.totalorder %s89, %s90
    %p102 = scmp.eq.s32.totalorder %s19, 1
    %p103 = por %p101, %p102
    %p105 = scmp.ne.s32.totalorder %s90, %s104
    %p106 = scmp.eq.s32.totalorder %s19, 0
    %p107 = por %p105, %p106
    %s109 = sadd.s32 %s108, 1
    %p112 = scmp.eq.s32.totalorder %s13, 1
    %p113 = scmp.ne.s32.totalorder %s108, %s110
    %p114 = scmp.eq.s32.totalorder %s13, 0
    %p115 = por %p113, %p114
    %p116 = scmp.ne.s32.totalorder %s108, %s110
    %p117 = scmp.eq.s32.totalorder %s18, 1
    %p118 = por %p116, %p117
    %p119 = scmp.ne.s32.totalorder %s110, %s111
    %p120 = scmp.eq.s32.totalorder %s18, 0
    %p121 = por %p119, %p120
    %p122 = scmp.ne.s32.totalorder %s110, %s111
    %p123 = scmp.eq.s32.totalorder %s19, 1
    %p124 = por %p122, %p123
    %p126 = scmp.ne.s32.totalorder %s111, %s125
    %p127 = scmp.eq.s32.totalorder %s19, 0
    %p128 = por %p126, %p127
    %s130 = sadd.s32 %s129, 1
    %p133 = scmp.eq.s32.totalorder %s13, 1
    %p134 = scmp.ne.s32.totalorder %s129, %s131
    %p135 = scmp.eq.s32.totalorder %s13, 0
    %p136 = por %p134, %p135
    %p137 = scmp.ne.s32.totalorder %s129, %s131
    %p138 = scmp.eq.s32.totalorder %s18, 1
    %p139 = por %p137, %p138
    %p140 = scmp.ne.s32.totalorder %s131, %s132
    %p141 = scmp.eq.s32.totalorder %s18, 0
    %p142 = por %p140, %p141
    %p143 = scmp.ne.s32.totalorder %s131, %s132
    %p144 = scmp.eq.s32.totalorder %s19, 1
    %p145 = por %p143, %p144
    %p147 = scmp.ne.s32.totalorder %s132, %s146
    %p148 = scmp.eq.s32.totalorder %s19, 0
    %p149 = por %p147, %p148
    %s151 = sadd.s32 %s150, 1
    %p154 = scmp.eq.s32.totalorder %s13, 1
    %p155 = scmp.ne.s32.totalorder %s150, %s152
    %p156 = scmp.eq.s32.totalorder %s13, 0
    %p157 = por %p155, %p156
    %p158 = scmp.ne.s32.totalorder %s150, %s152
    %p159 = scmp.eq.s32.totalorder %s18, 1
    %p160 = por %p158, %p159
    %p161 = scmp.ne.s32.totalorder %s152, %s153
    %p162 = scmp.eq.s32.totalorder %s18, 0
    %p163 = por %p161, %p162
    %p164 = scmp.ne.s32.totalorder %s152, %s153
    %p165 = scmp.eq.s32.totalorder %s19, 1
    %p166 = por %p164, %p165
    %p168 = scmp.ne.s32.totalorder %s153, %s167
    %p169 = scmp.eq.s32.totalorder %s19, 0
    %p170 = por %p168, %p169
    %s172 = sadd.s32 %s171, 1
    %p175 = scmp.eq.s32.totalorder %s13, 1
    %p176 = scmp.ne.s32.totalorder %s171, %s173
    %p177 = scmp.eq.s32.totalorder %s13, 0
    %p178 = por %p176, %p177
    %p179 = scmp.ne.s32.totalorder %s171, %s173
    %p180 = scmp.eq.s32.totalorder %s18, 1
    %p181 = por %p179, %p180
    %p182 = scmp.ne.s32.totalorder %s173, %s174
    %p183 = scmp.eq.s32.totalorder %s18, 0
    %p184 = por %p182, %p183
    %p185 = scmp.ne.s32.totalorder %s173, %s174
    %p186 = scmp.eq.s32.totalorder %s19, 1
    %p187 = por %p185, %p186
    %p189 = scmp.ne.s32.totalorder %s174, %s188
    %p190 = scmp.eq.s32.totalorder %s19, 0
    %p191 = por %p189, %p190
    %s192 = ssub.s32 %s20, %s32
    %s193 = ssub.s32 %s21, %s28
    %s194 = sor.u32 %s192, %s193
    %p195 = scmp.eq.s32.totalorder %s194, 0
    %s197 = sadd.s32 %s196, 1
    %s198 = scalar_select %p195, %s196, %s197
    %p201 = pneg %p195
    %p202 = scmp.eq.s32.totalorder %s13, 1
    %p203 = por %p201, %p202
    %p204 = scmp.ne.s32.totalorder %s196, %s199
    %p205 = scmp.eq.s32.totalorder %s13, 0
    %p206 = por %p204, %p205
    %p207 = scmp.ne.s32.totalorder %s196, %s199
    %p208 = scmp.eq.s32.totalorder %s18, 1
    %p209 = por %p207, %p208
    %p210 = scmp.ne.s32.totalorder %s199, %s200
    %p211 = scmp.eq.s32.totalorder %s18, 0
    %p212 = por %p210, %p211
    %p213 = scmp.ne.s32.totalorder %s199, %s200
    %p214 = scmp.eq.s32.totalorder %s19, 1
    %p215 = por %p213, %p214
    %p217 = scmp.ne.s32.totalorder %s200, %s216
    %p218 = scmp.eq.s32.totalorder %s19, 0
    %p219 = por %p217, %p218
    %p220 = scmp.le.s32.totalorder 1, %s13
    %p221 = scmp.lt.s32.totalorder %s13, 3
    %p222 = pnand %p220, %p221
    %p223 = pneg %p222
    // Predicated region
    $region9: #{tpu_custom_call.1} parent=5 // pred_check
      _
    $region10: #{tpu_custom_call.1} parent=5 // pred_check_branch
      %225 = sbr.rel (%p222) target = $region12
    $region11: #{tpu_custom_call.1} parent=5 // pred_region
      %s226 = ssub.s32 %s13, 1
      // Predicated region
      $region13: #{tpu_custom_call.1} parent=11 // pred_check
        %p227 = pneg %p100
      $region14: #{tpu_custom_call.1} parent=11 // pred_check_branch
        %229 = sbr.rel (%p227) target = $region16
      $region15: #{tpu_custom_call.1} parent=11 // pred_region
        _
      $region16: #{tpu_custom_call.1} parent=11 // pred_fallthru
        _
      // Predicated region
      $region17: #{tpu_custom_call.1} parent=11 // pred_check
        %p230 = pneg %p121
      $region18: #{tpu_custom_call.1} parent=11 // pred_check_branch
        %232 = sbr.rel (%p230) target = $region20
      $region19: #{tpu_custom_call.1} parent=11 // pred_region
        _
      $region20: #{tpu_custom_call.1} parent=11 // pred_fallthru
        _
      // Predicated region
      $region21: #{tpu_custom_call.1} parent=11 // pred_check
        %p233 = pneg %p142
      $region22: #{tpu_custom_call.1} parent=11 // pred_check_branch
        %235 = sbr.rel (%p233) target = $region24
      $region23: #{tpu_custom_call.1} parent=11 // pred_region
        _
      $region24: #{tpu_custom_call.1} parent=11 // pred_fallthru
        _
      // Predicated region
      $region25: #{tpu_custom_call.1} parent=11 // pred_check
        %p236 = pneg %p163
      $region26: #{tpu_custom_call.1} parent=11 // pred_check_branch
        %238 = sbr.rel (%p236) target = $region28
      $region27: #{tpu_custom_call.1} parent=11 // pred_region
        _
      $region28: #{tpu_custom_call.1} parent=11 // pred_fallthru
        _
      // Predicated region
      $region29: #{tpu_custom_call.1} parent=11 // pred_check
        %p239 = pneg %p184
      $region30: #{tpu_custom_call.1} parent=11 // pred_check_branch
        %241 = sbr.rel (%p239) target = $region32
      $region31: #{tpu_custom_call.1} parent=11 // pred_region
        _
      $region32: #{tpu_custom_call.1} parent=11 // pred_fallthru
        _
    $region12: #{tpu_custom_call.1} parent=5 // pred_fallthru
      _
    %p242 = scmp.lt.s32.totalorder %s13, 2
    // Predicated region
    $region33: #{tpu_custom_call.1} parent=5 // pred_check
      %p243 = pneg %p242
    $region34: #{tpu_custom_call.1} parent=5 // pred_check_branch
      %245 = sbr.rel (%p243) target = $region36
    $region35: #{tpu_custom_call.1} parent=5 // pred_region
      // Predicated region
      $region37: #{tpu_custom_call.1} parent=35 // pred_check
        %p246 = pneg %p47
      $region38: #{tpu_custom_call.1} parent=35 // pred_check_branch
        %248 = sbr.rel (%p246) target = $region40
      $region39: #{tpu_custom_call.1} parent=35 // pred_region
        %s249 = smul.u32 8, %s21
        %p250 = scmp.lt.s32.totalorder %s20, 1
        %s251 = scalar_select %p250, %s20, 1
        %p252 = scmp.lt.s32.totalorder %s249, 7
        %s253 = scalar_select %p252, %s249, 7
        %s254 = smul.addr %s251, 8
        %s255 = sadd.s32 %s253, %s254
        %s256 = smul.addr %s255, 4
        %s257 = scalar_lea.vmem %s0, %s256
        %s258 = smul.u32 8, %s21
      $region40: #{tpu_custom_call.1} parent=35 // pred_fallthru
        _
      // Predicated region
      $region41: #{tpu_custom_call.1} parent=35 // pred_check
        %p259 = pneg %p73
      $region42: #{tpu_custom_call.1} parent=35 // pred_check_branch
        %261 = sbr.rel (%p259) target = $region44
      $region43: #{tpu_custom_call.1} parent=35 // pred_region
        %p262 = scmp.lt.s32.totalorder %s20, 1
        %s263 = scalar_select %p262, %s20, 1
        %s264 = smul.addr %s263, 4
        %s265 = scalar_lea.vmem %s1, %s264
      $region44: #{tpu_custom_call.1} parent=35 // pred_fallthru
        _
    $region36: #{tpu_custom_call.1} parent=5 // pred_fallthru
      _
    %p266 = scmp.le.s32.totalorder 1, %s13
    %p267 = scmp.lt.s32.totalorder %s13, 3
    %p268 = pnand %p266, %p267
    %p269 = pneg %p268
    // Predicated region
    $region45: #{tpu_custom_call.1} parent=5 // pred_check
      _
    $region46: #{tpu_custom_call.1} parent=5 // pred_check_branch
      %271 = sbr.rel (%p268) target = $region48
    $region47: #{tpu_custom_call.1} parent=5 // pred_region
      %s272 = ssub.s32 %s13, 1
      %s273 = smul.u32 8, %s23
      %p274 = scmp.lt.s32.totalorder %s22, 1
      %s275 = scalar_select %p274, %s22, 1
      %p276 = scmp.lt.s32.totalorder %s273, 7
      %s277 = scalar_select %p276, %s273, 7
      %s278 = smul.addr %s275, 8
      %s279 = sadd.s32 %s277, %s278
      %s280 = smul.addr %s279, 4
      %s281 = scalar_lea.vmem %s0, %s280
      %p282 = pneg %p53
      %p283 = pneg %p50
      %p284 = scmp.lt.s32.totalorder %s22, 1
      %s285 = scalar_select %p284, %s22, 1
      %s286 = smul.addr %s285, 4
      %s287 = scalar_lea.vmem %s1, %s286
      %p288 = pneg %p79
      %p289 = pneg %p76
      %p290 = pneg %p100
      %p291 = pneg %p97
      %p292 = pneg %p121
      %p293 = pneg %p118
      %p294 = pneg %p142
      %p295 = pneg %p139
      %p296 = pneg %p163
      %p297 = pneg %p160
      %p298 = pneg %p184
      %p299 = pneg %p181
      %p300 = pneg %p212
      %p301 = pneg %p209
      %s302 = smul.u32 8, %s23
      %p303 = scmp.lt.s32.totalorder %s22, 1
      %s304 = scalar_select %p303, %s22, 1
      %p305 = scmp.lt.s32.totalorder %s302, 7
      %s306 = scalar_select %p305, %s302, 7
      %s307 = smul.addr %s304, 8
      %s308 = sadd.s32 %s306, %s307
      %s309 = smul.addr %s308, 8
      %s310 = scalar_lea.vmem %s7, %s309
      %s311 = smul.u32 8, %s23
      %p312 = scmp.lt.s32.totalorder %s22, 1
      %s313 = scalar_select %p312, %s22, 1
      %p314 = scmp.lt.s32.totalorder %s311, 7
      %s315 = scalar_select %p314, %s311, 7
      %s316 = smul.addr %s313, 8
      %s317 = sadd.s32 %s315, %s316
      %s318 = smul.addr %s317, 4
      %s319 = scalar_lea.vmem %s0, %s318
      %s320 = smul.u32 8, %s23
      %p321 = scmp.lt.s32.totalorder %s22, 1
      %s322 = scalar_select %p321, %s22, 1
      %s323 = smul.addr %s322, 4
      %s324 = scalar_lea.vmem %s1, %s323
      %s325 = smul.u32 8, %s23
      %p326 = scmp.lt.s32.totalorder %s22, 1
      %s327 = scalar_select %p326, %s22, 1
      %p328 = scmp.lt.s32.totalorder %s325, 7
      %s329 = scalar_select %p328, %s325, 7
      %s330 = smul.addr %s327, 8
      %s331 = sadd.s32 %s329, %s330
      %s332 = smul.addr %s331, 8
      %s333 = scalar_lea.vmem %s7, %s332
      %s334 = smul.u32 8, %s23
      %p336 = scmp.eq.s32.totalorder %s23, 0
      // Predicated region
      $region49: #{tpu_custom_call.1} parent=47 // pred_check
        %p337 = pneg %p336
      $region50: #{tpu_custom_call.1} parent=47 // pred_check_branch
        %339 = sbr.rel (%p337) target = $region52
      $region51: #{tpu_custom_call.1} parent=47 // pred_region
        %v340 = vld [vmem:[%s324] sm:$0xf]
        %v341 = vld [vmem:[%s3] sm:$0xf]
        %v342 = vld [vmem:[%s3 + $0x4] sm:$0xf]
        %v343 = vld [vmem:[%s3 + $0x8] sm:$0xf]
        %v344 = vld [vmem:[%s3 + $0xc] sm:$0xf]
        %v345 = vld [vmem:[%s3 + $0x10] sm:$0xf]
        %v346 = vld [vmem:[%s3 + $0x14] sm:$0xf]
        %v347 = vld [vmem:[%s3 + $0x18] sm:$0xf]
        %v348 = vld [vmem:[%s3 + $0x1c] sm:$0xf]
        %v357 = vunpack.c.l.b16 %v341
        %v358 = vunpack.c.l.b16 %v342
        %v359 = vunpack.c.l.b16 %v343
        %v360 = vunpack.c.l.b16 %v344
        %v361 = vunpack.c.l.b16 %v345
        %v362 = vunpack.c.l.b16 %v346
        %v363 = vunpack.c.l.b16 %v347
        %v364 = vunpack.c.l.b16 %v348
        %v365 = vpack.c.b16 %v358, %v357
        %v366 = vpack.c.b16 %v360, %v359
        %v367 = vpack.c.b16 %v362, %v361
        %v368 = vpack.c.b16 %v364, %v363
        %vm373 = vcmask 523264
        %v375 = vsel %vm373, %v340, 0
        %377 = vmatprep.subr.bf16.mxu0 0
        %378 = vmatpush1.bf16.msra.mxu0 %v365
        %379 = vmatprep.subr.bf16.mxu0 0
        %380 = vmatpush1.bf16.msra.mxu0 %v366
        %381 = vmatprep.subr.bf16.mxu0 0
        %382 = vmatpush1.bf16.msra.mxu0 %v367
        %383 = vmatprep.subr.bf16.mxu0 0
        %384 = vmatpush1.bf16.msra.mxu0 %v368
        %385 = vmatprep.subr.bf16.mxu0 0
        %386 = vmatpush1.bf16.msra.mxu0 0
        %387 = vmatprep.subr.bf16.mxu0 0
        %388 = vmatpush1.bf16.msra.mxu0 0
        %389 = vmatprep.subr.bf16.mxu0 0
        %390 = vmatpush1.bf16.msra.mxu0 0
        %391 = vmatprep.subr.bf16.mxu0 0
        %392 = vmatpush1.bf16.msra.mxu0 0
        %393 = vmatprep.subr.bf16.mxu0 0
        %394 = vmatpush1.bf16.msra.mxu0 0
        %395 = vmatprep.subr.bf16.mxu0 0
        %396 = vmatpush1.bf16.msra.mxu0 0
        %397 = vmatprep.subr.bf16.mxu0 0
        %398 = vmatpush1.bf16.msra.mxu0 0
        %399 = vmatprep.subr.bf16.mxu0 0
        %400 = vmatpush1.bf16.msra.mxu0 0
        %401 = vmatprep.subr.bf16.mxu0 0
        %402 = vmatpush1.bf16.msra.mxu0 0
        %403 = vmatprep.subr.bf16.mxu0 0
        %404 = vmatpush1.bf16.msra.mxu0 0
        %405 = vmatprep.subr.bf16.mxu0 0
        %406 = vmatpush1.bf16.msra.mxu0 0
        %407 = vmatprep.subr.bf16.mxu0 0
        %408 = vmatpush1.bf16.msra.mxu0 0
        %409 = vmatprep.mubr.bf16.mxu0 0
        %410 = vmatmul.mubr.bf16.gmra.mrb[0].mxu0 %v375
        %v411 = vpop.f32.mrb[0].mxu0
        %v412 = vadd.f32 0.0, %v411
        %v413 = vpop.f32.mrb[0].mxu0
        %v414 = vpop.f32.mrb[0].mxu0
        %v415 = vpop.f32.mrb[0].mxu0
        %416 = vdwg.mxu0
        %v417 = vpack.c.bf16 %v412, %v412
        %vm418 = vcmask 125952
        %419 = vst.msk [vmem:[#allocation2] sm:$0xf] %vm418, %v417
        %v420 = vld [vmem:[%s4] sm:$0xf]
        %v421 = vld [vmem:[%s4 + $0x4] sm:$0xf]
        %v422 = vld [vmem:[%s4 + $0x8] sm:$0xf]
        %v423 = vld [vmem:[%s4 + $0xc] sm:$0xf]
        %v424 = vld [vmem:[%s4 + $0x10] sm:$0xf]
        %v425 = vld [vmem:[%s4 + $0x14] sm:$0xf]
        %v426 = vld [vmem:[%s4 + $0x18] sm:$0xf]
        %v427 = vld [vmem:[%s4 + $0x1c] sm:$0xf]
        %v436 = vunpack.c.l.b16 %v420
        %v437 = vunpack.c.l.b16 %v421
        %v438 = vunpack.c.l.b16 %v422
        %v439 = vunpack.c.l.b16 %v423
        %v440 = vunpack.c.l.b16 %v424
        %v441 = vunpack.c.l.b16 %v425
        %v442 = vunpack.c.l.b16 %v426
        %v443 = vunpack.c.l.b16 %v427
        %v444 = vpack.c.b16 %v437, %v436
        %v445 = vpack.c.b16 %v439, %v438
        %v446 = vpack.c.b16 %v441, %v440
        %v447 = vpack.c.b16 %v443, %v442
        %452 = vmatprep.subr.bf16.mxu0 0
        %453 = vmatpush1.bf16.msra.mxu0 %v444
        %454 = vmatprep.subr.bf16.mxu0 0
        %455 = vmatpush1.bf16.msra.mxu0 %v445
        %456 = vmatprep.subr.bf16.mxu0 0
        %457 = vmatpush1.bf16.msra.mxu0 %v446
        %458 = vmatprep.subr.bf16.mxu0 0
        %459 = vmatpush1.bf16.msra.mxu0 %v447
        %460 = vmatprep.subr.bf16.mxu0 0
        %461 = vmatpush1.bf16.msra.mxu0 0
        %462 = vmatprep.subr.bf16.mxu0 0
        %463 = vmatpush1.bf16.msra.mxu0 0
        %464 = vmatprep.subr.bf16.mxu0 0
        %465 = vmatpush1.bf16.msra.mxu0 0
        %466 = vmatprep.subr.bf16.mxu0 0
        %467 = vmatpush1.bf16.msra.mxu0 0
        %468 = vmatprep.subr.bf16.mxu0 0
        %469 = vmatpush1.bf16.msra.mxu0 0
        %470 = vmatprep.subr.bf16.mxu0 0
        %471 = vmatpush1.bf16.msra.mxu0 0
        %472 = vmatprep.subr.bf16.mxu0 0
        %473 = vmatpush1.bf16.msra.mxu0 0
        %474 = vmatprep.subr.bf16.mxu0 0
        %475 = vmatpush1.bf16.msra.mxu0 0
        %476 = vmatprep.subr.bf16.mxu0 0
        %477 = vmatpush1.bf16.msra.mxu0 0
        %478 = vmatprep.subr.bf16.mxu0 0
        %479 = vmatpush1.bf16.msra.mxu0 0
        %480 = vmatprep.subr.bf16.mxu0 0
        %481 = vmatpush1.bf16.msra.mxu0 0
        %482 = vmatprep.subr.bf16.mxu0 0
        %483 = vmatpush1.bf16.msra.mxu0 0
        %484 = vmatprep.mubr.bf16.mxu0 0
        %485 = vmatmul.mubr.bf16.gmra.mrb[0].mxu0 %v375
        %v486 = vpop.f32.mrb[0].mxu0
        %v487 = vadd.f32 0.0, %v486
        %v488 = vpop.f32.mrb[0].mxu0
        %v489 = vpop.f32.mrb[0].mxu0
        %v490 = vpop.f32.mrb[0].mxu0
        %491 = vdwg.mxu0
        %v492 = vpack.c.bf16 %v487, %v487
        %493 = vst.msk [vmem:[#allocation3] sm:$0xf] %vm418, %v492
        %s494 = scalar_lea.vmem %s3, 32
        %v495 = vld [vmem:[%s494] sm:$0xf]
        %v496 = vld [vmem:[%s494 + $0x4] sm:$0xf]
        %v497 = vld [vmem:[%s494 + $0x8] sm:$0xf]
        %v498 = vld [vmem:[%s494 + $0xc] sm:$0xf]
        %v499 = vld [vmem:[%s494 + $0x10] sm:$0xf]
        %v500 = vld [vmem:[%s494 + $0x14] sm:$0xf]
        %v501 = vld [vmem:[%s494 + $0x18] sm:$0xf]
        %v502 = vld [vmem:[%s494 + $0x1c] sm:$0xf]
        %v511 = vunpack.c.l.b16 %v495
        %v512 = vunpack.c.l.b16 %v496
        %v513 = vunpack.c.l.b16 %v497
        %v514 = vunpack.c.l.b16 %v498
        %v515 = vunpack.c.l.b16 %v499
        %v516 = vunpack.c.l.b16 %v500
        %v517 = vunpack.c.l.b16 %v501
        %v518 = vunpack.c.l.b16 %v502
        %v519 = vpack.c.b16 %v512, %v511
        %v520 = vpack.c.b16 %v514, %v513
        %v521 = vpack.c.b16 %v516, %v515
        %v522 = vpack.c.b16 %v518, %v517
        %527 = vmatprep.subr.bf16.mxu0 0
        %528 = vmatpush1.bf16.msra.mxu0 %v519
        %529 = vmatprep.subr.bf16.mxu0 0
        %530 = vmatpush1.bf16.msra.mxu0 %v520
        %531 = vmatprep.subr.bf16.mxu0 0
        %532 = vmatpush1.bf16.msra.mxu0 %v521
        %533 = vmatprep.subr.bf16.mxu0 0
        %534 = vmatpush1.bf16.msra.mxu0 %v522
        %535 = vmatprep.subr.bf16.mxu0 0
        %536 = vmatpush1.bf16.msra.mxu0 0
        %537 = vmatprep.subr.bf16.mxu0 0
        %538 = vmatpush1.bf16.msra.mxu0 0
        %539 = vmatprep.subr.bf16.mxu0 0
        %540 = vmatpush1.bf16.msra.mxu0 0
        %541 = vmatprep.subr.bf16.mxu0 0
        %542 = vmatpush1.bf16.msra.mxu0 0
        %543 = vmatprep.subr.bf16.mxu0 0
        %544 = vmatpush1.bf16.msra.mxu0 0
        %545 = vmatprep.subr.bf16.mxu0 0
        %546 = vmatpush1.bf16.msra.mxu0 0
        %547 = vmatprep.subr.bf16.mxu0 0
        %548 = vmatpush1.bf16.msra.mxu0 0
        %549 = vmatprep.subr.bf16.mxu0 0
        %550 = vmatpush1.bf16.msra.mxu0 0
        %551 = vmatprep.subr.bf16.mxu0 0
        %552 = vmatpush1.bf16.msra.mxu0 0
        %553 = vmatprep.subr.bf16.mxu0 0
        %554 = vmatpush1.bf16.msra.mxu0 0
        %555 = vmatprep.subr.bf16.mxu0 0
        %556 = vmatpush1.bf16.msra.mxu0 0
        %557 = vmatprep.subr.bf16.mxu0 0
        %558 = vmatpush1.bf16.msra.mxu0 0
        %559 = vmatprep.mubr.bf16.mxu0 0
        %560 = vmatmul.mubr.bf16.gmra.mrb[0].mxu0 %v375
        %v561 = vpop.f32.mrb[0].mxu0
        %v562 = vadd.f32 0.0, %v561
        %v563 = vpop.f32.mrb[0].mxu0
        %v564 = vpop.f32.mrb[0].mxu0
        %v565 = vpop.f32.mrb[0].mxu0
        %566 = vdwg.mxu0
        %v567 = vpack.c.bf16 %v562, %v562
        %s568 = scalar_lea.vmem [#allocation2], 4
        %569 = vst.msk [vmem:[%s568] sm:$0xf] %vm418, %v567
        %s570 = scalar_lea.vmem %s4, 32
        %v571 = vld [vmem:[%s570] sm:$0xf]
        %v572 = vld [vmem:[%s570 + $0x4] sm:$0xf]
        %v573 = vld [vmem:[%s570 + $0x8] sm:$0xf]
        %v574 = vld [vmem:[%s570 + $0xc] sm:$0xf]
        %v575 = vld [vmem:[%s570 + $0x10] sm:$0xf]
        %v576 = vld [vmem:[%s570 + $0x14] sm:$0xf]
        %v577 = vld [vmem:[%s570 + $0x18] sm:$0xf]
        %v578 = vld [vmem:[%s570 + $0x1c] sm:$0xf]
        %v587 = vunpack.c.l.b16 %v571
        %v588 = vunpack.c.l.b16 %v572
        %v589 = vunpack.c.l.b16 %v573
        %v590 = vunpack.c.l.b16 %v574
        %v591 = vunpack.c.l.b16 %v575
        %v592 = vunpack.c.l.b16 %v576
        %v593 = vunpack.c.l.b16 %v577
        %v594 = vunpack.c.l.b16 %v578
        %v595 = vpack.c.b16 %v588, %v587
        %v596 = vpack.c.b16 %v590, %v589
        %v597 = vpack.c.b16 %v592, %v591
        %v598 = vpack.c.b16 %v594, %v593
        %603 = vmatprep.subr.bf16.mxu0 0
        %604 = vmatpush1.bf16.msra.mxu0 %v595
        %605 = vmatprep.subr.bf16.mxu0 0
        %606 = vmatpush1.bf16.msra.mxu0 %v596
        %607 = vmatprep.subr.bf16.mxu0 0
        %608 = vmatpush1.bf16.msra.mxu0 %v597
        %609 = vmatprep.subr.bf16.mxu0 0
        %610 = vmatpush1.bf16.msra.mxu0 %v598
        %611 = vmatprep.subr.bf16.mxu0 0
        %612 = vmatpush1.bf16.msra.mxu0 0
        %613 = vmatprep.subr.bf16.mxu0 0
        %614 = vmatpush1.bf16.msra.mxu0 0
        %615 = vmatprep.subr.bf16.mxu0 0
        %616 = vmatpush1.bf16.msra.mxu0 0
        %617 = vmatprep.subr.bf16.mxu0 0
        %618 = vmatpush1.bf16.msra.mxu0 0
        %619 = vmatprep.subr.bf16.mxu0 0
        %620 = vmatpush1.bf16.msra.mxu0 0
        %621 = vmatprep.subr.bf16.mxu0 0
        %622 = vmatpush1.bf16.msra.mxu0 0
        %623 = vmatprep.subr.bf16.mxu0 0
        %624 = vmatpush1.bf16.msra.mxu0 0
        %625 = vmatprep.subr.bf16.mxu0 0
        %626 = vmatpush1.bf16.msra.mxu0 0
        %627 = vmatprep.subr.bf16.mxu0 0
        %628 = vmatpush1.bf16.msra.mxu0 0
        %629 = vmatprep.subr.bf16.mxu0 0
        %630 = vmatpush1.bf16.msra.mxu0 0
        %631 = vmatprep.subr.bf16.mxu0 0
        %632 = vmatpush1.bf16.msra.mxu0 0
        %633 = vmatprep.subr.bf16.mxu0 0
        %634 = vmatpush1.bf16.msra.mxu0 0
        %635 = vmatprep.mubr.bf16.mxu0 0
        %636 = vmatmul.mubr.bf16.gmra.mrb[0].mxu0 %v375
        %v637 = vpop.f32.mrb[0].mxu0
        %v638 = vadd.f32 0.0, %v637
        %v639 = vpop.f32.mrb[0].mxu0
        %v640 = vpop.f32.mrb[0].mxu0
        %v641 = vpop.f32.mrb[0].mxu0
        %642 = vdwg.mxu0
        %v643 = vpack.c.bf16 %v638, %v638
        %s644 = scalar_lea.vmem [#allocation3], 4
        %645 = vst.msk [vmem:[%s644] sm:$0xf] %vm418, %v643
        %s646 = scalar_lea.vmem %s3, 64
        %v647 = vld [vmem:[%s646] sm:$0xf]
        %v648 = vld [vmem:[%s646 + $0x4] sm:$0xf]
        %v649 = vld [vmem:[%s646 + $0x8] sm:$0xf]
        %v650 = vld [vmem:[%s646 + $0xc] sm:$0xf]
        %v651 = vld [vmem:[%s646 + $0x10] sm:$0xf]
        %v652 = vld [vmem:[%s646 + $0x14] sm:$0xf]
        %v653 = vld [vmem:[%s646 + $0x18] sm:$0xf]
        %v654 = vld [vmem:[%s646 + $0x1c] sm:$0xf]
        %v663 = vunpack.c.l.b16 %v647
        %v664 = vunpack.c.l.b16 %v648
        %v665 = vunpack.c.l.b16 %v649
        %v666 = vunpack.c.l.b16 %v650
        %v667 = vunpack.c.l.b16 %v651
        %v668 = vunpack.c.l.b16 %v652
        %v669 = vunpack.c.l.b16 %v653
        %v670 = vunpack.c.l.b16 %v654
        %v671 = vpack.c.b16 %v664, %v663
        %v672 = vpack.c.b16 %v666, %v665
        %v673 = vpack.c.b16 %v668, %v667
        %v674 = vpack.c.b16 %v670, %v669
        %679 = vmatprep.subr.bf16.mxu0 0
        %680 = vmatpush1.bf16.msra.mxu0 %v671
        %681 = vmatprep.subr.bf16.mxu0 0
        %682 = vmatpush1.bf16.msra.mxu0 %v672
        %683 = vmatprep.subr.bf16.mxu0 0
        %684 = vmatpush1.bf16.msra.mxu0 %v673
        %685 = vmatprep.subr.bf16.mxu0 0
        %686 = vmatpush1.bf16.msra.mxu0 %v674
        %687 = vmatprep.subr.bf16.mxu0 0
        %688 = vmatpush1.bf16.msra.mxu0 0
        %689 = vmatprep.subr.bf16.mxu0 0
        %690 = vmatpush1.bf16.msra.mxu0 0
        %691 = vmatprep.subr.bf16.mxu0 0
        %692 = vmatpush1.bf16.msra.mxu0 0
        %693 = vmatprep.subr.bf16.mxu0 0
        %694 = vmatpush1.bf16.msra.mxu0 0
        %695 = vmatprep.subr.bf16.mxu0 0
        %696 = vmatpush1.bf16.msra.mxu0 0
        %697 = vmatprep.subr.bf16.mxu0 0
        %698 = vmatpush1.bf16.msra.mxu0 0
        %699 = vmatprep.subr.bf16.mxu0 0
        %700 = vmatpush1.bf16.msra.mxu0 0
        %701 = vmatprep.subr.bf16.mxu0 0
        %702 = vmatpush1.bf16.msra.mxu0 0
        %703 = vmatprep.subr.bf16.mxu0 0
        %704 = vmatpush1.bf16.msra.mxu0 0
        %705 = vmatprep.subr.bf16.mxu0 0
        %706 = vmatpush1.bf16.msra.mxu0 0
        %707 = vmatprep.subr.bf16.mxu0 0
        %708 = vmatpush1.bf16.msra.mxu0 0
        %709 = vmatprep.subr.bf16.mxu0 0
        %710 = vmatpush1.bf16.msra.mxu0 0
        %711 = vmatprep.mubr.bf16.mxu0 0
        %712 = vmatmul.mubr.bf16.gmra.mrb[0].mxu0 %v375
        %v713 = vpop.f32.mrb[0].mxu0
        %v714 = vadd.f32 0.0, %v713
        %v715 = vpop.f32.mrb[0].mxu0
        %v716 = vpop.f32.mrb[0].mxu0
        %v717 = vpop.f32.mrb[0].mxu0
        %718 = vdwg.mxu0
        %v719 = vpack.c.bf16 %v714, %v714
        %s720 = scalar_lea.vmem [#allocation2], 8
        %721 = vst.msk [vmem:[%s720] sm:$0xf] %vm418, %v719
        %s722 = scalar_lea.vmem %s4, 64
        %v723 = vld [vmem:[%s722] sm:$0xf]
        %v724 = vld [vmem:[%s722 + $0x4] sm:$0xf]
        %v725 = vld [vmem:[%s722 + $0x8] sm:$0xf]
        %v726 = vld [vmem:[%s722 + $0xc] sm:$0xf]
        %v727 = vld [vmem:[%s722 + $0x10] sm:$0xf]
        %v728 = vld [vmem:[%s722 + $0x14] sm:$0xf]
        %v729 = vld [vmem:[%s722 + $0x18] sm:$0xf]
        %v730 = vld [vmem:[%s722 + $0x1c] sm:$0xf]
        %v739 = vunpack.c.l.b16 %v723
        %v740 = vunpack.c.l.b16 %v724
        %v741 = vunpack.c.l.b16 %v725
        %v742 = vunpack.c.l.b16 %v726
        %v743 = vunpack.c.l.b16 %v727
        %v744 = vunpack.c.l.b16 %v728
        %v745 = vunpack.c.l.b16 %v729
        %v746 = vunpack.c.l.b16 %v730
        %v747 = vpack.c.b16 %v740, %v739
        %v748 = vpack.c.b16 %v742, %v741
        %v749 = vpack.c.b16 %v744, %v743
        %v750 = vpack.c.b16 %v746, %v745
        %755 = vmatprep.subr.bf16.mxu0 0
        %756 = vmatpush1.bf16.msra.mxu0 %v747
        %757 = vmatprep.subr.bf16.mxu0 0
        %758 = vmatpush1.bf16.msra.mxu0 %v748
        %759 = vmatprep.subr.bf16.mxu0 0
        %760 = vmatpush1.bf16.msra.mxu0 %v749
        %761 = vmatprep.subr.bf16.mxu0 0
        %762 = vmatpush1.bf16.msra.mxu0 %v750
        %763 = vmatprep.subr.bf16.mxu0 0
        %764 = vmatpush1.bf16.msra.mxu0 0
        %765 = vmatprep.subr.bf16.mxu0 0
        %766 = vmatpush1.bf16.msra.mxu0 0
        %767 = vmatprep.subr.bf16.mxu0 0
        %768 = vmatpush1.bf16.msra.mxu0 0
        %769 = vmatprep.subr.bf16.mxu0 0
        %770 = vmatpush1.bf16.msra.mxu0 0
        %771 = vmatprep.subr.bf16.mxu0 0
        %772 = vmatpush1.bf16.msra.mxu0 0
        %773 = vmatprep.subr.bf16.mxu0 0
        %774 = vmatpush1.bf16.msra.mxu0 0
        %775 = vmatprep.subr.bf16.mxu0 0
        %776 = vmatpush1.bf16.msra.mxu0 0
        %777 = vmatprep.subr.bf16.mxu0 0
        %778 = vmatpush1.bf16.msra.mxu0 0
        %779 = vmatprep.subr.bf16.mxu0 0
        %780 = vmatpush1.bf16.msra.mxu0 0
        %781 = vmatprep.subr.bf16.mxu0 0
        %782 = vmatpush1.bf16.msra.mxu0 0
        %783 = vmatprep.subr.bf16.mxu0 0
        %784 = vmatpush1.bf16.msra.mxu0 0
        %785 = vmatprep.subr.bf16.mxu0 0
        %786 = vmatpush1.bf16.msra.mxu0 0
        %787 = vmatprep.mubr.bf16.mxu0 0
        %788 = vmatmul.mubr.bf16.gmra.mrb[0].mxu0 %v375
        %v789 = vpop.f32.mrb[0].mxu0
        %v790 = vadd.f32 0.0, %v789
        %v791 = vpop.f32.mrb[0].mxu0
        %v792 = vpop.f32.mrb[0].mxu0
        %v793 = vpop.f32.mrb[0].mxu0
        %794 = vdwg.mxu0
        %v795 = vpack.c.bf16 %v790, %v790
        %s796 = scalar_lea.vmem [#allocation3], 8
        %797 = vst.msk [vmem:[%s796] sm:$0xf] %vm418, %v795
        %s798 = scalar_lea.vmem %s3, 96
        %v799 = vld [vmem:[%s798] sm:$0xf]
        %v800 = vld [vmem:[%s798 + $0x4] sm:$0xf]
        %v801 = vld [vmem:[%s798 + $0x8] sm:$0xf]
        %v802 = vld [vmem:[%s798 + $0xc] sm:$0xf]
        %v803 = vld [vmem:[%s798 + $0x10] sm:$0xf]
        %v804 = vld [vmem:[%s798 + $0x14] sm:$0xf]
        %v805 = vld [vmem:[%s798 + $0x18] sm:$0xf]
        %v806 = vld [vmem:[%s798 + $0x1c] sm:$0xf]
        %v815 = vunpack.c.l.b16 %v799
        %v816 = vunpack.c.l.b16 %v800
        %v817 = vunpack.c.l.b16 %v801
        %v818 = vunpack.c.l.b16 %v802
        %v819 = vunpack.c.l.b16 %v803
        %v820 = vunpack.c.l.b16 %v804
        %v821 = vunpack.c.l.b16 %v805
        %v822 = vunpack.c.l.b16 %v806
        %v823 = vpack.c.b16 %v816, %v815
        %v824 = vpack.c.b16 %v818, %v817
        %v825 = vpack.c.b16 %v820, %v819
        %v826 = vpack.c.b16 %v822, %v821
        %831 = vmatprep.subr.bf16.mxu0 0
        %832 = vmatpush1.bf16.msra.mxu0 %v823
        %833 = vmatprep.subr.bf16.mxu0 0
        %834 = vmatpush1.bf16.msra.mxu0 %v824
        %835 = vmatprep.subr.bf16.mxu0 0
        %836 = vmatpush1.bf16.msra.mxu0 %v825
        %837 = vmatprep.subr.bf16.mxu0 0
        %838 = vmatpush1.bf16.msra.mxu0 %v826
        %839 = vmatprep.subr.bf16.mxu0 0
        %840 = vmatpush1.bf16.msra.mxu0 0
        %841 = vmatprep.subr.bf16.mxu0 0
        %842 = vmatpush1.bf16.msra.mxu0 0
        %843 = vmatprep.subr.bf16.mxu0 0
        %844 = vmatpush1.bf16.msra.mxu0 0
        %845 = vmatprep.subr.bf16.mxu0 0
        %846 = vmatpush1.bf16.msra.mxu0 0
        %847 = vmatprep.subr.bf16.mxu0 0
        %848 = vmatpush1.bf16.msra.mxu0 0
        %849 = vmatprep.subr.bf16.mxu0 0
        %850 = vmatpush1.bf16.msra.mxu0 0
        %851 = vmatprep.subr.bf16.mxu0 0
        %852 = vmatpush1.bf16.msra.mxu0 0
        %853 = vmatprep.subr.bf16.mxu0 0
        %854 = vmatpush1.bf16.msra.mxu0 0
        %855 = vmatprep.subr.bf16.mxu0 0
        %856 = vmatpush1.bf16.msra.mxu0 0
        %857 = vmatprep.subr.bf16.mxu0 0
        %858 = vmatpush1.bf16.msra.mxu0 0
        %859 = vmatprep.subr.bf16.mxu0 0
        %860 = vmatpush1.bf16.msra.mxu0 0
        %861 = vmatprep.subr.bf16.mxu0 0
        %862 = vmatpush1.bf16.msra.mxu0 0
        %863 = vmatprep.mubr.bf16.mxu0 0
        %864 = vmatmul.mubr.bf16.gmra.mrb[0].mxu0 %v375
        %v865 = vpop.f32.mrb[0].mxu0
        %v866 = vadd.f32 0.0, %v865
        %v867 = vpop.f32.mrb[0].mxu0
        %v868 = vpop.f32.mrb[0].mxu0
        %v869 = vpop.f32.mrb[0].mxu0
        %870 = vdwg.mxu0
        %v871 = vpack.c.bf16 %v866, %v866
        %s872 = scalar_lea.vmem [#allocation2], 12
        %873 = vst.msk [vmem:[%s872] sm:$0xf] %vm418, %v871
        %s874 = scalar_lea.vmem %s4, 96
        %v875 = vld [vmem:[%s874] sm:$0xf]
        %v876 = vld [vmem:[%s874 + $0x4] sm:$0xf]
        %v877 = vld [vmem:[%s874 + $0x8] sm:$0xf]
        %v878 = vld [vmem:[%s874 + $0xc] sm:$0xf]
        %v879 = vld [vmem:[%s874 + $0x10] sm:$0xf]
        %v880 = vld [vmem:[%s874 + $0x14] sm:$0xf]
        %v881 = vld [vmem:[%s874 + $0x18] sm:$0xf]
        %v882 = vld [vmem:[%s874 + $0x1c] sm:$0xf]
        %v891 = vunpack.c.l.b16 %v875
        %v892 = vunpack.c.l.b16 %v876
        %v893 = vunpack.c.l.b16 %v877
        %v894 = vunpack.c.l.b16 %v878
        %v895 = vunpack.c.l.b16 %v879
        %v896 = vunpack.c.l.b16 %v880
        %v897 = vunpack.c.l.b16 %v881
        %v898 = vunpack.c.l.b16 %v882
        %v899 = vpack.c.b16 %v892, %v891
        %v900 = vpack.c.b16 %v894, %v893
        %v901 = vpack.c.b16 %v896, %v895
        %v902 = vpack.c.b16 %v898, %v897
        %907 = vmatprep.subr.bf16.mxu0 0
        %908 = vmatpush1.bf16.msra.mxu0 %v899
        %909 = vmatprep.subr.bf16.mxu0 0
        %910 = vmatpush1.bf16.msra.mxu0 %v900
        %911 = vmatprep.subr.bf16.mxu0 0
        %912 = vmatpush1.bf16.msra.mxu0 %v901
        %913 = vmatprep.subr.bf16.mxu0 0
        %914 = vmatpush1.bf16.msra.mxu0 %v902
        %915 = vmatprep.subr.bf16.mxu0 0
        %916 = vmatpush1.bf16.msra.mxu0 0
        %917 = vmatprep.subr.bf16.mxu0 0
        %918 = vmatpush1.bf16.msra.mxu0 0
        %919 = vmatprep.subr.bf16.mxu0 0
        %920 = vmatpush1.bf16.msra.mxu0 0
        %921 = vmatprep.subr.bf16.mxu0 0
        %922 = vmatpush1.bf16.msra.mxu0 0
        %923 = vmatprep.subr.bf16.mxu0 0
        %924 = vmatpush1.bf16.msra.mxu0 0
        %925 = vmatprep.subr.bf16.mxu0 0
        %926 = vmatpush1.bf16.msra.mxu0 0
        %927 = vmatprep.subr.bf16.mxu0 0
        %928 = vmatpush1.bf16.msra.mxu0 0
        %929 = vmatprep.subr.bf16.mxu0 0
        %930 = vmatpush1.bf16.msra.mxu0 0
        %931 = vmatprep.subr.bf16.mxu0 0
        %932 = vmatpush1.bf16.msra.mxu0 0
        %933 = vmatprep.subr.bf16.mxu0 0
        %934 = vmatpush1.bf16.msra.mxu0 0
        %935 = vmatprep.subr.bf16.mxu0 0
        %936 = vmatpush1.bf16.msra.mxu0 0
        %937 = vmatprep.subr.bf16.mxu0 0
        %938 = vmatpush1.bf16.msra.mxu0 0
        %939 = vmatprep.mubr.bf16.mxu0 0
        %940 = vmatmul.mubr.bf16.gmra.mrb[0].mxu0 %v375
        %v941 = vpop.f32.mrb[0].mxu0
        %v942 = vadd.f32 0.0, %v941
        %v943 = vpop.f32.mrb[0].mxu0
        %v944 = vpop.f32.mrb[0].mxu0
        %v945 = vpop.f32.mrb[0].mxu0
        %946 = vdwg.mxu0
        %v947 = vpack.c.bf16 %v942, %v942
        %s948 = scalar_lea.vmem [#allocation3], 12
        %949 = vst.msk [vmem:[%s948] sm:$0xf] %vm418, %v947
      $region52: #{tpu_custom_call.1} parent=47 // pred_fallthru
        _
      %v950 = vld [vmem:[%s319] sm:$0xf]
      %v951 = vld [vmem:[%s319 + $0x4] sm:$0xf]
      %v952 = vld [vmem:[%s319 + $0x8] sm:$0xf]
      %v953 = vld [vmem:[%s319 + $0xc] sm:$0xf]
      %v954 = vld [vmem:[%s319 + $0x10] sm:$0xf]
      %v955 = vld [vmem:[%s319 + $0x14] sm:$0xf]
      %v956 = vld [vmem:[%s319 + $0x18] sm:$0xf]
      %v957 = vld [vmem:[%s319 + $0x1c] sm:$0xf]
      %v958 = vld [vmem:[%s2] sm:$0xf]
      %v959 = vld [vmem:[%s2 + $0x4] sm:$0xf]
      %v960 = vld [vmem:[%s2 + $0x8] sm:$0xf]
      %v961 = vld [vmem:[%s2 + $0xc] sm:$0xf]
      %v970 = vunpack.c.l.b16 %v950
      %v971 = vunpack.c.l.b16 %v951
      %v972 = vunpack.c.l.b16 %v952
      %v973 = vunpack.c.l.b16 %v953
      %v974 = vunpack.c.l.b16 %v954
      %v975 = vunpack.c.l.b16 %v955
      %v976 = vunpack.c.l.b16 %v956
      %v977 = vunpack.c.l.b16 %v957
      %v978 = vpack.c.b16 %v971, %v970
      %v979 = vpack.c.b16 %v973, %v972
      %v980 = vpack.c.b16 %v975, %v974
      %v981 = vpack.c.b16 %v977, %v976
      %v986 = vunpack.c.l.b16 %v958
      %v987 = vunpack.c.l.b16 %v959
      %v988 = vunpack.c.l.b16 %v960
      %v989 = vunpack.c.l.b16 %v961
      %v990 = vpack.c.b16 %v987, %v986
      %v991 = vpack.c.b16 %v989, %v988
      %vm994 = vcmask 261120
      %v996 = vsel %vm994, %v978, 0
      %v999 = vsel %vm994, %v979, 0
      %v1002 = vsel %vm994, %v980, 0
      %v1005 = vsel %vm994, %v981, 0
      %1007 = vmatprep.subr.bf16.mxu0 0
      %1008 = vmatpush1.bf16.msra.mxu0 %v990
      %1009 = vmatprep.subr.bf16.mxu0 0
      %1010 = vmatpush1.bf16.msra.mxu0 %v991
      %1011 = vmatprep.subr.bf16.mxu0 0
      %1012 = vmatpush1.bf16.msra.mxu0 0
      %1013 = vmatprep.subr.bf16.mxu0 0
      %1014 = vmatpush1.bf16.msra.mxu0 0
      %1015 = vmatprep.subr.bf16.mxu0 0
      %1016 = vmatpush1.bf16.msra.mxu0 0
      %1017 = vmatprep.subr.bf16.mxu0 0
      %1018 = vmatpush1.bf16.msra.mxu0 0
      %1019 = vmatprep.subr.bf16.mxu0 0
      %1020 = vmatpush1.bf16.msra.mxu0 0
      %1021 = vmatprep.subr.bf16.mxu0 0
      %1022 = vmatpush1.bf16.msra.mxu0 0
      %1023 = vmatprep.subr.bf16.mxu0 0
      %1024 = vmatpush1.bf16.msra.mxu0 0
      %1025 = vmatprep.subr.bf16.mxu0 0
      %1026 = vmatpush1.bf16.msra.mxu0 0
      %1027 = vmatprep.subr.bf16.mxu0 0
      %1028 = vmatpush1.bf16.msra.mxu0 0
      %1029 = vmatprep.subr.bf16.mxu0 0
      %1030 = vmatpush1.bf16.msra.mxu0 0
      %1031 = vmatprep.subr.bf16.mxu0 0
      %1032 = vmatpush1.bf16.msra.mxu0 0
      %1033 = vmatprep.subr.bf16.mxu0 0
      %1034 = vmatpush1.bf16.msra.mxu0 0
      %1035 = vmatprep.subr.bf16.mxu0 0
      %1036 = vmatpush1.bf16.msra.mxu0 0
      %1037 = vmatprep.subr.bf16.mxu0 0
      %1038 = vmatpush1.bf16.msra.mxu0 0
      %1039 = vmatprep.mubr.bf16.mxu0 0
      %1040 = vmatmul.mubr.bf16.gmra.mrb[0].mxu0 %v996
      %v1041 = vpop.f32.mrb[0].mxu0
      %v1042 = vadd.f32 0.0, %v1041
      %v1043 = vpop.f32.mrb[0].mxu0
      %v1044 = vpop.f32.mrb[0].mxu0
      %v1045 = vadd.f32 0.0, %v1044
      %v1046 = vpop.f32.mrb[0].mxu0
      %1047 = vmatprep.mubr.bf16.mxu0 0
      %1048 = vmatmul.mubr.bf16.gmra.mrb[0].mxu0 %v999
      %v1049 = vpop.f32.mrb[0].mxu0
      %v1050 = vadd.f32 0.0, %v1049
      %v1051 = vpop.f32.mrb[0].mxu0
      %v1052 = vpop.f32.mrb[0].mxu0
      %v1053 = vadd.f32 0.0, %v1052
      %v1054 = vpop.f32.mrb[0].mxu0
      %1055 = vmatprep.mubr.bf16.mxu0 0
      %1056 = vmatmul.mubr.bf16.gmra.mrb[0].mxu0 %v1002
      %v1057 = vpop.f32.mrb[0].mxu0
      %v1058 = vadd.f32 0.0, %v1057
      %v1059 = vpop.f32.mrb[0].mxu0
      %v1060 = vpop.f32.mrb[0].mxu0
      %v1061 = vadd.f32 0.0, %v1060
      %v1062 = vpop.f32.mrb[0].mxu0
      %1063 = vmatprep.mubr.bf16.mxu0 0
      %1064 = vmatmul.mubr.bf16.gmra.mrb[0].mxu0 %v1005
      %v1065 = vpop.f32.mrb[0].mxu0
      %v1066 = vadd.f32 0.0, %v1065
      %v1067 = vpop.f32.mrb[0].mxu0
      %v1068 = vpop.f32.mrb[0].mxu0
      %v1069 = vadd.f32 0.0, %v1068
      %v1070 = vpop.f32.mrb[0].mxu0
      %1071 = vdwg.mxu0
      %v1072 = vpack.c.bf16 %v1045, %v1042
      %v1073 = vpack.c.bf16 %v1053, %v1050
      %v1074 = vpack.c.bf16 %v1061, %v1058
      %v1075 = vpack.c.bf16 %v1069, %v1066
      %v1076 = vld [vmem:[#allocation2] sm:$0xf]
      %v1077 = vld [vmem:[#allocation3] sm:$0xf]
      %vm1078 = vcmask 130048
      %v1080 = vsel %vm1078, %v1072, 0
      %v1083 = vsel %vm1078, %v1073, 0
      %v1086 = vsel %vm1078, %v1074, 0
      %v1089 = vsel %vm1078, %v1075, 0
      %v1092 = vsel %vm1078, %v1076, 0
      %1094 = vmatprep.subr.bf16.mxu0 0
      %1095 = vmatpush1.bf16.xpose.msra.mxu0 %v1092
      %1096 = vmatprep.subr.bf16.mxu0 0
      %1097 = vmatpush1.bf16.xpose.msra.mxu0 0
      %1098 = vmatprep.subr.bf16.mxu0 0
      %1099 = vmatpush1.bf16.xpose.msra.mxu0 0
      %1100 = vmatprep.subr.bf16.mxu0 0
      %1101 = vmatpush1.bf16.xpose.msra.mxu0 0
      %1102 = vmatprep.subr.bf16.mxu0 0
      %1103 = vmatpush1.bf16.xpose.msra.mxu0 0
      %1104 = vmatprep.subr.bf16.mxu0 0
      %1105 = vmatpush1.bf16.xpose.msra.mxu0 0
      %1106 = vmatprep.subr.bf16.mxu0 0
      %1107 = vmatpush1.bf16.xpose.msra.mxu0 0
      %1108 = vmatprep.subr.bf16.mxu0 0
      %1109 = vmatpush1.bf16.xpose.msra.mxu0 0
      %1110 = vmatprep.subr.bf16.mxu0 0
      %1111 = vmatpush1.bf16.xpose.msra.mxu0 0
      %1112 = vmatprep.subr.bf16.mxu0 0
      %1113 = vmatpush1.bf16.xpose.msra.mxu0 0
      %1114 = vmatprep.subr.bf16.mxu0 0
      %1115 = vmatpush1.bf16.xpose.msra.mxu0 0
      %1116 = vmatprep.subr.bf16.mxu0 0
      %1117 = vmatpush1.bf16.xpose.msra.mxu0 0
      %1118 = vmatprep.subr.bf16.mxu0 0
      %1119 = vmatpush1.bf16.xpose.msra.mxu0 0
      %1120 = vmatprep.subr.bf16.mxu0 0
      %1121 = vmatpush1.bf16.xpose.msra.mxu0 0
      %1122 = vmatprep.subr.bf16.mxu0 0
      %1123 = vmatpush1.bf16.xpose.msra.mxu0 0
      %1124 = vmatprep.subr.bf16.mxu0 0
      %1125 = vmatpush1.bf16.xpose.msra.mxu0 0
      %1126 = vmatprep.mubr.bf16.mxu0 0
      %1127 = vmatmul.mubr.bf16.gmra.mrb[0].mxu0 %v1080
      %v1128 = vpop.f32.mrb[0].mxu0
      %v1129 = vadd.f32 0.0, %v1128
      %v1130 = vpop.f32.mrb[0].mxu0
      %v1131 = vpop.f32.mrb[0].mxu0
      %v1132 = vadd.f32 0.0, %v1131
      %v1133 = vpop.f32.mrb[0].mxu0
      %1134 = vmatprep.mubr.bf16.mxu0 0
      %1135 = vmatmul.mubr.bf16.gmra.mrb[0].mxu0 %v1083
      %v1136 = vpop.f32.mrb[0].mxu0
      %v1137 = vadd.f32 0.0, %v1136
      %v1138 = vpop.f32.mrb[0].mxu0
      %v1139 = vpop.f32.mrb[0].mxu0
      %v1140 = vadd.f32 0.0, %v1139
      %v1141 = vpop.f32.mrb[0].mxu0
      %1142 = vmatprep.mubr.bf16.mxu0 0
      %1143 = vmatmul.mubr.bf16.gmra.mrb[0].mxu0 %v1086
      %v1144 = vpop.f32.mrb[0].mxu0
      %v1145 = vadd.f32 0.0, %v1144
      %v1146 = vpop.f32.mrb[0].mxu0
      %v1147 = vpop.f32.mrb[0].mxu0
      %v1148 = vadd.f32 0.0, %v1147
      %v1149 = vpop.f32.mrb[0].mxu0
      %1150 = vmatprep.mubr.bf16.mxu0 0
      %1151 = vmatmul.mubr.bf16.gmra.mrb[0].mxu0 %v1089
      %v1152 = vpop.f32.mrb[0].mxu0
      %v1153 = vadd.f32 0.0, %v1152
      %v1154 = vpop.f32.mrb[0].mxu0
      %v1155 = vpop.f32.mrb[0].mxu0
      %v1156 = vadd.f32 0.0, %v1155
      %v1157 = vpop.f32.mrb[0].mxu0
      %1158 = vdwg.mxu0
      %vm1159 = vcmask 64512
      %v1160 = vsel %vm1159, %v1129, -inf
      %1161 = vmax.xlane.f32.xlu0 %v1160
      %v1162 = vpop.xlane.xlu0 %1161
      %v1163 = vsel %vm1159, %v1132, -inf
      %1164 = vmax.xlane.f32.xlu0 %v1163
      %v1165 = vpop.xlane.xlu0 %1164
      %v1166 = vsel %vm1159, %v1137, -inf
      %1167 = vmax.xlane.f32.xlu0 %v1166
      %v1168 = vpop.xlane.xlu0 %1167
      %v1169 = vsel %vm1159, %v1140, -inf
      %1170 = vmax.xlane.f32.xlu0 %v1169
      %v1171 = vpop.xlane.xlu0 %1170
      %v1172 = vsel %vm1159, %v1145, -inf
      %1173 = vmax.xlane.f32.xlu0 %v1172
      %v1174 = vpop.xlane.xlu0 %1173
      %v1175 = vsel %vm1159, %v1148, -inf
      %1176 = vmax.xlane.f32.xlu0 %v1175
      %v1177 = vpop.xlane.xlu0 %1176
      %v1178 = vsel %vm1159, %v1153, -inf
      %1179 = vmax.xlane.f32.xlu0 %v1178
      %v1180 = vpop.xlane.xlu0 %1179
      %v1181 = vsel %vm1159, %v1156, -inf
      %1182 = vmax.xlane.f32.xlu0 %v1181
      %v1183 = vpop.xlane.xlu0 %1182
      %v1184 = vsub.f32 %v1129, %v1162
      %v1185 = vsub.f32 %v1132, %v1165
      %v1186 = vsub.f32 %v1137, %v1168
      %v1187 = vsub.f32 %v1140, %v1171
      %v1188 = vsub.f32 %v1145, %v1174
      %v1189 = vsub.f32 %v1148, %v1177
      %v1190 = vsub.f32 %v1153, %v1180
      %v1191 = vsub.f32 %v1156, %v1183
      %v1192 = vmul.f32 %v1184, 1.442695
      %v1193 = vpow.pop %v1192
      %v1194 = vmul.f32 %v1185, 1.442695
      %v1195 = vpow.pop %v1194
      %v1196 = vmul.f32 %v1186, 1.442695
      %v1197 = vpow.pop %v1196
      %v1198 = vmul.f32 %v1187, 1.442695
      %v1199 = vpow.pop %v1198
      %v1200 = vmul.f32 %v1188, 1.442695
      %v1201 = vpow.pop %v1200
      %v1202 = vmul.f32 %v1189, 1.442695
      %v1203 = vpow.pop %v1202
      %v1204 = vmul.f32 %v1190, 1.442695
      %v1205 = vpow.pop %v1204
      %v1206 = vmul.f32 %v1191, 1.442695
      %v1207 = vpow.pop %v1206
      %v1208 = vsel %vm1159, %v1193, 0.0
      %1209 = vadd.xlane.f32.xlu0 %v1208
      %v1210 = vpop.xlane.xlu0 %1209
      %v1211 = vsel %vm1159, %v1195, 0.0
      %1212 = vadd.xlane.f32.xlu0 %v1211
      %v1213 = vpop.xlane.xlu0 %1212
      %v1214 = vsel %vm1159, %v1197, 0.0
      %1215 = vadd.xlane.f32.xlu0 %v1214
      %v1216 = vpop.xlane.xlu0 %1215
      %v1217 = vsel %vm1159, %v1199, 0.0
      %1218 = vadd.xlane.f32.xlu0 %v1217
      %v1219 = vpop.xlane.xlu0 %1218
      %v1220 = vsel %vm1159, %v1201, 0.0
      %1221 = vadd.xlane.f32.xlu0 %v1220
      %v1222 = vpop.xlane.xlu0 %1221
      %v1223 = vsel %vm1159, %v1203, 0.0
      %1224 = vadd.xlane.f32.xlu0 %v1223
      %v1225 = vpop.xlane.xlu0 %1224
      %v1226 = vsel %vm1159, %v1205, 0.0
      %1227 = vadd.xlane.f32.xlu0 %v1226
      %v1228 = vpop.xlane.xlu0 %1227
      %v1229 = vsel %vm1159, %v1207, 0.0
      %1230 = vadd.xlane.f32.xlu0 %v1229
      %v1231 = vpop.xlane.xlu0 %1230
      %v1232 = vrcp.pop %v1210
      %v1233 = vrcp.pop %v1213
      %v1234 = vrcp.pop %v1216
      %v1235 = vrcp.pop %v1219
      %v1236 = vrcp.pop %v1222
      %v1237 = vrcp.pop %v1225
      %v1238 = vrcp.pop %v1228
      %v1239 = vrcp.pop %v1231
      %v1240 = vpack.c.bf16 %v1195, %v1193
      %v1241 = vpack.c.bf16 %v1199, %v1197
      %v1242 = vpack.c.bf16 %v1203, %v1201
      %v1243 = vpack.c.bf16 %v1207, %v1205
      %v1245 = vsel %vm1159, %v1240, 0
      %v1248 = vsel %vm1159, %v1241, 0
      %v1251 = vsel %vm1159, %v1242, 0
      %v1254 = vsel %vm1159, %v1243, 0
      %vm1256 = vcmask 1043456
      %v1258 = vsel %vm1256, %v1077, 0
      %1260 = vmatprep.subr.bf16.mxu0 0
      %1261 = vmatpush1.bf16.msra.mxu0 %v1258
      %1262 = vmatprep.subr.bf16.mxu0 0
      %1263 = vmatpush1.bf16.msra.mxu0 0
      %1264 = vmatprep.subr.bf16.mxu0 0
      %1265 = vmatpush1.bf16.msra.mxu0 0
      %1266 = vmatprep.subr.bf16.mxu0 0
      %1267 = vmatpush1.bf16.msra.mxu0 0
      %1268 = vmatprep.subr.bf16.mxu0 0
      %1269 = vmatpush1.bf16.msra.mxu0 0
      %1270 = vmatprep.subr.bf16.mxu0 0
      %1271 = vmatpush1.bf16.msra.mxu0 0
      %1272 = vmatprep.subr.bf16.mxu0 0
      %1273 = vmatpush1.bf16.msra.mxu0 0
      %1274 = vmatprep.subr.bf16.mxu0 0
      %1275 = vmatpush1.bf16.msra.mxu0 0
      %1276 = vmatprep.subr.bf16.mxu0 0
      %1277 = vmatpush1.bf16.msra.mxu0 0
      %1278 = vmatprep.subr.bf16.mxu0 0
      %1279 = vmatpush1.bf16.msra.mxu0 0
      %1280 = vmatprep.subr.bf16.mxu0 0
      %1281 = vmatpush1.bf16.msra.mxu0 0
      %1282 = vmatprep.subr.bf16.mxu0 0
      %1283 = vmatpush1.bf16.msra.mxu0 0
      %1284 = vmatprep.subr.bf16.mxu0 0
      %1285 = vmatpush1.bf16.msra.mxu0 0
      %1286 = vmatprep.subr.bf16.mxu0 0
      %1287 = vmatpush1.bf16.msra.mxu0 0
      %1288 = vmatprep.subr.bf16.mxu0 0
      %1289 = vmatpush1.bf16.msra.mxu0 0
      %1290 = vmatprep.subr.bf16.mxu0 0
      %1291 = vmatpush1.bf16.msra.mxu0 0
      %1292 = vmatprep.mubr.bf16.mxu0 0
      %1293 = vmatmul.mubr.bf16.gmra.mrb[0].mxu0 %v1245
      %v1294 = vpop.f32.mrb[0].mxu0
      %v1295 = vadd.f32 0.0, %v1294
      %v1296 = vpop.f32.mrb[0].mxu0
      %v1297 = vpop.f32.mrb[0].mxu0
      %v1298 = vadd.f32 0.0, %v1297
      %v1299 = vpop.f32.mrb[0].mxu0
      %1300 = vmatprep.mubr.bf16.mxu0 0
      %1301 = vmatmul.mubr.bf16.gmra.mrb[0].mxu0 %v1248
      %v1302 = vpop.f32.mrb[0].mxu0
      %v1303 = vadd.f32 0.0, %v1302
      %v1304 = vpop.f32.mrb[0].mxu0
      %v1305 = vpop.f32.mrb[0].mxu0
      %v1306 = vadd.f32 0.0, %v1305
      %v1307 = vpop.f32.mrb[0].mxu0
      %1308 = vmatprep.mubr.bf16.mxu0 0
      %1309 = vmatmul.mubr.bf16.gmra.mrb[0].mxu0 %v1251
      %v1310 = vpop.f32.mrb[0].mxu0
      %v1311 = vadd.f32 0.0, %v1310
      %v1312 = vpop.f32.mrb[0].mxu0
      %v1313 = vpop.f32.mrb[0].mxu0
      %v1314 = vadd.f32 0.0, %v1313
      %v1315 = vpop.f32.mrb[0].mxu0
      %1316 = vmatprep.mubr.bf16.mxu0 0
      %1317 = vmatmul.mubr.bf16.gmra.mrb[0].mxu0 %v1254
      %v1318 = vpop.f32.mrb[0].mxu0
      %v1319 = vadd.f32 0.0, %v1318
      %v1320 = vpop.f32.mrb[0].mxu0
      %v1321 = vpop.f32.mrb[0].mxu0
      %v1322 = vadd.f32 0.0, %v1321
      %v1323 = vpop.f32.mrb[0].mxu0
      %1324 = vdwg.mxu0
      %v1325 = vmul.f32 %v1295, %v1232
      %v1326 = vmul.f32 %v1298, %v1233
      %v1327 = vmul.f32 %v1303, %v1234
      %v1328 = vmul.f32 %v1306, %v1235
      %v1329 = vmul.f32 %v1311, %v1236
      %v1330 = vmul.f32 %v1314, %v1237
      %v1331 = vmul.f32 %v1319, %v1238
      %v1332 = vmul.f32 %v1322, %v1239
      %v1333 = vpack.c.bf16 %v1326, %v1325
      %v1334 = vpack.c.bf16 %v1328, %v1327
      %v1335 = vpack.c.bf16 %v1330, %v1329
      %v1336 = vpack.c.bf16 %v1332, %v1331
      %v1337 = vld [vmem:[%s5] sm:$0xf]
      %v1338 = vld [vmem:[%s5 + $0x4] sm:$0xf]
      %s1339 = scalar_lea.vmem %s2, 16
      %v1340 = vld [vmem:[%s1339] sm:$0xf]
      %v1341 = vld [vmem:[%s1339 + $0x4] sm:$0xf]
      %v1342 = vld [vmem:[%s1339 + $0x8] sm:$0xf]
      %v1343 = vld [vmem:[%s1339 + $0xc] sm:$0xf]
      %v1348 = vunpack.c.l.b16 %v1340
      %v1349 = vunpack.c.l.b16 %v1341
      %v1350 = vunpack.c.l.b16 %v1342
      %v1351 = vunpack.c.l.b16 %v1343
      %v1352 = vpack.c.b16 %v1349, %v1348
      %v1353 = vpack.c.b16 %v1351, %v1350
      %1356 = vmatprep.subr.bf16.mxu0 0
      %1357 = vmatpush1.bf16.msra.mxu0 %v1352
      %1358 = vmatprep.subr.bf16.mxu0 0
      %1359 = vmatpush1.bf16.msra.mxu0 %v1353
      %1360 = vmatprep.subr.bf16.mxu0 0
      %1361 = vmatpush1.bf16.msra.mxu0 0
      %1362 = vmatprep.subr.bf16.mxu0 0
      %1363 = vmatpush1.bf16.msra.mxu0 0
      %1364 = vmatprep.subr.bf16.mxu0 0
      %1365 = vmatpush1.bf16.msra.mxu0 0
      %1366 = vmatprep.subr.bf16.mxu0 0
      %1367 = vmatpush1.bf16.msra.mxu0 0
      %1368 = vmatprep.subr.bf16.mxu0 0
      %1369 = vmatpush1.bf16.msra.mxu0 0
      %1370 = vmatprep.subr.bf16.mxu0 0
      %1371 = vmatpush1.bf16.msra.mxu0 0
      %1372 = vmatprep.subr.bf16.mxu0 0
      %1373 = vmatpush1.bf16.msra.mxu0 0
      %1374 = vmatprep.subr.bf16.mxu0 0
      %1375 = vmatpush1.bf16.msra.mxu0 0
      %1376 = vmatprep.subr.bf16.mxu0 0
      %1377 = vmatpush1.bf16.msra.mxu0 0
      %1378 = vmatprep.subr.bf16.mxu0 0
      %1379 = vmatpush1.bf16.msra.mxu0 0
      %1380 = vmatprep.subr.bf16.mxu0 0
      %1381 = vmatpush1.bf16.msra.mxu0 0
      %1382 = vmatprep.subr.bf16.mxu0 0
      %1383 = vmatpush1.bf16.msra.mxu0 0
      %1384 = vmatprep.subr.bf16.mxu0 0
      %1385 = vmatpush1.bf16.msra.mxu0 0
      %1386 = vmatprep.subr.bf16.mxu0 0
      %1387 = vmatpush1.bf16.msra.mxu0 0
      %1388 = vmatprep.mubr.bf16.mxu0 0
      %1389 = vmatmul.mubr.bf16.gmra.mrb[0].mxu0 %v996
      %v1390 = vpop.f32.mrb[0].mxu0
      %v1391 = vadd.f32 0.0, %v1390
      %v1392 = vpop.f32.mrb[0].mxu0
      %v1393 = vpop.f32.mrb[0].mxu0
      %v1394 = vadd.f32 0.0, %v1393
      %v1395 = vpop.f32.mrb[0].mxu0
      %1396 = vmatprep.mubr.bf16.mxu0 0
      %1397 = vmatmul.mubr.bf16.gmra.mrb[0].mxu0 %v999
      %v1398 = vpop.f32.mrb[0].mxu0
      %v1399 = vadd.f32 0.0, %v1398
      %v1400 = vpop.f32.mrb[0].mxu0
      %v1401 = vpop.f32.mrb[0].mxu0
      %v1402 = vadd.f32 0.0, %v1401
      %v1403 = vpop.f32.mrb[0].mxu0
      %1404 = vmatprep.mubr.bf16.mxu0 0
      %1405 = vmatmul.mubr.bf16.gmra.mrb[0].mxu0 %v1002
      %v1406 = vpop.f32.mrb[0].mxu0
      %v1407 = vadd.f32 0.0, %v1406
      %v1408 = vpop.f32.mrb[0].mxu0
      %v1409 = vpop.f32.mrb[0].mxu0
      %v1410 = vadd.f32 0.0, %v1409
      %v1411 = vpop.f32.mrb[0].mxu0
      %1412 = vmatprep.mubr.bf16.mxu0 0
      %1413 = vmatmul.mubr.bf16.gmra.mrb[0].mxu0 %v1005
      %v1414 = vpop.f32.mrb[0].mxu0
      %v1415 = vadd.f32 0.0, %v1414
      %v1416 = vpop.f32.mrb[0].mxu0
      %v1417 = vpop.f32.mrb[0].mxu0
      %v1418 = vadd.f32 0.0, %v1417
      %v1419 = vpop.f32.mrb[0].mxu0
      %1420 = vdwg.mxu0
      %v1421 = vpack.c.bf16 %v1394, %v1391
      %v1422 = vpack.c.bf16 %v1402, %v1399
      %v1423 = vpack.c.bf16 %v1410, %v1407
      %v1424 = vpack.c.bf16 %v1418, %v1415
      %s1425 = scalar_lea.vmem [#allocation2], 4
      %v1426 = vld [vmem:[%s1425] sm:$0xf]
      %s1427 = scalar_lea.vmem [#allocation3], 4
      %v1428 = vld [vmem:[%s1427] sm:$0xf]
      %v1430 = vsel %vm1078, %v1421, 0
      %v1433 = vsel %vm1078, %v1422, 0
      %v1436 = vsel %vm1078, %v1423, 0
      %v1439 = vsel %vm1078, %v1424, 0
      %v1442 = vsel %vm1078, %v1426, 0
      %1444 = vmatprep.subr.bf16.mxu0 0
      %1445 = vmatpush1.bf16.xpose.msra.mxu0 %v1442
      %1446 = vmatprep.subr.bf16.mxu0 0
      %1447 = vmatpush1.bf16.xpose.msra.mxu0 0
      %1448 = vmatprep.subr.bf16.mxu0 0
      %1449 = vmatpush1.bf16.xpose.msra.mxu0 0
      %1450 = vmatprep.subr.bf16.mxu0 0
      %1451 = vmatpush1.bf16.xpose.msra.mxu0 0
      %1452 = vmatprep.subr.bf16.mxu0 0
      %1453 = vmatpush1.bf16.xpose.msra.mxu0 0
      %1454 = vmatprep.subr.bf16.mxu0 0
      %1455 = vmatpush1.bf16.xpose.msra.mxu0 0
      %1456 = vmatprep.subr.bf16.mxu0 0
      %1457 = vmatpush1.bf16.xpose.msra.mxu0 0
      %1458 = vmatprep.subr.bf16.mxu0 0
      %1459 = vmatpush1.bf16.xpose.msra.mxu0 0
      %1460 = vmatprep.subr.bf16.mxu0 0
      %1461 = vmatpush1.bf16.xpose.msra.mxu0 0
      %1462 = vmatprep.subr.bf16.mxu0 0
      %1463 = vmatpush1.bf16.xpose.msra.mxu0 0
      %1464 = vmatprep.subr.bf16.mxu0 0
      %1465 = vmatpush1.bf16.xpose.msra.mxu0 0
      %1466 = vmatprep.subr.bf16.mxu0 0
      %1467 = vmatpush1.bf16.xpose.msra.mxu0 0
      %1468 = vmatprep.subr.bf16.mxu0 0
      %1469 = vmatpush1.bf16.xpose.msra.mxu0 0
      %1470 = vmatprep.subr.bf16.mxu0 0
      %1471 = vmatpush1.bf16.xpose.msra.mxu0 0
      %1472 = vmatprep.subr.bf16.mxu0 0
      %1473 = vmatpush1.bf16.xpose.msra.mxu0 0
      %1474 = vmatprep.subr.bf16.mxu0 0
      %1475 = vmatpush1.bf16.xpose.msra.mxu0 0
      %1476 = vmatprep.mubr.bf16.mxu0 0
      %1477 = vmatmul.mubr.bf16.gmra.mrb[0].mxu0 %v1430
      %v1478 = vpop.f32.mrb[0].mxu0
      %v1479 = vadd.f32 0.0, %v1478
      %v1480 = vpop.f32.mrb[0].mxu0
      %v1481 = vpop.f32.mrb[0].mxu0
      %v1482 = vadd.f32 0.0, %v1481
      %v1483 = vpop.f32.mrb[0].mxu0
      %1484 = vmatprep.mubr.bf16.mxu0 0
      %1485 = vmatmul.mubr.bf16.gmra.mrb[0].mxu0 %v1433
      %v1486 = vpop.f32.mrb[0].mxu0
      %v1487 = vadd.f32 0.0, %v1486
      %v1488 = vpop.f32.mrb[0].mxu0
      %v1489 = vpop.f32.mrb[0].mxu0
      %v1490 = vadd.f32 0.0, %v1489
      %v1491 = vpop.f32.mrb[0].mxu0
      %1492 = vmatprep.mubr.bf16.mxu0 0
      %1493 = vmatmul.mubr.bf16.gmra.mrb[0].mxu0 %v1436
      %v1494 = vpop.f32.mrb[0].mxu0
      %v1495 = vadd.f32 0.0, %v1494
      %v1496 = vpop.f32.mrb[0].mxu0
      %v1497 = vpop.f32.mrb[0].mxu0
      %v1498 = vadd.f32 0.0, %v1497
      %v1499 = vpop.f32.mrb[0].mxu0
      %1500 = vmatprep.mubr.bf16.mxu0 0
      %1501 = vmatmul.mubr.bf16.gmra.mrb[0].mxu0 %v1439
      %v1502 = vpop.f32.mrb[0].mxu0
      %v1503 = vadd.f32 0.0, %v1502
      %v1504 = vpop.f32.mrb[0].mxu0
      %v1505 = vpop.f32.mrb[0].mxu0
      %v1506 = vadd.f32 0.0, %v1505
      %v1507 = vpop.f32.mrb[0].mxu0
      %1508 = vdwg.mxu0
      %v1509 = vsel %vm1159, %v1479, -inf
      %1510 = vmax.xlane.f32.xlu0 %v1509
      %v1511 = vpop.xlane.xlu0 %1510
      %v1512 = vsel %vm1159, %v1482, -inf
      %1513 = vmax.xlane.f32.xlu0 %v1512
      %v1514 = vpop.xlane.xlu0 %1513
      %v1515 = vsel %vm1159, %v1487, -inf
      %1516 = vmax.xlane.f32.xlu0 %v1515
      %v1517 = vpop.xlane.xlu0 %1516
      %v1518 = vsel %vm1159, %v1490, -inf
      %1519 = vmax.xlane.f32.xlu0 %v1518
      %v1520 = vpop.xlane.xlu0 %1519
      %v1521 = vsel %vm1159, %v1495, -inf
      %1522 = vmax.xlane.f32.xlu0 %v1521
      %v1523 = vpop.xlane.xlu0 %1522
      %v1524 = vsel %vm1159, %v1498, -inf
      %1525 = vmax.xlane.f32.xlu0 %v1524
      %v1526 = vpop.xlane.xlu0 %1525
      %v1527 = vsel %vm1159, %v1503, -inf
      %1528 = vmax.xlane.f32.xlu0 %v1527
      %v1529 = vpop.xlane.xlu0 %1528
      %v1530 = vsel %vm1159, %v1506, -inf
      %1531 = vmax.xlane.f32.xlu0 %v1530
      %v1532 = vpop.xlane.xlu0 %1531
      %v1533 = vsub.f32 %v1479, %v1511
      %v1534 = vsub.f32 %v1482, %v1514
      %v1535 = vsub.f32 %v1487, %v1517
      %v1536 = vsub.f32 %v1490, %v1520
      %v1537 = vsub.f32 %v1495, %v1523
      %v1538 = vsub.f32 %v1498, %v1526
      %v1539 = vsub.f32 %v1503, %v1529
      %v1540 = vsub.f32 %v1506, %v1532
      %v1541 = vmul.f32 %v1533, 1.442695
      %v1542 = vpow.pop %v1541
      %v1543 = vmul.f32 %v1534, 1.442695
      %v1544 = vpow.pop %v1543
      %v1545 = vmul.f32 %v1535, 1.442695
      %v1546 = vpow.pop %v1545
      %v1547 = vmul.f32 %v1536, 1.442695
      %v1548 = vpow.pop %v1547
      %v1549 = vmul.f32 %v1537, 1.442695
      %v1550 = vpow.pop %v1549
      %v1551 = vmul.f32 %v1538, 1.442695
      %v1552 = vpow.pop %v1551
      %v1553 = vmul.f32 %v1539, 1.442695
      %v1554 = vpow.pop %v1553
      %v1555 = vmul.f32 %v1540, 1.442695
      %v1556 = vpow.pop %v1555
      %v1557 = vsel %vm1159, %v1542, 0.0
      %1558 = vadd.xlane.f32.xlu0 %v1557
      %v1559 = vpop.xlane.xlu0 %1558
      %v1560 = vsel %vm1159, %v1544, 0.0
      %1561 = vadd.xlane.f32.xlu0 %v1560
      %v1562 = vpop.xlane.xlu0 %1561
      %v1563 = vsel %vm1159, %v1546, 0.0
      %1564 = vadd.xlane.f32.xlu0 %v1563
      %v1565 = vpop.xlane.xlu0 %1564
      %v1566 = vsel %vm1159, %v1548, 0.0
      %1567 = vadd.xlane.f32.xlu0 %v1566
      %v1568 = vpop.xlane.xlu0 %1567
      %v1569 = vsel %vm1159, %v1550, 0.0
      %1570 = vadd.xlane.f32.xlu0 %v1569
      %v1571 = vpop.xlane.xlu0 %1570
      %v1572 = vsel %vm1159, %v1552, 0.0
      %1573 = vadd.xlane.f32.xlu0 %v1572
      %v1574 = vpop.xlane.xlu0 %1573
      %v1575 = vsel %vm1159, %v1554, 0.0
      %1576 = vadd.xlane.f32.xlu0 %v1575
      %v1577 = vpop.xlane.xlu0 %1576
      %v1578 = vsel %vm1159, %v1556, 0.0
      %1579 = vadd.xlane.f32.xlu0 %v1578
      %v1580 = vpop.xlane.xlu0 %1579
      %v1581 = vrcp.pop %v1559
      %v1582 = vrcp.pop %v1562
      %v1583 = vrcp.pop %v1565
      %v1584 = vrcp.pop %v1568
      %v1585 = vrcp.pop %v1571
      %v1586 = vrcp.pop %v1574
      %v1587 = vrcp.pop %v1577
      %v1588 = vrcp.pop %v1580
      %v1589 = vpack.c.bf16 %v1544, %v1542
      %v1590 = vpack.c.bf16 %v1548, %v1546
      %v1591 = vpack.c.bf16 %v1552, %v1550
      %v1592 = vpack.c.bf16 %v1556, %v1554
      %v1594 = vsel %vm1159, %v1589, 0
      %v1597 = vsel %vm1159, %v1590, 0
      %v1600 = vsel %vm1159, %v1591, 0
      %v1603 = vsel %vm1159, %v1592, 0
      %v1606 = vsel %vm1256, %v1428, 0
      %1608 = vmatprep.subr.bf16.mxu0 0
      %1609 = vmatpush1.bf16.msra.mxu0 %v1606
      %1610 = vmatprep.subr.bf16.mxu0 0
      %1611 = vmatpush1.bf16.msra.mxu0 0
      %1612 = vmatprep.subr.bf16.mxu0 0
      %1613 = vmatpush1.bf16.msra.mxu0 0
      %1614 = vmatprep.subr.bf16.mxu0 0
      %1615 = vmatpush1.bf16.msra.mxu0 0
      %1616 = vmatprep.subr.bf16.mxu0 0
      %1617 = vmatpush1.bf16.msra.mxu0 0
      %1618 = vmatprep.subr.bf16.mxu0 0
      %1619 = vmatpush1.bf16.msra.mxu0 0
      %1620 = vmatprep.subr.bf16.mxu0 0
      %1621 = vmatpush1.bf16.msra.mxu0 0
      %1622 = vmatprep.subr.bf16.mxu0 0
      %1623 = vmatpush1.bf16.msra.mxu0 0
      %1624 = vmatprep.subr.bf16.mxu0 0
      %1625 = vmatpush1.bf16.msra.mxu0 0
      %1626 = vmatprep.subr.bf16.mxu0 0
      %1627 = vmatpush1.bf16.msra.mxu0 0
      %1628 = vmatprep.subr.bf16.mxu0 0
      %1629 = vmatpush1.bf16.msra.mxu0 0
      %1630 = vmatprep.subr.bf16.mxu0 0
      %1631 = vmatpush1.bf16.msra.mxu0 0
      %1632 = vmatprep.subr.bf16.mxu0 0
      %1633 = vmatpush1.bf16.msra.mxu0 0
      %1634 = vmatprep.subr.bf16.mxu0 0
      %1635 = vmatpush1.bf16.msra.mxu0 0
      %1636 = vmatprep.subr.bf16.mxu0 0
      %1637 = vmatpush1.bf16.msra.mxu0 0
      %1638 = vmatprep.subr.bf16.mxu0 0
      %1639 = vmatpush1.bf16.msra.mxu0 0
      %1640 = vmatprep.mubr.bf16.mxu0 0
      %1641 = vmatmul.mubr.bf16.gmra.mrb[0].mxu0 %v1594
      %v1642 = vpop.f32.mrb[0].mxu0
      %v1643 = vadd.f32 0.0, %v1642
      %v1644 = vpop.f32.mrb[0].mxu0
      %v1645 = vpop.f32.mrb[0].mxu0
      %v1646 = vadd.f32 0.0, %v1645
      %v1647 = vpop.f32.mrb[0].mxu0
      %1648 = vmatprep.mubr.bf16.mxu0 0
      %1649 = vmatmul.mubr.bf16.gmra.mrb[0].mxu0 %v1597
      %v1650 = vpop.f32.mrb[0].mxu0
      %v1651 = vadd.f32 0.0, %v1650
      %v1652 = vpop.f32.mrb[0].mxu0
      %v1653 = vpop.f32.mrb[0].mxu0
      %v1654 = vadd.f32 0.0, %v1653
      %v1655 = vpop.f32.mrb[0].mxu0
      %1656 = vmatprep.mubr.bf16.mxu0 0
      %1657 = vmatmul.mubr.bf16.gmra.mrb[0].mxu0 %v1600
      %v1658 = vpop.f32.mrb[0].mxu0
      %v1659 = vadd.f32 0.0, %v1658
      %v1660 = vpop.f32.mrb[0].mxu0
      %v1661 = vpop.f32.mrb[0].mxu0
      %v1662 = vadd.f32 0.0, %v1661
      %v1663 = vpop.f32.mrb[0].mxu0
      %1664 = vmatprep.mubr.bf16.mxu0 0
      %1665 = vmatmul.mubr.bf16.gmra.mrb[0].mxu0 %v1603
      %v1666 = vpop.f32.mrb[0].mxu0
      %v1667 = vadd.f32 0.0, %v1666
      %v1668 = vpop.f32.mrb[0].mxu0
      %v1669 = vpop.f32.mrb[0].mxu0
      %v1670 = vadd.f32 0.0, %v1669
      %v1671 = vpop.f32.mrb[0].mxu0
      %1672 = vdwg.mxu0
      %v1673 = vmul.f32 %v1643, %v1581
      %v1674 = vmul.f32 %v1646, %v1582
      %v1675 = vmul.f32 %v1651, %v1583
      %v1676 = vmul.f32 %v1654, %v1584
      %v1677 = vmul.f32 %v1659, %v1585
      %v1678 = vmul.f32 %v1662, %v1586
      %v1679 = vmul.f32 %v1667, %v1587
      %v1680 = vmul.f32 %v1670, %v1588
      %v1681 = vpack.c.bf16 %v1674, %v1673
      %v1682 = vpack.c.bf16 %v1676, %v1675
      %v1683 = vpack.c.bf16 %v1678, %v1677
      %v1684 = vpack.c.bf16 %v1680, %v1679
      %s1685 = scalar_lea.vmem %s5, 8
      %v1686 = vld [vmem:[%s1685] sm:$0xf]
      %v1687 = vld [vmem:[%s1685 + $0x4] sm:$0xf]
      %v1690 = vunpack.c.l.b16 %v1686
      %v1691 = vunpack.c.l.b16 %v1687
      %v1692 = vpack.c.b16 %v1691, %v1690
      %v1695 = vsel %vm1078, %v1681, 0
      %v1698 = vsel %vm1078, %v1682, 0
      %v1701 = vsel %vm1078, %v1683, 0
      %v1704 = vsel %vm1078, %v1684, 0
      %1706 = vmatprep.subr.bf16.mxu0 0
      %1707 = vmatpush1.bf16.msra.mxu0 %v1692
      %1708 = vmatprep.subr.bf16.mxu0 0
      %1709 = vmatpush1.bf16.msra.mxu0 0
      %1710 = vmatprep.subr.bf16.mxu0 0
      %1711 = vmatpush1.bf16.msra.mxu0 0
      %1712 = vmatprep.subr.bf16.mxu0 0
      %1713 = vmatpush1.bf16.msra.mxu0 0
      %1714 = vmatprep.subr.bf16.mxu0 0
      %1715 = vmatpush1.bf16.msra.mxu0 0
      %1716 = vmatprep.subr.bf16.mxu0 0
      %1717 = vmatpush1.bf16.msra.mxu0 0
      %1718 = vmatprep.subr.bf16.mxu0 0
      %1719 = vmatpush1.bf16.msra.mxu0 0
      %1720 = vmatprep.subr.bf16.mxu0 0
      %1721 = vmatpush1.bf16.msra.mxu0 0
      %1722 = vmatprep.subr.bf16.mxu0 0
      %1723 = vmatpush1.bf16.msra.mxu0 0
      %1724 = vmatprep.subr.bf16.mxu0 0
      %1725 = vmatpush1.bf16.msra.mxu0 0
      %1726 = vmatprep.subr.bf16.mxu0 0
      %1727 = vmatpush1.bf16.msra.mxu0 0
      %1728 = vmatprep.subr.bf16.mxu0 0
      %1729 = vmatpush1.bf16.msra.mxu0 0
      %1730 = vmatprep.subr.bf16.mxu0 0
      %1731 = vmatpush1.bf16.msra.mxu0 0
      %1732 = vmatprep.subr.bf16.mxu0 0
      %1733 = vmatpush1.bf16.msra.mxu0 0
      %1734 = vmatprep.subr.bf16.mxu0 0
      %1735 = vmatpush1.bf16.msra.mxu0 0
      %1736 = vmatprep.subr.bf16.mxu0 0
      %1737 = vmatpush1.bf16.msra.mxu0 0
      %1738 = vmatprep.mubr.bf16.mxu0 0
      %1739 = vmatmul.mubr.bf16.gmra.mrb[0].mxu0 %v1695
      %v1740 = vpop.f32.mrb[0].mxu0
      %v1741 = vadd.f32 0.0, %v1740
      %v1742 = vpop.f32.mrb[0].mxu0
      %v1743 = vpop.f32.mrb[0].mxu0
      %v1744 = vadd.f32 0.0, %v1743
      %v1745 = vpop.f32.mrb[0].mxu0
      %1746 = vmatprep.mubr.bf16.mxu0 0
      %1747 = vmatmul.mubr.bf16.gmra.mrb[0].mxu0 %v1698
      %v1748 = vpop.f32.mrb[0].mxu0
      %v1749 = vadd.f32 0.0, %v1748
      %v1750 = vpop.f32.mrb[0].mxu0
      %v1751 = vpop.f32.mrb[0].mxu0
      %v1752 = vadd.f32 0.0, %v1751
      %v1753 = vpop.f32.mrb[0].mxu0
      %1754 = vmatprep.mubr.bf16.mxu0 0
      %1755 = vmatmul.mubr.bf16.gmra.mrb[0].mxu0 %v1701
      %v1756 = vpop.f32.mrb[0].mxu0
      %v1757 = vadd.f32 0.0, %v1756
      %v1758 = vpop.f32.mrb[0].mxu0
      %v1759 = vpop.f32.mrb[0].mxu0
      %v1760 = vadd.f32 0.0, %v1759
      %v1761 = vpop.f32.mrb[0].mxu0
      %1762 = vmatprep.mubr.bf16.mxu0 0
      %1763 = vmatmul.mubr.bf16.gmra.mrb[0].mxu0 %v1704
      %v1764 = vpop.f32.mrb[0].mxu0
      %v1765 = vadd.f32 0.0, %v1764
      %v1766 = vpop.f32.mrb[0].mxu0
      %v1767 = vpop.f32.mrb[0].mxu0
      %v1768 = vadd.f32 0.0, %v1767
      %v1769 = vpop.f32.mrb[0].mxu0
      %1770 = vdwg.mxu0
      %v1773 = vunpack.c.l.b16 %v1337
      %v1774 = vunpack.c.l.b16 %v1338
      %v1775 = vpack.c.b16 %v1774, %v1773
      %v1778 = vsel %vm1078, %v1333, 0
      %v1781 = vsel %vm1078, %v1334, 0
      %v1784 = vsel %vm1078, %v1335, 0
      %v1787 = vsel %vm1078, %v1336, 0
      %1789 = vmatprep.subr.bf16.mxu0 0
      %1790 = vmatpush1.bf16.msra.mxu0 %v1775
      %1791 = vmatprep.subr.bf16.mxu0 0
      %1792 = vmatpush1.bf16.msra.mxu0 0
      %1793 = vmatprep.subr.bf16.mxu0 0
      %1794 = vmatpush1.bf16.msra.mxu0 0
      %1795 = vmatprep.subr.bf16.mxu0 0
      %1796 = vmatpush1.bf16.msra.mxu0 0
      %1797 = vmatprep.subr.bf16.mxu0 0
      %1798 = vmatpush1.bf16.msra.mxu0 0
      %1799 = vmatprep.subr.bf16.mxu0 0
      %1800 = vmatpush1.bf16.msra.mxu0 0
      %1801 = vmatprep.subr.bf16.mxu0 0
      %1802 = vmatpush1.bf16.msra.mxu0 0
      %1803 = vmatprep.subr.bf16.mxu0 0
      %1804 = vmatpush1.bf16.msra.mxu0 0
      %1805 = vmatprep.subr.bf16.mxu0 0
      %1806 = vmatpush1.bf16.msra.mxu0 0
      %1807 = vmatprep.subr.bf16.mxu0 0
      %1808 = vmatpush1.bf16.msra.mxu0 0
      %1809 = vmatprep.subr.bf16.mxu0 0
      %1810 = vmatpush1.bf16.msra.mxu0 0
      %1811 = vmatprep.subr.bf16.mxu0 0
      %1812 = vmatpush1.bf16.msra.mxu0 0
      %1813 = vmatprep.subr.bf16.mxu0 0
      %1814 = vmatpush1.bf16.msra.mxu0 0
      %1815 = vmatprep.subr.bf16.mxu0 0
      %1816 = vmatpush1.bf16.msra.mxu0 0
      %1817 = vmatprep.subr.bf16.mxu0 0
      %1818 = vmatpush1.bf16.msra.mxu0 0
      %1819 = vmatprep.subr.bf16.mxu0 0
      %1820 = vmatpush1.bf16.msra.mxu0 0
      %1821 = vmatprep.mubr.bf16.mxu0 0
      %1822 = vmatmul.mubr.bf16.gmra.mrb[0].mxu0 %v1778
      %v1823 = vpop.f32.mrb[0].mxu0
      %v1824 = vadd.f32 %v1741, %v1823
      %v1825 = vpop.f32.mrb[0].mxu0
      %v1826 = vpop.f32.mrb[0].mxu0
      %v1827 = vadd.f32 %v1744, %v1826
      %v1828 = vpop.f32.mrb[0].mxu0
      %1829 = vmatprep.mubr.bf16.mxu0 0
      %1830 = vmatmul.mubr.bf16.gmra.mrb[0].mxu0 %v1781
      %v1831 = vpop.f32.mrb[0].mxu0
      %v1832 = vadd.f32 %v1749, %v1831
      %v1833 = vpop.f32.mrb[0].mxu0
      %v1834 = vpop.f32.mrb[0].mxu0
      %v1835 = vadd.f32 %v1752, %v1834
      %v1836 = vpop.f32.mrb[0].mxu0
      %1837 = vmatprep.mubr.bf16.mxu0 0
      %1838 = vmatmul.mubr.bf16.gmra.mrb[0].mxu0 %v1784
      %v1839 = vpop.f32.mrb[0].mxu0
      %v1840 = vadd.f32 %v1757, %v1839
      %v1841 = vpop.f32.mrb[0].mxu0
      %v1842 = vpop.f32.mrb[0].mxu0
      %v1843 = vadd.f32 %v1760, %v1842
      %v1844 = vpop.f32.mrb[0].mxu0
      %1845 = vmatprep.mubr.bf16.mxu0 0
      %1846 = vmatmul.mubr.bf16.gmra.mrb[0].mxu0 %v1787
      %v1847 = vpop.f32.mrb[0].mxu0
      %v1848 = vadd.f32 %v1765, %v1847
      %v1849 = vpop.f32.mrb[0].mxu0
      %v1850 = vpop.f32.mrb[0].mxu0
      %v1851 = vadd.f32 %v1768, %v1850
      %v1852 = vpop.f32.mrb[0].mxu0
      %1853 = vdwg.mxu0
      %s1854 = scalar_lea.vmem %s2, 32
      %v1855 = vld [vmem:[%s1854] sm:$0xf]
      %v1856 = vld [vmem:[%s1854 + $0x4] sm:$0xf]
      %v1857 = vld [vmem:[%s1854 + $0x8] sm:$0xf]
      %v1858 = vld [vmem:[%s1854 + $0xc] sm:$0xf]
      %v1863 = vunpack.c.l.b16 %v1855
      %v1864 = vunpack.c.l.b16 %v1856
      %v1865 = vunpack.c.l.b16 %v1857
      %v1866 = vunpack.c.l.b16 %v1858
      %v1867 = vpack.c.b16 %v1864, %v1863
      %v1868 = vpack.c.b16 %v1866, %v1865
      %1871 = vmatprep.subr.bf16.mxu0 0
      %1872 = vmatpush1.bf16.msra.mxu0 %v1867
      %1873 = vmatprep.subr.bf16.mxu0 0
      %1874 = vmatpush1.bf16.msra.mxu0 %v1868
      %1875 = vmatprep.subr.bf16.mxu0 0
      %1876 = vmatpush1.bf16.msra.mxu0 0
      %1877 = vmatprep.subr.bf16.mxu0 0
      %1878 = vmatpush1.bf16.msra.mxu0 0
      %1879 = vmatprep.subr.bf16.mxu0 0
      %1880 = vmatpush1.bf16.msra.mxu0 0
      %1881 = vmatprep.subr.bf16.mxu0 0
      %1882 = vmatpush1.bf16.msra.mxu0 0
      %1883 = vmatprep.subr.bf16.mxu0 0
      %1884 = vmatpush1.bf16.msra.mxu0 0
      %1885 = vmatprep.subr.bf16.mxu0 0
      %1886 = vmatpush1.bf16.msra.mxu0 0
      %1887 = vmatprep.subr.bf16.mxu0 0
      %1888 = vmatpush1.bf16.msra.mxu0 0
      %1889 = vmatprep.subr.bf16.mxu0 0
      %1890 = vmatpush1.bf16.msra.mxu0 0
      %1891 = vmatprep.subr.bf16.mxu0 0
      %1892 = vmatpush1.bf16.msra.mxu0 0
      %1893 = vmatprep.subr.bf16.mxu0 0
      %1894 = vmatpush1.bf16.msra.mxu0 0
      %1895 = vmatprep.subr.bf16.mxu0 0
      %1896 = vmatpush1.bf16.msra.mxu0 0
      %1897 = vmatprep.subr.bf16.mxu0 0
      %1898 = vmatpush1.bf16.msra.mxu0 0
      %1899 = vmatprep.subr.bf16.mxu0 0
      %1900 = vmatpush1.bf16.msra.mxu0 0
      %1901 = vmatprep.subr.bf16.mxu0 0
      %1902 = vmatpush1.bf16.msra.mxu0 0
      %1903 = vmatprep.mubr.bf16.mxu0 0
      %1904 = vmatmul.mubr.bf16.gmra.mrb[0].mxu0 %v996
      %v1905 = vpop.f32.mrb[0].mxu0
      %v1906 = vadd.f32 0.0, %v1905
      %v1907 = vpop.f32.mrb[0].mxu0
      %v1908 = vpop.f32.mrb[0].mxu0
      %v1909 = vadd.f32 0.0, %v1908
      %v1910 = vpop.f32.mrb[0].mxu0
      %1911 = vmatprep.mubr.bf16.mxu0 0
      %1912 = vmatmul.mubr.bf16.gmra.mrb[0].mxu0 %v999
      %v1913 = vpop.f32.mrb[0].mxu0
      %v1914 = vadd.f32 0.0, %v1913
      %v1915 = vpop.f32.mrb[0].mxu0
      %v1916 = vpop.f32.mrb[0].mxu0
      %v1917 = vadd.f32 0.0, %v1916
      %v1918 = vpop.f32.mrb[0].mxu0
      %1919 = vmatprep.mubr.bf16.mxu0 0
      %1920 = vmatmul.mubr.bf16.gmra.mrb[0].mxu0 %v1002
      %v1921 = vpop.f32.mrb[0].mxu0
      %v1922 = vadd.f32 0.0, %v1921
      %v1923 = vpop.f32.mrb[0].mxu0
      %v1924 = vpop.f32.mrb[0].mxu0
      %v1925 = vadd.f32 0.0, %v1924
      %v1926 = vpop.f32.mrb[0].mxu0
      %1927 = vmatprep.mubr.bf16.mxu0 0
      %1928 = vmatmul.mubr.bf16.gmra.mrb[0].mxu0 %v1005
      %v1929 = vpop.f32.mrb[0].mxu0
      %v1930 = vadd.f32 0.0, %v1929
      %v1931 = vpop.f32.mrb[0].mxu0
      %v1932 = vpop.f32.mrb[0].mxu0
      %v1933 = vadd.f32 0.0, %v1932
      %v1934 = vpop.f32.mrb[0].mxu0
      %1935 = vdwg.mxu0
      %v1936 = vpack.c.bf16 %v1909, %v1906
      %v1937 = vpack.c.bf16 %v1917, %v1914
      %v1938 = vpack.c.bf16 %v1925, %v1922
      %v1939 = vpack.c.bf16 %v1933, %v1930
      %s1940 = scalar_lea.vmem [#allocation2], 8
      %v1941 = vld [vmem:[%s1940] sm:$0xf]
      %s1942 = scalar_lea.vmem [#allocation3], 8
      %v1943 = vld [vmem:[%s1942] sm:$0xf]
      %v1945 = vsel %vm1078, %v1936, 0
      %v1948 = vsel %vm1078, %v1937, 0
      %v1951 = vsel %vm1078, %v1938, 0
      %v1954 = vsel %vm1078, %v1939, 0
      %v1957 = vsel %vm1078, %v1941, 0
      %1959 = vmatprep.subr.bf16.mxu0 0
      %1960 = vmatpush1.bf16.xpose.msra.mxu0 %v1957
      %1961 = vmatprep.subr.bf16.mxu0 0
      %1962 = vmatpush1.bf16.xpose.msra.mxu0 0
      %1963 = vmatprep.subr.bf16.mxu0 0
      %1964 = vmatpush1.bf16.xpose.msra.mxu0 0
      %1965 = vmatprep.subr.bf16.mxu0 0
      %1966 = vmatpush1.bf16.xpose.msra.mxu0 0
      %1967 = vmatprep.subr.bf16.mxu0 0
      %1968 = vmatpush1.bf16.xpose.msra.mxu0 0
      %1969 = vmatprep.subr.bf16.mxu0 0
      %1970 = vmatpush1.bf16.xpose.msra.mxu0 0
      %1971 = vmatprep.subr.bf16.mxu0 0
      %1972 = vmatpush1.bf16.xpose.msra.mxu0 0
      %1973 = vmatprep.subr.bf16.mxu0 0
      %1974 = vmatpush1.bf16.xpose.msra.mxu0 0
      %1975 = vmatprep.subr.bf16.mxu0 0
      %1976 = vmatpush1.bf16.xpose.msra.mxu0 0
      %1977 = vmatprep.subr.bf16.mxu0 0
      %1978 = vmatpush1.bf16.xpose.msra.mxu0 0
      %1979 = vmatprep.subr.bf16.mxu0 0
      %1980 = vmatpush1.bf16.xpose.msra.mxu0 0
      %1981 = vmatprep.subr.bf16.mxu0 0
      %1982 = vmatpush1.bf16.xpose.msra.mxu0 0
      %1983 = vmatprep.subr.bf16.mxu0 0
      %1984 = vmatpush1.bf16.xpose.msra.mxu0 0
      %1985 = vmatprep.subr.bf16.mxu0 0
      %1986 = vmatpush1.bf16.xpose.msra.mxu0 0
      %1987 = vmatprep.subr.bf16.mxu0 0
      %1988 = vmatpush1.bf16.xpose.msra.mxu0 0
      %1989 = vmatprep.subr.bf16.mxu0 0
      %1990 = vmatpush1.bf16.xpose.msra.mxu0 0
      %1991 = vmatprep.mubr.bf16.mxu0 0
      %1992 = vmatmul.mubr.bf16.gmra.mrb[0].mxu0 %v1945
      %v1993 = vpop.f32.mrb[0].mxu0
      %v1994 = vadd.f32 0.0, %v1993
      %v1995 = vpop.f32.mrb[0].mxu0
      %v1996 = vpop.f32.mrb[0].mxu0
      %v1997 = vadd.f32 0.0, %v1996
      %v1998 = vpop.f32.mrb[0].mxu0
      %1999 = vmatprep.mubr.bf16.mxu0 0
      %2000 = vmatmul.mubr.bf16.gmra.mrb[0].mxu0 %v1948
      %v2001 = vpop.f32.mrb[0].mxu0
      %v2002 = vadd.f32 0.0, %v2001
      %v2003 = vpop.f32.mrb[0].mxu0
      %v2004 = vpop.f32.mrb[0].mxu0
      %v2005 = vadd.f32 0.0, %v2004
      %v2006 = vpop.f32.mrb[0].mxu0
      %2007 = vmatprep.mubr.bf16.mxu0 0
      %2008 = vmatmul.mubr.bf16.gmra.mrb[0].mxu0 %v1951
      %v2009 = vpop.f32.mrb[0].mxu0
      %v2010 = vadd.f32 0.0, %v2009
      %v2011 = vpop.f32.mrb[0].mxu0
      %v2012 = vpop.f32.mrb[0].mxu0
      %v2013 = vadd.f32 0.0, %v2012
      %v2014 = vpop.f32.mrb[0].mxu0
      %2015 = vmatprep.mubr.bf16.mxu0 0
      %2016 = vmatmul.mubr.bf16.gmra.mrb[0].mxu0 %v1954
      %v2017 = vpop.f32.mrb[0].mxu0
      %v2018 = vadd.f32 0.0, %v2017
      %v2019 = vpop.f32.mrb[0].mxu0
      %v2020 = vpop.f32.mrb[0].mxu0
      %v2021 = vadd.f32 0.0, %v2020
      %v2022 = vpop.f32.mrb[0].mxu0
      %2023 = vdwg.mxu0
      %v2024 = vsel %vm1159, %v1994, -inf
      %2025 = vmax.xlane.f32.xlu0 %v2024
      %v2026 = vpop.xlane.xlu0 %2025
      %v2027 = vsel %vm1159, %v1997, -inf
      %2028 = vmax.xlane.f32.xlu0 %v2027
      %v2029 = vpop.xlane.xlu0 %2028
      %v2030 = vsel %vm1159, %v2002, -inf
      %2031 = vmax.xlane.f32.xlu0 %v2030
      %v2032 = vpop.xlane.xlu0 %2031
      %v2033 = vsel %vm1159, %v2005, -inf
      %2034 = vmax.xlane.f32.xlu0 %v2033
      %v2035 = vpop.xlane.xlu0 %2034
      %v2036 = vsel %vm1159, %v2010, -inf
      %2037 = vmax.xlane.f32.xlu0 %v2036
      %v2038 = vpop.xlane.xlu0 %2037
      %v2039 = vsel %vm1159, %v2013, -inf
      %2040 = vmax.xlane.f32.xlu0 %v2039
      %v2041 = vpop.xlane.xlu0 %2040
      %v2042 = vsel %vm1159, %v2018, -inf
      %2043 = vmax.xlane.f32.xlu0 %v2042
      %v2044 = vpop.xlane.xlu0 %2043
      %v2045 = vsel %vm1159, %v2021, -inf
      %2046 = vmax.xlane.f32.xlu0 %v2045
      %v2047 = vpop.xlane.xlu0 %2046
      %v2048 = vsub.f32 %v1994, %v2026
      %v2049 = vsub.f32 %v1997, %v2029
      %v2050 = vsub.f32 %v2002, %v2032
      %v2051 = vsub.f32 %v2005, %v2035
      %v2052 = vsub.f32 %v2010, %v2038
      %v2053 = vsub.f32 %v2013, %v2041
      %v2054 = vsub.f32 %v2018, %v2044
      %v2055 = vsub.f32 %v2021, %v2047
      %v2056 = vmul.f32 %v2048, 1.442695
      %v2057 = vpow.pop %v2056
      %v2058 = vmul.f32 %v2049, 1.442695
      %v2059 = vpow.pop %v2058
      %v2060 = vmul.f32 %v2050, 1.442695
      %v2061 = vpow.pop %v2060
      %v2062 = vmul.f32 %v2051, 1.442695
      %v2063 = vpow.pop %v2062
      %v2064 = vmul.f32 %v2052, 1.442695
      %v2065 = vpow.pop %v2064
      %v2066 = vmul.f32 %v2053, 1.442695
      %v2067 = vpow.pop %v2066
      %v2068 = vmul.f32 %v2054, 1.442695
      %v2069 = vpow.pop %v2068
      %v2070 = vmul.f32 %v2055, 1.442695
      %v2071 = vpow.pop %v2070
      %v2072 = vsel %vm1159, %v2057, 0.0
      %2073 = vadd.xlane.f32.xlu0 %v2072
      %v2074 = vpop.xlane.xlu0 %2073
      %v2075 = vsel %vm1159, %v2059, 0.0
      %2076 = vadd.xlane.f32.xlu0 %v2075
      %v2077 = vpop.xlane.xlu0 %2076
      %v2078 = vsel %vm1159, %v2061, 0.0
      %2079 = vadd.xlane.f32.xlu0 %v2078
      %v2080 = vpop.xlane.xlu0 %2079
      %v2081 = vsel %vm1159, %v2063, 0.0
      %2082 = vadd.xlane.f32.xlu0 %v2081
      %v2083 = vpop.xlane.xlu0 %2082
      %v2084 = vsel %vm1159, %v2065, 0.0
      %2085 = vadd.xlane.f32.xlu0 %v2084
      %v2086 = vpop.xlane.xlu0 %2085
      %v2087 = vsel %vm1159, %v2067, 0.0
      %2088 = vadd.xlane.f32.xlu0 %v2087
      %v2089 = vpop.xlane.xlu0 %2088
      %v2090 = vsel %vm1159, %v2069, 0.0
      %2091 = vadd.xlane.f32.xlu0 %v2090
      %v2092 = vpop.xlane.xlu0 %2091
      %v2093 = vsel %vm1159, %v2071, 0.0
      %2094 = vadd.xlane.f32.xlu0 %v2093
      %v2095 = vpop.xlane.xlu0 %2094
      %v2096 = vrcp.pop %v2074
      %v2097 = vrcp.pop %v2077
      %v2098 = vrcp.pop %v2080
      %v2099 = vrcp.pop %v2083
      %v2100 = vrcp.pop %v2086
      %v2101 = vrcp.pop %v2089
      %v2102 = vrcp.pop %v2092
      %v2103 = vrcp.pop %v2095
      %v2104 = vpack.c.bf16 %v2059, %v2057
      %v2105 = vpack.c.bf16 %v2063, %v2061
      %v2106 = vpack.c.bf16 %v2067, %v2065
      %v2107 = vpack.c.bf16 %v2071, %v2069
      %v2109 = vsel %vm1159, %v2104, 0
      %v2112 = vsel %vm1159, %v2105, 0
      %v2115 = vsel %vm1159, %v2106, 0
      %v2118 = vsel %vm1159, %v2107, 0
      %v2121 = vsel %vm1256, %v1943, 0
      %2123 = vmatprep.subr.bf16.mxu0 0
      %2124 = vmatpush1.bf16.msra.mxu0 %v2121
      %2125 = vmatprep.subr.bf16.mxu0 0
      %2126 = vmatpush1.bf16.msra.mxu0 0
      %2127 = vmatprep.subr.bf16.mxu0 0
      %2128 = vmatpush1.bf16.msra.mxu0 0
      %2129 = vmatprep.subr.bf16.mxu0 0
      %2130 = vmatpush1.bf16.msra.mxu0 0
      %2131 = vmatprep.subr.bf16.mxu0 0
      %2132 = vmatpush1.bf16.msra.mxu0 0
      %2133 = vmatprep.subr.bf16.mxu0 0
      %2134 = vmatpush1.bf16.msra.mxu0 0
      %2135 = vmatprep.subr.bf16.mxu0 0
      %2136 = vmatpush1.bf16.msra.mxu0 0
      %2137 = vmatprep.subr.bf16.mxu0 0
      %2138 = vmatpush1.bf16.msra.mxu0 0
      %2139 = vmatprep.subr.bf16.mxu0 0
      %2140 = vmatpush1.bf16.msra.mxu0 0
      %2141 = vmatprep.subr.bf16.mxu0 0
      %2142 = vmatpush1.bf16.msra.mxu0 0
      %2143 = vmatprep.subr.bf16.mxu0 0
      %2144 = vmatpush1.bf16.msra.mxu0 0
      %2145 = vmatprep.subr.bf16.mxu0 0
      %2146 = vmatpush1.bf16.msra.mxu0 0
      %2147 = vmatprep.subr.bf16.mxu0 0
      %2148 = vmatpush1.bf16.msra.mxu0 0
      %2149 = vmatprep.subr.bf16.mxu0 0
      %2150 = vmatpush1.bf16.msra.mxu0 0
      %2151 = vmatprep.subr.bf16.mxu0 0
      %2152 = vmatpush1.bf16.msra.mxu0 0
      %2153 = vmatprep.subr.bf16.mxu0 0
      %2154 = vmatpush1.bf16.msra.mxu0 0
      %2155 = vmatprep.mubr.bf16.mxu0 0
      %2156 = vmatmul.mubr.bf16.gmra.mrb[0].mxu0 %v2109
      %v2157 = vpop.f32.mrb[0].mxu0
      %v2158 = vadd.f32 0.0, %v2157
      %v2159 = vpop.f32.mrb[0].mxu0
      %v2160 = vpop.f32.mrb[0].mxu0
      %v2161 = vadd.f32 0.0, %v2160
      %v2162 = vpop.f32.mrb[0].mxu0
      %2163 = vmatprep.mubr.bf16.mxu0 0
      %2164 = vmatmul.mubr.bf16.gmra.mrb[0].mxu0 %v2112
      %v2165 = vpop.f32.mrb[0].mxu0
      %v2166 = vadd.f32 0.0, %v2165
      %v2167 = vpop.f32.mrb[0].mxu0
      %v2168 = vpop.f32.mrb[0].mxu0
      %v2169 = vadd.f32 0.0, %v2168
      %v2170 = vpop.f32.mrb[0].mxu0
      %2171 = vmatprep.mubr.bf16.mxu0 0
      %2172 = vmatmul.mubr.bf16.gmra.mrb[0].mxu0 %v2115
      %v2173 = vpop.f32.mrb[0].mxu0
      %v2174 = vadd.f32 0.0, %v2173
      %v2175 = vpop.f32.mrb[0].mxu0
      %v2176 = vpop.f32.mrb[0].mxu0
      %v2177 = vadd.f32 0.0, %v2176
      %v2178 = vpop.f32.mrb[0].mxu0
      %2179 = vmatprep.mubr.bf16.mxu0 0
      %2180 = vmatmul.mubr.bf16.gmra.mrb[0].mxu0 %v2118
      %v2181 = vpop.f32.mrb[0].mxu0
      %v2182 = vadd.f32 0.0, %v2181
      %v2183 = vpop.f32.mrb[0].mxu0
      %v2184 = vpop.f32.mrb[0].mxu0
      %v2185 = vadd.f32 0.0, %v2184
      %v2186 = vpop.f32.mrb[0].mxu0
      %2187 = vdwg.mxu0
      %v2188 = vmul.f32 %v2158, %v2096
      %v2189 = vmul.f32 %v2161, %v2097
      %v2190 = vmul.f32 %v2166, %v2098
      %v2191 = vmul.f32 %v2169, %v2099
      %v2192 = vmul.f32 %v2174, %v2100
      %v2193 = vmul.f32 %v2177, %v2101
      %v2194 = vmul.f32 %v2182, %v2102
      %v2195 = vmul.f32 %v2185, %v2103
      %v2196 = vpack.c.bf16 %v2189, %v2188
      %v2197 = vpack.c.bf16 %v2191, %v2190
      %v2198 = vpack.c.bf16 %v2193, %v2192
      %v2199 = vpack.c.bf16 %v2195, %v2194
      %s2200 = scalar_lea.vmem %s5, 16
      %v2201 = vld [vmem:[%s2200] sm:$0xf]
      %v2202 = vld [vmem:[%s2200 + $0x4] sm:$0xf]
      %v2205 = vunpack.c.l.b16 %v2201
      %v2206 = vunpack.c.l.b16 %v2202
      %v2207 = vpack.c.b16 %v2206, %v2205
      %v2210 = vsel %vm1078, %v2196, 0
      %v2213 = vsel %vm1078, %v2197, 0
      %v2216 = vsel %vm1078, %v2198, 0
      %v2219 = vsel %vm1078, %v2199, 0
      %2221 = vmatprep.subr.bf16.mxu0 0
      %2222 = vmatpush1.bf16.msra.mxu0 %v2207
      %2223 = vmatprep.subr.bf16.mxu0 0
      %2224 = vmatpush1.bf16.msra.mxu0 0
      %2225 = vmatprep.subr.bf16.mxu0 0
      %2226 = vmatpush1.bf16.msra.mxu0 0
      %2227 = vmatprep.subr.bf16.mxu0 0
      %2228 = vmatpush1.bf16.msra.mxu0 0
      %2229 = vmatprep.subr.bf16.mxu0 0
      %2230 = vmatpush1.bf16.msra.mxu0 0
      %2231 = vmatprep.subr.bf16.mxu0 0
      %2232 = vmatpush1.bf16.msra.mxu0 0
      %2233 = vmatprep.subr.bf16.mxu0 0
      %2234 = vmatpush1.bf16.msra.mxu0 0
      %2235 = vmatprep.subr.bf16.mxu0 0
      %2236 = vmatpush1.bf16.msra.mxu0 0
      %2237 = vmatprep.subr.bf16.mxu0 0
      %2238 = vmatpush1.bf16.msra.mxu0 0
      %2239 = vmatprep.subr.bf16.mxu0 0
      %2240 = vmatpush1.bf16.msra.mxu0 0
      %2241 = vmatprep.subr.bf16.mxu0 0
      %2242 = vmatpush1.bf16.msra.mxu0 0
      %2243 = vmatprep.subr.bf16.mxu0 0
      %2244 = vmatpush1.bf16.msra.mxu0 0
      %2245 = vmatprep.subr.bf16.mxu0 0
      %2246 = vmatpush1.bf16.msra.mxu0 0
      %2247 = vmatprep.subr.bf16.mxu0 0
      %2248 = vmatpush1.bf16.msra.mxu0 0
      %2249 = vmatprep.subr.bf16.mxu0 0
      %2250 = vmatpush1.bf16.msra.mxu0 0
      %2251 = vmatprep.subr.bf16.mxu0 0
      %2252 = vmatpush1.bf16.msra.mxu0 0
      %2253 = vmatprep.mubr.bf16.mxu0 0
      %2254 = vmatmul.mubr.bf16.gmra.mrb[0].mxu0 %v2210
      %v2255 = vpop.f32.mrb[0].mxu0
      %v2256 = vadd.f32 0.0, %v2255
      %v2257 = vpop.f32.mrb[0].mxu0
      %v2258 = vpop.f32.mrb[0].mxu0
      %v2259 = vadd.f32 0.0, %v2258
      %v2260 = vpop.f32.mrb[0].mxu0
      %2261 = vmatprep.mubr.bf16.mxu0 0
      %2262 = vmatmul.mubr.bf16.gmra.mrb[0].mxu0 %v2213
      %v2263 = vpop.f32.mrb[0].mxu0
      %v2264 = vadd.f32 0.0, %v2263
      %v2265 = vpop.f32.mrb[0].mxu0
      %v2266 = vpop.f32.mrb[0].mxu0
      %v2267 = vadd.f32 0.0, %v2266
      %v2268 = vpop.f32.mrb[0].mxu0
      %2269 = vmatprep.mubr.bf16.mxu0 0
      %2270 = vmatmul.mubr.bf16.gmra.mrb[0].mxu0 %v2216
      %v2271 = vpop.f32.mrb[0].mxu0
      %v2272 = vadd.f32 0.0, %v2271
      %v2273 = vpop.f32.mrb[0].mxu0
      %v2274 = vpop.f32.mrb[0].mxu0
      %v2275 = vadd.f32 0.0, %v2274
      %v2276 = vpop.f32.mrb[0].mxu0
      %2277 = vmatprep.mubr.bf16.mxu0 0
      %2278 = vmatmul.mubr.bf16.gmra.mrb[0].mxu0 %v2219
      %v2279 = vpop.f32.mrb[0].mxu0
      %v2280 = vadd.f32 0.0, %v2279
      %v2281 = vpop.f32.mrb[0].mxu0
      %v2282 = vpop.f32.mrb[0].mxu0
      %v2283 = vadd.f32 0.0, %v2282
      %v2284 = vpop.f32.mrb[0].mxu0
      %2285 = vdwg.mxu0
      %v2286 = vadd.f32 %v1824, %v2256
      %v2287 = vadd.f32 %v1827, %v2259
      %v2288 = vadd.f32 %v1832, %v2264
      %v2289 = vadd.f32 %v1835, %v2267
      %v2290 = vadd.f32 %v1840, %v2272
      %v2291 = vadd.f32 %v1843, %v2275
      %v2292 = vadd.f32 %v1848, %v2280
      %v2293 = vadd.f32 %v1851, %v2283
      %s2294 = scalar_lea.vmem %s2, 48
      %v2295 = vld [vmem:[%s2294] sm:$0xf]
      %v2296 = vld [vmem:[%s2294 + $0x4] sm:$0xf]
      %v2297 = vld [vmem:[%s2294 + $0x8] sm:$0xf]
      %v2298 = vld [vmem:[%s2294 + $0xc] sm:$0xf]
      %v2303 = vunpack.c.l.b16 %v2295
      %v2304 = vunpack.c.l.b16 %v2296
      %v2305 = vunpack.c.l.b16 %v2297
      %v2306 = vunpack.c.l.b16 %v2298
      %v2307 = vpack.c.b16 %v2304, %v2303
      %v2308 = vpack.c.b16 %v2306, %v2305
      %2311 = vmatprep.subr.bf16.mxu0 0
      %2312 = vmatpush1.bf16.msra.mxu0 %v2307
      %2313 = vmatprep.subr.bf16.mxu0 0
      %2314 = vmatpush1.bf16.msra.mxu0 %v2308
      %2315 = vmatprep.subr.bf16.mxu0 0
      %2316 = vmatpush1.bf16.msra.mxu0 0
      %2317 = vmatprep.subr.bf16.mxu0 0
      %2318 = vmatpush1.bf16.msra.mxu0 0
      %2319 = vmatprep.subr.bf16.mxu0 0
      %2320 = vmatpush1.bf16.msra.mxu0 0
      %2321 = vmatprep.subr.bf16.mxu0 0
      %2322 = vmatpush1.bf16.msra.mxu0 0
      %2323 = vmatprep.subr.bf16.mxu0 0
      %2324 = vmatpush1.bf16.msra.mxu0 0
      %2325 = vmatprep.subr.bf16.mxu0 0
      %2326 = vmatpush1.bf16.msra.mxu0 0
      %2327 = vmatprep.subr.bf16.mxu0 0
      %2328 = vmatpush1.bf16.msra.mxu0 0
      %2329 = vmatprep.subr.bf16.mxu0 0
      %2330 = vmatpush1.bf16.msra.mxu0 0
      %2331 = vmatprep.subr.bf16.mxu0 0
      %2332 = vmatpush1.bf16.msra.mxu0 0
      %2333 = vmatprep.subr.bf16.mxu0 0
      %2334 = vmatpush1.bf16.msra.mxu0 0
      %2335 = vmatprep.subr.bf16.mxu0 0
      %2336 = vmatpush1.bf16.msra.mxu0 0
      %2337 = vmatprep.subr.bf16.mxu0 0
      %2338 = vmatpush1.bf16.msra.mxu0 0
      %2339 = vmatprep.subr.bf16.mxu0 0
      %2340 = vmatpush1.bf16.msra.mxu0 0
      %2341 = vmatprep.subr.bf16.mxu0 0
      %2342 = vmatpush1.bf16.msra.mxu0 0
      %2343 = vmatprep.mubr.bf16.mxu0 0
      %2344 = vmatmul.mubr.bf16.gmra.mrb[0].mxu0 %v996
      %v2345 = vpop.f32.mrb[0].mxu0
      %v2346 = vadd.f32 0.0, %v2345
      %v2347 = vpop.f32.mrb[0].mxu0
      %v2348 = vpop.f32.mrb[0].mxu0
      %v2349 = vadd.f32 0.0, %v2348
      %v2350 = vpop.f32.mrb[0].mxu0
      %2351 = vmatprep.mubr.bf16.mxu0 0
      %2352 = vmatmul.mubr.bf16.gmra.mrb[0].mxu0 %v999
      %v2353 = vpop.f32.mrb[0].mxu0
      %v2354 = vadd.f32 0.0, %v2353
      %v2355 = vpop.f32.mrb[0].mxu0
      %v2356 = vpop.f32.mrb[0].mxu0
      %v2357 = vadd.f32 0.0, %v2356
      %v2358 = vpop.f32.mrb[0].mxu0
      %2359 = vmatprep.mubr.bf16.mxu0 0
      %2360 = vmatmul.mubr.bf16.gmra.mrb[0].mxu0 %v1002
      %v2361 = vpop.f32.mrb[0].mxu0
      %v2362 = vadd.f32 0.0, %v2361
      %v2363 = vpop.f32.mrb[0].mxu0
      %v2364 = vpop.f32.mrb[0].mxu0
      %v2365 = vadd.f32 0.0, %v2364
      %v2366 = vpop.f32.mrb[0].mxu0
      %2367 = vmatprep.mubr.bf16.mxu0 0
      %2368 = vmatmul.mubr.bf16.gmra.mrb[0].mxu0 %v1005
      %v2369 = vpop.f32.mrb[0].mxu0
      %v2370 = vadd.f32 0.0, %v2369
      %v2371 = vpop.f32.mrb[0].mxu0
      %v2372 = vpop.f32.mrb[0].mxu0
      %v2373 = vadd.f32 0.0, %v2372
      %v2374 = vpop.f32.mrb[0].mxu0
      %2375 = vdwg.mxu0
      %v2376 = vpack.c.bf16 %v2349, %v2346
      %v2377 = vpack.c.bf16 %v2357, %v2354
      %v2378 = vpack.c.bf16 %v2365, %v2362
      %v2379 = vpack.c.bf16 %v2373, %v2370
      %s2380 = scalar_lea.vmem [#allocation2], 12
      %v2381 = vld [vmem:[%s2380] sm:$0xf]
      %s2382 = scalar_lea.vmem [#allocation3], 12
      %v2383 = vld [vmem:[%s2382] sm:$0xf]
      %v2385 = vsel %vm1078, %v2376, 0
      %v2388 = vsel %vm1078, %v2377, 0
      %v2391 = vsel %vm1078, %v2378, 0
      %v2394 = vsel %vm1078, %v2379, 0
      %v2397 = vsel %vm1078, %v2381, 0
      %2399 = vmatprep.subr.bf16.mxu0 0
      %2400 = vmatpush1.bf16.xpose.msra.mxu0 %v2397
      %2401 = vmatprep.subr.bf16.mxu0 0
      %2402 = vmatpush1.bf16.xpose.msra.mxu0 0
      %2403 = vmatprep.subr.bf16.mxu0 0
      %2404 = vmatpush1.bf16.xpose.msra.mxu0 0
      %2405 = vmatprep.subr.bf16.mxu0 0
      %2406 = vmatpush1.bf16.xpose.msra.mxu0 0
      %2407 = vmatprep.subr.bf16.mxu0 0
      %2408 = vmatpush1.bf16.xpose.msra.mxu0 0
      %2409 = vmatprep.subr.bf16.mxu0 0
      %2410 = vmatpush1.bf16.xpose.msra.mxu0 0
      %2411 = vmatprep.subr.bf16.mxu0 0
      %2412 = vmatpush1.bf16.xpose.msra.mxu0 0
      %2413 = vmatprep.subr.bf16.mxu0 0
      %2414 = vmatpush1.bf16.xpose.msra.mxu0 0
      %2415 = vmatprep.subr.bf16.mxu0 0
      %2416 = vmatpush1.bf16.xpose.msra.mxu0 0
      %2417 = vmatprep.subr.bf16.mxu0 0
      %2418 = vmatpush1.bf16.xpose.msra.mxu0 0
      %2419 = vmatprep.subr.bf16.mxu0 0
      %2420 = vmatpush1.bf16.xpose.msra.mxu0 0
      %2421 = vmatprep.subr.bf16.mxu0 0
      %2422 = vmatpush1.bf16.xpose.msra.mxu0 0
      %2423 = vmatprep.subr.bf16.mxu0 0
      %2424 = vmatpush1.bf16.xpose.msra.mxu0 0
      %2425 = vmatprep.subr.bf16.mxu0 0
      %2426 = vmatpush1.bf16.xpose.msra.mxu0 0
      %2427 = vmatprep.subr.bf16.mxu0 0
      %2428 = vmatpush1.bf16.xpose.msra.mxu0 0
      %2429 = vmatprep.subr.bf16.mxu0 0
      %2430 = vmatpush1.bf16.xpose.msra.mxu0 0
      %2431 = vmatprep.mubr.bf16.mxu0 0
      %2432 = vmatmul.mubr.bf16.gmra.mrb[0].mxu0 %v2385
      %v2433 = vpop.f32.mrb[0].mxu0
      %v2434 = vadd.f32 0.0, %v2433
      %v2435 = vpop.f32.mrb[0].mxu0
      %v2436 = vpop.f32.mrb[0].mxu0
      %v2437 = vadd.f32 0.0, %v2436
      %v2438 = vpop.f32.mrb[0].mxu0
      %2439 = vmatprep.mubr.bf16.mxu0 0
      %2440 = vmatmul.mubr.bf16.gmra.mrb[0].mxu0 %v2388
      %v2441 = vpop.f32.mrb[0].mxu0
      %v2442 = vadd.f32 0.0, %v2441
      %v2443 = vpop.f32.mrb[0].mxu0
      %v2444 = vpop.f32.mrb[0].mxu0
      %v2445 = vadd.f32 0.0, %v2444
      %v2446 = vpop.f32.mrb[0].mxu0
      %2447 = vmatprep.mubr.bf16.mxu0 0
      %2448 = vmatmul.mubr.bf16.gmra.mrb[0].mxu0 %v2391
      %v2449 = vpop.f32.mrb[0].mxu0
      %v2450 = vadd.f32 0.0, %v2449
      %v2451 = vpop.f32.mrb[0].mxu0
      %v2452 = vpop.f32.mrb[0].mxu0
      %v2453 = vadd.f32 0.0, %v2452
      %v2454 = vpop.f32.mrb[0].mxu0
      %2455 = vmatprep.mubr.bf16.mxu0 0
      %2456 = vmatmul.mubr.bf16.gmra.mrb[0].mxu0 %v2394
      %v2457 = vpop.f32.mrb[0].mxu0
      %v2458 = vadd.f32 0.0, %v2457
      %v2459 = vpop.f32.mrb[0].mxu0
      %v2460 = vpop.f32.mrb[0].mxu0
      %v2461 = vadd.f32 0.0, %v2460
      %v2462 = vpop.f32.mrb[0].mxu0
      %2463 = vdwg.mxu0
      %v2464 = vsel %vm1159, %v2434, -inf
      %2465 = vmax.xlane.f32.xlu0 %v2464
      %v2466 = vpop.xlane.xlu0 %2465
      %v2467 = vsel %vm1159, %v2437, -inf
      %2468 = vmax.xlane.f32.xlu0 %v2467
      %v2469 = vpop.xlane.xlu0 %2468
      %v2470 = vsel %vm1159, %v2442, -inf
      %2471 = vmax.xlane.f32.xlu0 %v2470
      %v2472 = vpop.xlane.xlu0 %2471
      %v2473 = vsel %vm1159, %v2445, -inf
      %2474 = vmax.xlane.f32.xlu0 %v2473
      %v2475 = vpop.xlane.xlu0 %2474
      %v2476 = vsel %vm1159, %v2450, -inf
      %2477 = vmax.xlane.f32.xlu0 %v2476
      %v2478 = vpop.xlane.xlu0 %2477
      %v2479 = vsel %vm1159, %v2453, -inf
      %2480 = vmax.xlane.f32.xlu0 %v2479
      %v2481 = vpop.xlane.xlu0 %2480
      %v2482 = vsel %vm1159, %v2458, -inf
      %2483 = vmax.xlane.f32.xlu0 %v2482
      %v2484 = vpop.xlane.xlu0 %2483
      %v2485 = vsel %vm1159, %v2461, -inf
      %2486 = vmax.xlane.f32.xlu0 %v2485
      %v2487 = vpop.xlane.xlu0 %2486
      %v2488 = vsub.f32 %v2434, %v2466
      %v2489 = vsub.f32 %v2437, %v2469
      %v2490 = vsub.f32 %v2442, %v2472
      %v2491 = vsub.f32 %v2445, %v2475
      %v2492 = vsub.f32 %v2450, %v2478
      %v2493 = vsub.f32 %v2453, %v2481
      %v2494 = vsub.f32 %v2458, %v2484
      %v2495 = vsub.f32 %v2461, %v2487
      %v2496 = vmul.f32 %v2488, 1.442695
      %v2497 = vpow.pop %v2496
      %v2498 = vmul.f32 %v2489, 1.442695
      %v2499 = vpow.pop %v2498
      %v2500 = vmul.f32 %v2490, 1.442695
      %v2501 = vpow.pop %v2500
      %v2502 = vmul.f32 %v2491, 1.442695
      %v2503 = vpow.pop %v2502
      %v2504 = vmul.f32 %v2492, 1.442695
      %v2505 = vpow.pop %v2504
      %v2506 = vmul.f32 %v2493, 1.442695
      %v2507 = vpow.pop %v2506
      %v2508 = vmul.f32 %v2494, 1.442695
      %v2509 = vpow.pop %v2508
      %v2510 = vmul.f32 %v2495, 1.442695
      %v2511 = vpow.pop %v2510
      %v2512 = vsel %vm1159, %v2497, 0.0
      %2513 = vadd.xlane.f32.xlu0 %v2512
      %v2514 = vpop.xlane.xlu0 %2513
      %v2515 = vsel %vm1159, %v2499, 0.0
      %2516 = vadd.xlane.f32.xlu0 %v2515
      %v2517 = vpop.xlane.xlu0 %2516
      %v2518 = vsel %vm1159, %v2501, 0.0
      %2519 = vadd.xlane.f32.xlu0 %v2518
      %v2520 = vpop.xlane.xlu0 %2519
      %v2521 = vsel %vm1159, %v2503, 0.0
      %2522 = vadd.xlane.f32.xlu0 %v2521
      %v2523 = vpop.xlane.xlu0 %2522
      %v2524 = vsel %vm1159, %v2505, 0.0
      %2525 = vadd.xlane.f32.xlu0 %v2524
      %v2526 = vpop.xlane.xlu0 %2525
      %v2527 = vsel %vm1159, %v2507, 0.0
      %2528 = vadd.xlane.f32.xlu0 %v2527
      %v2529 = vpop.xlane.xlu0 %2528
      %v2530 = vsel %vm1159, %v2509, 0.0
      %2531 = vadd.xlane.f32.xlu0 %v2530
      %v2532 = vpop.xlane.xlu0 %2531
      %v2533 = vsel %vm1159, %v2511, 0.0
      %2534 = vadd.xlane.f32.xlu0 %v2533
      %v2535 = vpop.xlane.xlu0 %2534
      %v2536 = vrcp.pop %v2514
      %v2537 = vrcp.pop %v2517
      %v2538 = vrcp.pop %v2520
      %v2539 = vrcp.pop %v2523
      %v2540 = vrcp.pop %v2526
      %v2541 = vrcp.pop %v2529
      %v2542 = vrcp.pop %v2532
      %v2543 = vrcp.pop %v2535
      %v2544 = vpack.c.bf16 %v2499, %v2497
      %v2545 = vpack.c.bf16 %v2503, %v2501
      %v2546 = vpack.c.bf16 %v2507, %v2505
      %v2547 = vpack.c.bf16 %v2511, %v2509
      %v2549 = vsel %vm1159, %v2544, 0
      %v2552 = vsel %vm1159, %v2545, 0
      %v2555 = vsel %vm1159, %v2546, 0
      %v2558 = vsel %vm1159, %v2547, 0
      %v2561 = vsel %vm1256, %v2383, 0
      %2563 = vmatprep.subr.bf16.mxu0 0
      %2564 = vmatpush1.bf16.msra.mxu0 %v2561
      %2565 = vmatprep.subr.bf16.mxu0 0
      %2566 = vmatpush1.bf16.msra.mxu0 0
      %2567 = vmatprep.subr.bf16.mxu0 0
      %2568 = vmatpush1.bf16.msra.mxu0 0
      %2569 = vmatprep.subr.bf16.mxu0 0
      %2570 = vmatpush1.bf16.msra.mxu0 0
      %2571 = vmatprep.subr.bf16.mxu0 0
      %2572 = vmatpush1.bf16.msra.mxu0 0
      %2573 = vmatprep.subr.bf16.mxu0 0
      %2574 = vmatpush1.bf16.msra.mxu0 0
      %2575 = vmatprep.subr.bf16.mxu0 0
      %2576 = vmatpush1.bf16.msra.mxu0 0
      %2577 = vmatprep.subr.bf16.mxu0 0
      %2578 = vmatpush1.bf16.msra.mxu0 0
      %2579 = vmatprep.subr.bf16.mxu0 0
      %2580 = vmatpush1.bf16.msra.mxu0 0
      %2581 = vmatprep.subr.bf16.mxu0 0
      %2582 = vmatpush1.bf16.msra.mxu0 0
      %2583 = vmatprep.subr.bf16.mxu0 0
      %2584 = vmatpush1.bf16.msra.mxu0 0
      %2585 = vmatprep.subr.bf16.mxu0 0
      %2586 = vmatpush1.bf16.msra.mxu0 0
      %2587 = vmatprep.subr.bf16.mxu0 0
      %2588 = vmatpush1.bf16.msra.mxu0 0
      %2589 = vmatprep.subr.bf16.mxu0 0
      %2590 = vmatpush1.bf16.msra.mxu0 0
      %2591 = vmatprep.subr.bf16.mxu0 0
      %2592 = vmatpush1.bf16.msra.mxu0 0
      %2593 = vmatprep.subr.bf16.mxu0 0
      %2594 = vmatpush1.bf16.msra.mxu0 0
      %2595 = vmatprep.mubr.bf16.mxu0 0
      %2596 = vmatmul.mubr.bf16.gmra.mrb[0].mxu0 %v2549
      %v2597 = vpop.f32.mrb[0].mxu0
      %v2598 = vadd.f32 0.0, %v2597
      %v2599 = vpop.f32.mrb[0].mxu0
      %v2600 = vpop.f32.mrb[0].mxu0
      %v2601 = vadd.f32 0.0, %v2600
      %v2602 = vpop.f32.mrb[0].mxu0
      %2603 = vmatprep.mubr.bf16.mxu0 0
      %2604 = vmatmul.mubr.bf16.gmra.mrb[0].mxu0 %v2552
      %v2605 = vpop.f32.mrb[0].mxu0
      %v2606 = vadd.f32 0.0, %v2605
      %v2607 = vpop.f32.mrb[0].mxu0
      %v2608 = vpop.f32.mrb[0].mxu0
      %v2609 = vadd.f32 0.0, %v2608
      %v2610 = vpop.f32.mrb[0].mxu0
      %2611 = vmatprep.mubr.bf16.mxu0 0
      %2612 = vmatmul.mubr.bf16.gmra.mrb[0].mxu0 %v2555
      %v2613 = vpop.f32.mrb[0].mxu0
      %v2614 = vadd.f32 0.0, %v2613
      %v2615 = vpop.f32.mrb[0].mxu0
      %v2616 = vpop.f32.mrb[0].mxu0
      %v2617 = vadd.f32 0.0, %v2616
      %v2618 = vpop.f32.mrb[0].mxu0
      %2619 = vmatprep.mubr.bf16.mxu0 0
      %2620 = vmatmul.mubr.bf16.gmra.mrb[0].mxu0 %v2558
      %v2621 = vpop.f32.mrb[0].mxu0
      %v2622 = vadd.f32 0.0, %v2621
      %v2623 = vpop.f32.mrb[0].mxu0
      %v2624 = vpop.f32.mrb[0].mxu0
      %v2625 = vadd.f32 0.0, %v2624
      %v2626 = vpop.f32.mrb[0].mxu0
      %2627 = vdwg.mxu0
      %v2628 = vmul.f32 %v2598, %v2536
      %v2629 = vmul.f32 %v2601, %v2537
      %v2630 = vmul.f32 %v2606, %v2538
      %v2631 = vmul.f32 %v2609, %v2539
      %v2632 = vmul.f32 %v2614, %v2540
      %v2633 = vmul.f32 %v2617, %v2541
      %v2634 = vmul.f32 %v2622, %v2542
      %v2635 = vmul.f32 %v2625, %v2543
      %v2636 = vpack.c.bf16 %v2629, %v2628
      %v2637 = vpack.c.bf16 %v2631, %v2630
      %v2638 = vpack.c.bf16 %v2633, %v2632
      %v2639 = vpack.c.bf16 %v2635, %v2634
      %s2640 = scalar_lea.vmem %s5, 24
      %v2641 = vld [vmem:[%s2640] sm:$0xf]
      %v2642 = vld [vmem:[%s2640 + $0x4] sm:$0xf]
      %v2645 = vunpack.c.l.b16 %v2641
      %v2646 = vunpack.c.l.b16 %v2642
      %v2647 = vpack.c.b16 %v2646, %v2645
      %v2650 = vsel %vm1078, %v2636, 0
      %v2653 = vsel %vm1078, %v2637, 0
      %v2656 = vsel %vm1078, %v2638, 0
      %v2659 = vsel %vm1078, %v2639, 0
      %2661 = vmatprep.subr.bf16.mxu0 0
      %2662 = vmatpush1.bf16.msra.mxu0 %v2647
      %2663 = vmatprep.subr.bf16.mxu0 0
      %2664 = vmatpush1.bf16.msra.mxu0 0
      %2665 = vmatprep.subr.bf16.mxu0 0
      %2666 = vmatpush1.bf16.msra.mxu0 0
      %2667 = vmatprep.subr.bf16.mxu0 0
      %2668 = vmatpush1.bf16.msra.mxu0 0
      %2669 = vmatprep.subr.bf16.mxu0 0
      %2670 = vmatpush1.bf16.msra.mxu0 0
      %2671 = vmatprep.subr.bf16.mxu0 0
      %2672 = vmatpush1.bf16.msra.mxu0 0
      %2673 = vmatprep.subr.bf16.mxu0 0
      %2674 = vmatpush1.bf16.msra.mxu0 0
      %2675 = vmatprep.subr.bf16.mxu0 0
      %2676 = vmatpush1.bf16.msra.mxu0 0
      %2677 = vmatprep.subr.bf16.mxu0 0
      %2678 = vmatpush1.bf16.msra.mxu0 0
      %2679 = vmatprep.subr.bf16.mxu0 0
      %2680 = vmatpush1.bf16.msra.mxu0 0
      %2681 = vmatprep.subr.bf16.mxu0 0
      %2682 = vmatpush1.bf16.msra.mxu0 0
      %2683 = vmatprep.subr.bf16.mxu0 0
      %2684 = vmatpush1.bf16.msra.mxu0 0
      %2685 = vmatprep.subr.bf16.mxu0 0
      %2686 = vmatpush1.bf16.msra.mxu0 0
      %2687 = vmatprep.subr.bf16.mxu0 0
      %2688 = vmatpush1.bf16.msra.mxu0 0
      %2689 = vmatprep.subr.bf16.mxu0 0
      %2690 = vmatpush1.bf16.msra.mxu0 0
      %2691 = vmatprep.subr.bf16.mxu0 0
      %2692 = vmatpush1.bf16.msra.mxu0 0
      %2693 = vmatprep.mubr.bf16.mxu0 0
      %2694 = vmatmul.mubr.bf16.gmra.mrb[0].mxu0 %v2650
      %v2695 = vpop.f32.mrb[0].mxu0
      %v2696 = vadd.f32 0.0, %v2695
      %v2697 = vpop.f32.mrb[0].mxu0
      %v2698 = vpop.f32.mrb[0].mxu0
      %v2699 = vadd.f32 0.0, %v2698
      %v2700 = vpop.f32.mrb[0].mxu0
      %2701 = vmatprep.mubr.bf16.mxu0 0
      %2702 = vmatmul.mubr.bf16.gmra.mrb[0].mxu0 %v2653
      %v2703 = vpop.f32.mrb[0].mxu0
      %v2704 = vadd.f32 0.0, %v2703
      %v2705 = vpop.f32.mrb[0].mxu0
      %v2706 = vpop.f32.mrb[0].mxu0
      %v2707 = vadd.f32 0.0, %v2706
      %v2708 = vpop.f32.mrb[0].mxu0
      %2709 = vmatprep.mubr.bf16.mxu0 0
      %2710 = vmatmul.mubr.bf16.gmra.mrb[0].mxu0 %v2656
      %v2711 = vpop.f32.mrb[0].mxu0
      %v2712 = vadd.f32 0.0, %v2711
      %v2713 = vpop.f32.mrb[0].mxu0
      %v2714 = vpop.f32.mrb[0].mxu0
      %v2715 = vadd.f32 0.0, %v2714
      %v2716 = vpop.f32.mrb[0].mxu0
      %2717 = vmatprep.mubr.bf16.mxu0 0
      %2718 = vmatmul.mubr.bf16.gmra.mrb[0].mxu0 %v2659
      %v2719 = vpop.f32.mrb[0].mxu0
      %v2720 = vadd.f32 0.0, %v2719
      %v2721 = vpop.f32.mrb[0].mxu0
      %v2722 = vpop.f32.mrb[0].mxu0
      %v2723 = vadd.f32 0.0, %v2722
      %v2724 = vpop.f32.mrb[0].mxu0
      %2725 = vdwg.mxu0
      %v2726 = vadd.f32 %v2286, %v2696
      %v2727 = vadd.f32 %v2287, %v2699
      %v2728 = vadd.f32 %v2288, %v2704
      %v2729 = vadd.f32 %v2289, %v2707
      %v2730 = vadd.f32 %v2290, %v2712
      %v2731 = vadd.f32 %v2291, %v2715
      %v2732 = vadd.f32 %v2292, %v2720
      %v2733 = vadd.f32 %v2293, %v2723
      %v2734 = vld [vmem:[%s6] sm:$0x1]
      %v2736 = vlaneseq
      %v2737 = vshrl.u32 %v2736, 7
      %v2738 = vsub.s32 0, %v2737
      %v2739 = vrot.slane %v2734, %v2738
      %v2741 = vadd.f32 %v2726, %v2739
      %v2742 = vadd.f32 %v2727, %v2739
      %v2743 = vadd.f32 %v2728, %v2739
      %v2744 = vadd.f32 %v2729, %v2739
      %v2745 = vadd.f32 %v2730, %v2739
      %v2746 = vadd.f32 %v2731, %v2739
      %v2747 = vadd.f32 %v2732, %v2739
      %v2748 = vadd.f32 %v2733, %v2739
      %2749 = vst.msk [vmem:[%s333] sm:$0xff] %vm994, %v2741
      %2750 = vst.msk [vmem:[%s333 + $0x8] sm:$0xff] %vm994, %v2742
      %2751 = vst.msk [vmem:[%s333 + $0x10] sm:$0xff] %vm994, %v2743
      %2752 = vst.msk [vmem:[%s333 + $0x18] sm:$0xff] %vm994, %v2744
      %2753 = vst.msk [vmem:[%s333 + $0x20] sm:$0xff] %vm994, %v2745
      %2754 = vst.msk [vmem:[%s333 + $0x28] sm:$0xff] %vm994, %v2746
      %2755 = vst.msk [vmem:[%s333 + $0x30] sm:$0xff] %vm994, %v2747
      %2756 = vst.msk [vmem:[%s333 + $0x38] sm:$0xff] %vm994, %v2748
      %s2757 = smul.u32 8, %s23
      %p2758 = scmp.lt.s32.totalorder %s22, 1
      %s2759 = scalar_select %p2758, %s22, 1
      %p2760 = scmp.lt.s32.totalorder %s2757, 7
      %s2761 = scalar_select %p2760, %s2757, 7
      %s2762 = smul.addr %s2759, 8
      %s2763 = sadd.s32 %s2761, %s2762
      %s2764 = smul.addr %s2763, 8
      %s2765 = scalar_lea.vmem %s7, %s2764
      // Predicated region
      $region53: #{tpu_custom_call.1} parent=47 // pred_check
        %p2766 = pneg %p209
      $region54: #{tpu_custom_call.1} parent=47 // pred_check_branch
        %2768 = sbr.rel (%p2766) target = $region56
      $region55: #{tpu_custom_call.1} parent=47 // pred_region
        %s2769 = smul.u32 8, %s23
      $region56: #{tpu_custom_call.1} parent=47 // pred_fallthru
        _
    $region48: #{tpu_custom_call.1} parent=5 // pred_fallthru
      _
    %p2770 = scmp.le.s32.totalorder 2, %s13
    // Predicated region
    $region57: #{tpu_custom_call.1} parent=5 // pred_check
      %p2771 = pneg %p2770
    $region58: #{tpu_custom_call.1} parent=5 // pred_check_branch
      %2773 = sbr.rel (%p2771) target = $region60
    $region59: #{tpu_custom_call.1} parent=5 // pred_region
      %s2774 = ssub.s32 %s13, 2
      // Predicated region
      $region61: #{tpu_custom_call.1} parent=59 // pred_check
        %p2775 = pneg %p215
      $region62: #{tpu_custom_call.1} parent=59 // pred_check_branch
        %2777 = sbr.rel (%p2775) target = $region64
      $region63: #{tpu_custom_call.1} parent=59 // pred_region
        %s2778 = smul.u32 8, %s25
        %p2779 = scmp.lt.s32.totalorder %s24, 1
        %s2780 = scalar_select %p2779, %s24, 1
        %p2781 = scmp.lt.s32.totalorder %s2778, 7
        %s2782 = scalar_select %p2781, %s2778, 7
        %s2783 = smul.addr %s2780, 8
        %s2784 = sadd.s32 %s2782, %s2783
        %s2785 = smul.addr %s2784, 8
        %s2786 = scalar_lea.vmem %s7, %s2785
      $region64: #{tpu_custom_call.1} parent=59 // pred_fallthru
        _
    $region60: #{tpu_custom_call.1} parent=5 // pred_fallthru
      _
  $region6: #{tpu_custom_call.1} parent=0 // loop_footer
    %s17 = sadd.s32 1, %s13
  $region7: #{tpu_custom_call.1} parent=0 // loop_footer_branch
    %12 = sbr.rel target = $region3
  $region8: #{tpu_custom_call.1} parent=0 // loop_exit
    _

</llo_original>
